<compile_context>
chip_gen: v7x
topology: tpu7x:2x2x1
jax: 0.10.0
libtpu: 0.0.40
codegen_flags: <defaults>
</compile_context>

<pallas_src>
import functools

import jax
import jax.numpy as jnp
from jax.experimental import pallas as pl
from jax.experimental.pallas import tpu as pltpu

_LANE = 128
_SUBLANE = 8
# Above the 16/32 MiB scoped defaults (v5e/v6e/v7x), below physical VMEM on
# every generation.
_VMEM_LIMIT = 48 * 1024 * 1024


def _round_up(x, m):
    return ((x + m - 1) // m) * m


def _largest_aligned_divisor(dim, align, pref):
    """Largest multiple of `align` dividing `dim` that is <= `pref`."""
    if dim <= pref:
        return dim
    best = None
    cand = align
    while cand <= pref:
        if dim % cand == 0:
            best = cand
        cand += align
    return best if best is not None else dim


# ----------------------------------------------------------------------------
# Batched matmul + bias kernel (input projection and dense head).
# bf16 MXU operands, f32 accumulate, bias add in f32, cast to out dtype.
# ----------------------------------------------------------------------------
def _matmul_bias_kernel(x_ref, w_ref, b_ref, o_ref):
    acc = jnp.dot(x_ref[...].astype(jnp.bfloat16),
                  w_ref[...].astype(jnp.bfloat16),
                  preferred_element_type=jnp.float32)
    o_ref[...] = (acc + b_ref[...].astype(jnp.float32)).astype(o_ref.dtype)


def matmul_bias(x, w_t, b, out_dtype=jnp.float32):
    """(M, K) @ (K, N) + (1, N) -> (M, N), tiled over M and N (K kept whole)."""
    M, K = x.shape
    N = w_t.shape[1]
    tm = _largest_aligned_divisor(M, _SUBLANE, 512)   # sublane-aligned row tile
    tn = _largest_aligned_divisor(N, _LANE, 1024)     # lane-dense output tile
    return pl.pallas_call(
        _matmul_bias_kernel,
        out_shape=jax.ShapeDtypeStruct((M, N), out_dtype),
        grid_spec=pltpu.PrefetchScalarGridSpec(
            num_scalar_prefetch=0,
            grid=(M // tm, N // tn),
            in_specs=[
                pl.BlockSpec((tm, K), lambda i, j: (i, 0)),
                pl.BlockSpec((K, tn), lambda i, j: (0, j)),
                pl.BlockSpec((1, tn), lambda i, j: (0, j)),
            ],
            out_specs=pl.BlockSpec((tm, tn), lambda i, j: (i, j)),
        ),
        compiler_params=pltpu.CompilerParams(
            dimension_semantics=("parallel", "parallel"),
            vmem_limit_bytes=_VMEM_LIMIT),
    )(x, w_t, b)


# ----------------------------------------------------------------------------
# Recurrent LSTM kernel: only (h @ W_hh^T) + gate nonlinearities per step.
# ----------------------------------------------------------------------------
def _lstm_recurrent_kernel(gx_ref, whh_ref, h_all_ref, h_out_ref, c_out_ref,
                           *, hidden_pad, t_block):
    Hp = hidden_pad

    # First time-block of this batch-block: zero-init the resident state.
    @pl.when(pl.program_id(1) == 0)
    def _():
        h_out_ref[...] = jnp.zeros_like(h_out_ref)
        c_out_ref[...] = jnp.zeros_like(c_out_ref)

    h = h_out_ref[...]                 # (Bb, Hp) f32 resident state
    c = c_out_ref[...]                 # (Bb, Hp) f32
    whh = whh_ref[...]                 # (Hp, 4Hp) bf16 -- hoisted, loaded once

    # Process 8-step chunks: bounded live set, sublane-aligned slab stores.
    start = 0
    while start < t_block:             # static (trace-time) loop
        size = min(8, t_block - start)
        gx = gx_ref[:, start:start + size, :].astype(jnp.float32)  # (Bb,size,4Hp)
        slab = []
        for tau in range(size):        # short static unroll (<= 8)
            gates = gx[:, tau, :] + jnp.dot(
                h.astype(jnp.bfloat16), whh, preferred_element_type=jnp.float32)
            i_g = jax.nn.sigmoid(gates[:, 0 * Hp:1 * Hp])
            f_g = jax.nn.sigmoid(gates[:, 1 * Hp:2 * Hp])
            g_g = jnp.tanh(gates[:, 2 * Hp:3 * Hp])
            o_g = jax.nn.sigmoid(gates[:, 3 * Hp:4 * Hp])
            c = f_g * c + i_g * g_g
            h = o_g * jnp.tanh(c)
            slab.append(h.astype(h_all_ref.dtype))
        # Lane-dense, sublane-aligned slab store of the hidden states.
        h_all_ref[:, start:start + size, :] = jnp.stack(slab, axis=1)
        start += size

    # Output refs ARE the recurrent state (constant time index_map keeps them
    # VMEM-resident across the sequential time sweep).
    h_out_ref[...] = h
    c_out_ref[...] = c


def _pick_t_block(T, target=32):
    """Timesteps per grid step: multiple of 8 dividing T (or T itself)."""
    if T <= target:
        return T
    best = None
    cand = 8
    while cand <= target:
        if T % cand == 0:
            best = cand
        cand += 8
    return best if best is not None else T


def _pick_b_block(B):
    """Batch rows per recurrent grid step.

    v5e/v6e (single TC): one batch block (b_blk = B) maximizes MXU rows on the
    serial critical path.  v7x (2 TCs): B/2 so the 'parallel' batch grid axis
    megacore-shards across both cores."""
    kind = ""
    try:
        kind = jax.devices()[0].device_kind.lower()
    except Exception:
        pass
    if "v7" in kind and B % 16 == 0:
        return B // 2
    return B


def _pad_gate_cols(w, H, Hp):
    """(rows, 4H) -> (rows, 4Hp): gate block k moved to columns [k*Hp, k*Hp+H)."""
    rows = w.shape[0]
    out = jnp.zeros((rows, 4 * Hp), w.dtype)
    for k in range(4):
        out = out.at[:, k * Hp:k * Hp + H].set(w[:, k * H:(k + 1) * H])
    return out


# ----------------------------------------------------------------------------
# Forward pass wrapper.
# ----------------------------------------------------------------------------
def lstm_langmodel_forward(x_ids, params):
    """x_ids: (B, T) int32 ids.  Returns (logits (B,T,V), h (1,B,H), c (1,B,H))."""
    embed = params["embed"]          # (vocab, E), row 0 zeros (padding_idx=0)
    w_ih_t = params["w_ih_t"]        # (E, 4H)  == W_ih.T
    w_hh_t = params["w_hh_t"]        # (H, 4H)  == W_hh.T
    bias = params["bias"]            # (1, 4H)  == (b_ih + b_hh)
    w_dense_t = params["w_dense_t"]  # (H, V)   == W_dense.T
    b_dense = params["b_dense"]      # (1, V)

    B, T = x_ids.shape
    E = embed.shape[1]
    H = w_hh_t.shape[0]
    V = w_dense_t.shape[1]
    Hp = _round_up(H, _LANE)
    Vp = _round_up(V, _LANE)

    # Pad H / V to lane multiples.  Zero padding keeps the padded h/c lanes
    # exactly zero through the recurrence (padded gate cols of W and bias are
    # zero -> g_pad = 0, c_pad stays 0, h_pad stays 0), so results are exact.
    if Hp != H:
        w_ih_t = _pad_gate_cols(w_ih_t, H, Hp)
        w_hh_t = jnp.zeros((Hp, 4 * Hp), jnp.float32).at[:H].set(
            _pad_gate_cols(w_hh_t, H, Hp))
        bias = _pad_gate_cols(bias, H, Hp)
        w_dense_t = jnp.zeros((Hp, V), jnp.float32).at[:H].set(w_dense_t)
    if Vp != V:
        w_dense_t = jnp.pad(w_dense_t, ((0, 0), (0, Vp - V)))
        b_dense = jnp.pad(b_dense, ((0, 0), (0, Vp - V)))

    # 1) Embedding gather (padding row 0 is zeros).
    emb = jnp.take(embed, x_ids, axis=0)                          # (B, T, E)

    # 2) Hoisted input projection + bias: one (B*T, E) @ (E, 4Hp) matmul.
    #    Stored bf16 in HBM to halve the activation round-trip traffic.
    gates_x = matmul_bias(emb.reshape(B * T, E), w_ih_t, bias,
                          out_dtype=jnp.bfloat16)                 # (B*T, 4Hp)
    gates_x = gates_x.reshape(B, T, 4 * Hp)                       # batch-major

    # 3) Recurrence over time blocks (batch blocks independent -> parallel).
    t_blk = _pick_t_block(T)
    b_blk = _pick_b_block(B)
    w_hh_bf = w_hh_t.astype(jnp.bfloat16)                         # bf16 MXU RHS

    kernel = functools.partial(_lstm_recurrent_kernel,
                               hidden_pad=Hp, t_block=t_blk)

    h_all, h_last, c_last = pl.pallas_call(
        kernel,
        out_shape=(
            jax.ShapeDtypeStruct((B, T, Hp), jnp.bfloat16),       # bf16 h_all
            jax.ShapeDtypeStruct((B, Hp), jnp.float32),
            jax.ShapeDtypeStruct((B, Hp), jnp.float32),
        ),
        grid_spec=pltpu.PrefetchScalarGridSpec(
            num_scalar_prefetch=0,
            grid=(B // b_blk, T // t_blk),
            in_specs=[
                pl.BlockSpec((b_blk, t_blk, 4 * Hp), lambda b, t: (b, t, 0)),
                pl.BlockSpec((Hp, 4 * Hp), lambda b, t: (0, 0)),
            ],
            out_specs=[
                pl.BlockSpec((b_blk, t_blk, Hp), lambda b, t: (b, t, 0)),
                pl.BlockSpec((b_blk, Hp), lambda b, t: (b, 0)),
                pl.BlockSpec((b_blk, Hp), lambda b, t: (b, 0)),
            ],
        ),
        compiler_params=pltpu.CompilerParams(
            # batch blocks are independent (megacore-splittable on v7x);
            # the time axis is a true recurrence -> sequential.
            dimension_semantics=("parallel", "arbitrary"),
            vmem_limit_bytes=_VMEM_LIMIT),
    )(gates_x, w_hh_bf)

    # 4) Batched dense head (dropout is identity in eval mode):
    #    one (B*T, Hp) @ (Hp, Vp) matmul instead of T per-step matmuls.
    logits = matmul_bias(h_all.reshape(B * T, Hp), w_dense_t, b_dense,
                         out_dtype=jnp.float32)
    logits = logits.reshape(B, T, Vp)
    if Vp != V:
        logits = logits[:, :, :V]
    if Hp != H:
        h_last = h_last[:, :H]
        c_last = c_last[:, :H]

    return logits, h_last[None, ...], c_last[None, ...]


# ----------------------------------------------------------------------------
# Parameters & pure-JAX reference (eval-mode torch semantics).
# ----------------------------------------------------------------------------
def make_params(key, input_size, embed_size, hidden_size, output_size):
    ks = jax.random.split(key, 6)
    scale = 0.1
    embed = scale * jax.random.normal(ks[0], (input_size, embed_size), jnp.float32)
    embed = embed.at[0].set(0.0)  # padding_idx=0
    w_ih = scale * jax.random.normal(ks[1], (4 * hidden_size, embed_size), jnp.float32)
    w_hh = scale * jax.random.normal(ks[2], (4 * hidden_size, hidden_size), jnp.float32)
    b_ih = scale * jax.random.normal(ks[3], (4 * hidden_size,), jnp.float32)
    b_hh = scale * jax.random.normal(ks[4], (4 * hidden_size,), jnp.float32)
    w_dense = scale * jax.random.normal(ks[5], (output_size, hidden_size), jnp.float32)
    b_dense = jnp.zeros((output_size,), jnp.float32)
    return {
        "embed": embed,
        "w_ih_t": w_ih.T,
        "w_hh_t": w_hh.T,
        "bias": (b_ih + b_hh)[None, :],
        "w_dense_t": w_dense.T,
        "b_dense": b_dense[None, :],
    }


def _reference_forward(x_ids, params):
    emb = jnp.take(params["embed"], x_ids, axis=0)          # (B, T, E)
    B, T, E = emb.shape
    H = params["w_hh_t"].shape[0]

    def step(carry, x_t):
        h, c = carry
        gates = x_t @ params["w_ih_t"] + h @ params["w_hh_t"] + params["bias"]
        i = jax.nn.sigmoid(gates[:, 0 * H:1 * H])
        f = jax.nn.sigmoid(gates[:, 1 * H:2 * H])
        g = jnp.tanh(gates[:, 2 * H:3 * H])
        o = jax.nn.sigmoid(gates[:, 3 * H:4 * H])
        c = f * c + i * g
        h = o * jnp.tanh(c)
        return (h, c), h

    h0 = jnp.zeros((B, H), jnp.float32)
    (h, c), hs = jax.lax.scan(step, (h0, h0), jnp.transpose(emb, (1, 0, 2)))
    out = jnp.transpose(hs, (1, 0, 2)) @ params["w_dense_t"] + params["b_dense"]
    return out, h[None], c[None]


if __name__ == "__main__":
    # Small shapes: vocab=128, embed=32, hidden=32, output=128, batch=8, seq=8
    INPUT_SIZE, EMBED, HIDDEN, OUTPUT = 128, 32, 32, 128
    B, T = 8, 8

    key = jax.random.PRNGKey(0)
    pkey, xkey = jax.random.split(key)
    params = make_params(pkey, INPUT_SIZE, EMBED, HIDDEN, OUTPUT)
    x_ids = jax.random.randint(xkey, (B, T), 0, INPUT_SIZE, dtype=jnp.int32)

    fwd = jax.jit(lstm_langmodel_forward)
    logits, h, c = jax.block_until_ready(fwd(x_ids, params))

    ref_logits, ref_h, ref_c = _reference_forward(x_ids, params)
    assert logits.shape == (B, T, OUTPUT)
    assert h.shape == (1, B, HIDDEN) and c.shape == (1, B, HIDDEN)
    # bf16 MXU operands / bf16 HBM activations -> loosened tolerance vs f32 ref.
    assert jnp.allclose(logits, ref_logits, atol=2e-2)
    assert jnp.allclose(h, ref_h, atol=2e-2)
    assert jnp.allclose(c, ref_c, atol=2e-2)

    print("KERNEL_OK")
</pallas_src>

<mosaic_0001>
module attributes {stable_mosaic.version = 11 : i64} {
  func.func @_matmul_bias_kernel(%arg0: i32, %arg1: i32, %arg2: memref<64x32xf32, #tpu.memory_space<vmem>>, %arg3: memref<32x512xf32, #tpu.memory_space<vmem>>, %arg4: memref<1x512xf32, #tpu.memory_space<vmem>>, %arg5: memref<64x512xbf16, #tpu.memory_space<vmem>>) attributes {dimension_semantics = [#tpu.dimension_semantics<parallel>, #tpu.dimension_semantics<parallel>], iteration_bounds = array<i64: 1, 1>, scalar_prefetch = 0 : i64, scratch_operands = 0 : i64, tpu.core_type = #tpu.core_type<tc>, window_params = [{transform_indices = @transform_0, window_bounds = array<i64: 64, 32>}, {transform_indices = @transform_1, window_bounds = array<i64: 32, 512>}, {transform_indices = @transform_2, window_bounds = array<i64: 1, 512>}, {transform_indices = @transform_3, window_bounds = array<i64: 64, 512>}]} {
    %c0 = arith.constant 0 : index
    %c0_0 = arith.constant 0 : index
    %0 = vector.load %arg2[%c0, %c0_0] : memref<64x32xf32, #tpu.memory_space<vmem>>, vector<64x32xf32>
    %1 = arith.truncf %0 : vector<64x32xf32> to vector<64x32xbf16>
    %c0_1 = arith.constant 0 : index
    %c0_2 = arith.constant 0 : index
    %2 = vector.load %arg3[%c0_1, %c0_2] : memref<32x512xf32, #tpu.memory_space<vmem>>, vector<32x512xf32>
    %3 = arith.truncf %2 : vector<32x512xf32> to vector<32x512xbf16>
    %cst = arith.constant dense<0.000000e+00> : vector<64x512xf32>
    %4 = tpu.matmul %1, %3, %cst {dimension_numbers = #tpu.dot_dimension_numbers<[1], [0], [0], [1], [0, 0, 1, 1], [], []>} : vector<64x32xbf16>, vector<32x512xbf16>, vector<64x512xf32> -> vector<64x512xf32>
    %c0_3 = arith.constant 0 : index
    %c0_4 = arith.constant 0 : index
    %5 = vector.load %arg4[%c0_3, %c0_4] : memref<1x512xf32, #tpu.memory_space<vmem>>, vector<1x512xf32>
    %6 = vector.broadcast %5 : vector<1x512xf32> to vector<64x512xf32>
    %7 = arith.addf %4, %6 : vector<64x512xf32>
    %8 = arith.truncf %7 : vector<64x512xf32> to vector<64x512xbf16>
    %c0_5 = arith.constant 0 : index
    %c0_6 = arith.constant 0 : index
    %9 = vector.load %arg5[%c0_5, %c0_6] : memref<64x512xbf16, #tpu.memory_space<vmem>>, vector<64x512xbf16>
    tpu.vector_store %arg5[%c0_5, %c0_6], %8 {strides = array<i32>} : memref<64x512xbf16, #tpu.memory_space<vmem>>, vector<64x512xbf16>,
    return
  }
  func.func @transform_0(%arg0: i32, %arg1: i32) -> (i32, i32) {
    %c0_i32 = arith.constant 0 : i32
    %c0_i32_0 = arith.constant 0 : i32
    return %arg0, %c0_i32 : i32, i32
  }
  func.func @transform_1(%arg0: i32, %arg1: i32) -> (i32, i32) {
    %c0_i32 = arith.constant 0 : i32
    %c0_i32_0 = arith.constant 0 : i32
    return %c0_i32, %arg1 : i32, i32
  }
  func.func @transform_2(%arg0: i32, %arg1: i32) -> (i32, i32) {
    %c0_i32 = arith.constant 0 : i32
    %c0_i32_0 = arith.constant 0 : i32
    return %c0_i32, %arg1 : i32, i32
  }
  func.func @transform_3(%arg0: i32, %arg1: i32) -> (i32, i32) {
    %c0_i32 = arith.constant 0 : i32
    return %arg0, %arg1 : i32, i32
  }
}

module attributes {stable_mosaic.version = 11 : i64} {
  func.func @_lstm_recurrent_kernel(%arg0: i32, %arg1: i32, %arg2: memref<8x8x512xbf16, #tpu.memory_space<vmem>>, %arg3: memref<128x512xbf16, #tpu.memory_space<vmem>>, %arg4: memref<8x8x128xbf16, #tpu.memory_space<vmem>>, %arg5: memref<8x128xf32, #tpu.memory_space<vmem>>, %arg6: memref<8x128xf32, #tpu.memory_space<vmem>>) attributes {dimension_semantics = [#tpu.dimension_semantics<parallel>, #tpu.dimension_semantics<arbitrary>], iteration_bounds = array<i64: 1, 1>, scalar_prefetch = 0 : i64, scratch_operands = 0 : i64, tpu.core_type = #tpu.core_type<tc>, window_params = [{transform_indices = @transform_0, window_bounds = array<i64: 8, 8, 512>}, {pipeline_mode = #tpu.pipeline_mode<synchronous>, transform_indices = @transform_1, window_bounds = array<i64: 128, 512>}, {transform_indices = @transform_2, window_bounds = array<i64: 8, 8, 128>}, {transform_indices = @transform_3, window_bounds = array<i64: 8, 128>}, {transform_indices = @transform_4, window_bounds = array<i64: 8, 128>}]} {
    %c0_i32 = arith.constant 0 : i32
    %0 = arith.cmpi eq, %arg1, %c0_i32 : i32
    %1 = arith.extui %0 : i1 to i32
    %c0_i32_0 = arith.constant 0 : i32
    %2 = arith.cmpi ne, %1, %c0_i32_0 : i32
    scf.if %2 {
      %cst_47 = arith.constant 0.000000e+00 : f32
      %268 = vector.broadcast %cst_47 : f32 to vector<8x128xf32>
      %c0_48 = arith.constant 0 : index
      %c0_49 = arith.constant 0 : index
      %269 = vector.load %arg5[%c0_48, %c0_49] : memref<8x128xf32, #tpu.memory_space<vmem>>, vector<8x128xf32>
      tpu.vector_store %arg5[%c0_48, %c0_49], %268 {strides = array<i32>} : memref<8x128xf32, #tpu.memory_space<vmem>>, vector<8x128xf32>,
      %cst_50 = arith.constant 0.000000e+00 : f32
      %270 = vector.broadcast %cst_50 : f32 to vector<8x128xf32>
      %c0_51 = arith.constant 0 : index
      %c0_52 = arith.constant 0 : index
      %271 = vector.load %arg6[%c0_51, %c0_52] : memref<8x128xf32, #tpu.memory_space<vmem>>, vector<8x128xf32>
      tpu.vector_store %arg6[%c0_51, %c0_52], %270 {strides = array<i32>} : memref<8x128xf32, #tpu.memory_space<vmem>>, vector<8x128xf32>,
    } else {
    }
    %c0 = arith.constant 0 : index
    %c0_1 = arith.constant 0 : index
    %3 = vector.load %arg5[%c0, %c0_1] : memref<8x128xf32, #tpu.memory_space<vmem>>, vector<8x128xf32>
    %c0_2 = arith.constant 0 : index
    %c0_3 = arith.constant 0 : index
    %4 = vector.load %arg6[%c0_2, %c0_3] : memref<8x128xf32, #tpu.memory_space<vmem>>, vector<8x128xf32>
    %c0_4 = arith.constant 0 : index
    %c0_5 = arith.constant 0 : index
    %5 = vector.load %arg3[%c0_4, %c0_5] : memref<128x512xbf16, #tpu.memory_space<vmem>>, vector<128x512xbf16>
    %c0_6 = arith.constant 0 : index
    %c0_7 = arith.constant 0 : index
    %c0_8 = arith.constant 0 : index
    %6 = vector.load %arg2[%c0_6, %c0_7, %c0_8] : memref<8x8x512xbf16, #tpu.memory_space<vmem>>, vector<8x8x512xbf16>
    %7 = arith.extf %6 : vector<8x8x512xbf16> to vector<8x8x512xf32>
    %8 = vector.extract_strided_slice %7 {offsets = [0, 0, 0], sizes = [8, 1, 512], strides = [1, 1, 1]} : vector<8x8x512xf32> to vector<8x1x512xf32>
    %9 = vector.shape_cast %8 : vector<8x1x512xf32> to vector<8x512xf32>
    %10 = arith.truncf %3 : vector<8x128xf32> to vector<8x128xbf16>
    %cst = arith.constant dense<0.000000e+00> : vector<8x512xf32>
    %11 = tpu.matmul %10, %5, %cst {dimension_numbers = #tpu.dot_dimension_numbers<[1], [0], [0], [1], [0, 0, 1, 1], [], []>} : vector<8x128xbf16>, vector<128x512xbf16>, vector<8x512xf32> -> vector<8x512xf32>
    %12 = arith.addf %9, %11 : vector<8x512xf32>
    %13 = vector.extract_strided_slice %12 {offsets = [0, 0], sizes = [8, 128], strides = [1, 1]} : vector<8x512xf32> to vector<8x128xf32>
    %14 = arith.negf %13 : vector<8x128xf32>
    %15 = math.exp %14 : vector<8x128xf32>
    %cst_9 = arith.constant 1.000000e+00 : f32
    %16 = vector.broadcast %cst_9 : f32 to vector<8x128xf32>
    %17 = arith.addf %16, %15 : vector<8x128xf32>
    %18 = arith.divf %16, %17 : vector<8x128xf32>
    %19 = vector.extract_strided_slice %12 {offsets = [0, 128], sizes = [8, 128], strides = [1, 1]} : vector<8x512xf32> to vector<8x128xf32>
    %20 = arith.negf %19 : vector<8x128xf32>
    %21 = math.exp %20 : vector<8x128xf32>
    %cst_10 = arith.constant 1.000000e+00 : f32
    %22 = vector.broadcast %cst_10 : f32 to vector<8x128xf32>
    %23 = arith.addf %22, %21 : vector<8x128xf32>
    %24 = arith.divf %22, %23 : vector<8x128xf32>
    %25 = vector.extract_strided_slice %12 {offsets = [0, 256], sizes = [8, 128], strides = [1, 1]} : vector<8x512xf32> to vector<8x128xf32>
    %26 = math.tanh %25 : vector<8x128xf32>
    %27 = vector.extract_strided_slice %12 {offsets = [0, 384], sizes = [8, 128], strides = [1, 1]} : vector<8x512xf32> to vector<8x128xf32>
    %28 = arith.negf %27 : vector<8x128xf32>
    %29 = math.exp %28 : vector<8x128xf32>
    %cst_11 = arith.constant 1.000000e+00 : f32
    %30 = vector.broadcast %cst_11 : f32 to vector<8x128xf32>
    %31 = arith.addf %30, %29 : vector<8x128xf32>
    %32 = arith.divf %30, %31 : vector<8x128xf32>
    %33 = arith.mulf %24, %4 : vector<8x128xf32>
    %34 = arith.mulf %18, %26 : vector<8x128xf32>
    %35 = arith.addf %33, %34 : vector<8x128xf32>
    %36 = math.tanh %35 : vector<8x128xf32>
    %37 = arith.mulf %32, %36 : vector<8x128xf32>
    %38 = arith.truncf %37 : vector<8x128xf32> to vector<8x128xbf16>
    %39 = vector.extract_strided_slice %7 {offsets = [0, 1, 0], sizes = [8, 1, 512], strides = [1, 1, 1]} : vector<8x8x512xf32> to vector<8x1x512xf32>
    %40 = vector.shape_cast %39 : vector<8x1x512xf32> to vector<8x512xf32>
    %41 = arith.truncf %37 : vector<8x128xf32> to vector<8x128xbf16>
    %cst_12 = arith.constant dense<0.000000e+00> : vector<8x512xf32>
    %42 = tpu.matmul %41, %5, %cst_12 {dimension_numbers = #tpu.dot_dimension_numbers<[1], [0], [0], [1], [0, 0, 1, 1], [], []>} : vector<8x128xbf16>, vector<128x512xbf16>, vector<8x512xf32> -> vector<8x512xf32>
    %43 = arith.addf %40, %42 : vector<8x512xf32>
    %44 = vector.extract_strided_slice %43 {offsets = [0, 0], sizes = [8, 128], strides = [1, 1]} : vector<8x512xf32> to vector<8x128xf32>
    %45 = arith.negf %44 : vector<8x128xf32>
    %46 = math.exp %45 : vector<8x128xf32>
    %cst_13 = arith.constant 1.000000e+00 : f32
    %47 = vector.broadcast %cst_13 : f32 to vector<8x128xf32>
    %48 = arith.addf %47, %46 : vector<8x128xf32>
    %49 = arith.divf %47, %48 : vector<8x128xf32>
    %50 = vector.extract_strided_slice %43 {offsets = [0, 128], sizes = [8, 128], strides = [1, 1]} : vector<8x512xf32> to vector<8x128xf32>
    %51 = arith.negf %50 : vector<8x128xf32>
    %52 = math.exp %51 : vector<8x128xf32>
    %cst_14 = arith.constant 1.000000e+00 : f32
    %53 = vector.broadcast %cst_14 : f32 to vector<8x128xf32>
    %54 = arith.addf %53, %52 : vector<8x128xf32>
    %55 = arith.divf %53, %54 : vector<8x128xf32>
    %56 = vector.extract_strided_slice %43 {offsets = [0, 256], sizes = [8, 128], strides = [1, 1]} : vector<8x512xf32> to vector<8x128xf32>
    %57 = math.tanh %56 : vector<8x128xf32>
    %58 = vector.extract_strided_slice %43 {offsets = [0, 384], sizes = [8, 128], strides = [1, 1]} : vector<8x512xf32> to vector<8x128xf32>
    %59 = arith.negf %58 : vector<8x128xf32>
    %60 = math.exp %59 : vector<8x128xf32>
    %cst_15 = arith.constant 1.000000e+00 : f32
    %61 = vector.broadcast %cst_15 : f32 to vector<8x128xf32>
    %62 = arith.addf %61, %60 : vector<8x128xf32>
    %63 = arith.divf %61, %62 : vector<8x128xf32>
    %64 = arith.mulf %55, %35 : vector<8x128xf32>
    %65 = arith.mulf %49, %57 : vector<8x128xf32>
    %66 = arith.addf %64, %65 : vector<8x128xf32>
    %67 = math.tanh %66 : vector<8x128xf32>
    %68 = arith.mulf %63, %67 : vector<8x128xf32>
    %69 = arith.truncf %68 : vector<8x128xf32> to vector<8x128xbf16>
    %70 = vector.extract_strided_slice %7 {offsets = [0, 2, 0], sizes = [8, 1, 512], strides = [1, 1, 1]} : vector<8x8x512xf32> to vector<8x1x512xf32>
    %71 = vector.shape_cast %70 : vector<8x1x512xf32> to vector<8x512xf32>
    %72 = arith.truncf %68 : vector<8x128xf32> to vector<8x128xbf16>
    %cst_16 = arith.constant dense<0.000000e+00> : vector<8x512xf32>
    %73 = tpu.matmul %72, %5, %cst_16 {dimension_numbers = #tpu.dot_dimension_numbers<[1], [0], [0], [1], [0, 0, 1, 1], [], []>} : vector<8x128xbf16>, vector<128x512xbf16>, vector<8x512xf32> -> vector<8x512xf32>
    %74 = arith.addf %71, %73 : vector<8x512xf32>
    %75 = vector.extract_strided_slice %74 {offsets = [0, 0], sizes = [8, 128], strides = [1, 1]} : vector<8x512xf32> to vector<8x128xf32>
    %76 = arith.negf %75 : vector<8x128xf32>
    %77 = math.exp %76 : vector<8x128xf32>
    %cst_17 = arith.constant 1.000000e+00 : f32
    %78 = vector.broadcast %cst_17 : f32 to vector<8x128xf32>
    %79 = arith.addf %78, %77 : vector<8x128xf32>
    %80 = arith.divf %78, %79 : vector<8x128xf32>
    %81 = vector.extract_strided_slice %74 {offsets = [0, 128], sizes = [8, 128], strides = [1, 1]} : vector<8x512xf32> to vector<8x128xf32>
    %82 = arith.negf %81 : vector<8x128xf32>
    %83 = math.exp %82 : vector<8x128xf32>
    %cst_18 = arith.constant 1.000000e+00 : f32
    %84 = vector.broadcast %cst_18 : f32 to vector<8x128xf32>
    %85 = arith.addf %84, %83 : vector<8x128xf32>
    %86 = arith.divf %84, %85 : vector<8x128xf32>
    %87 = vector.extract_strided_slice %74 {offsets = [0, 256], sizes = [8, 128], strides = [1, 1]} : vector<8x512xf32> to vector<8x128xf32>
    %88 = math.tanh %87 : vector<8x128xf32>
    %89 = vector.extract_strided_slice %74 {offsets = [0, 384], sizes = [8, 128], strides = [1, 1]} : vector<8x512xf32> to vector<8x128xf32>
    %90 = arith.negf %89 : vector<8x128xf32>
    %91 = math.exp %90 : vector<8x128xf32>
    %cst_19 = arith.constant 1.000000e+00 : f32
    %92 = vector.broadcast %cst_19 : f32 to vector<8x128xf32>
    %93 = arith.addf %92, %91 : vector<8x128xf32>
    %94 = arith.divf %92, %93 : vector<8x128xf32>
    %95 = arith.mulf %86, %66 : vector<8x128xf32>
    %96 = arith.mulf %80, %88 : vector<8x128xf32>
    %97 = arith.addf %95, %96 : vector<8x128xf32>
    %98 = math.tanh %97 : vector<8x128xf32>
    %99 = arith.mulf %94, %98 : vector<8x128xf32>
    %100 = arith.truncf %99 : vector<8x128xf32> to vector<8x128xbf16>
    %101 = vector.extract_strided_slice %7 {offsets = [0, 3, 0], sizes = [8, 1, 512], strides = [1, 1, 1]} : vector<8x8x512xf32> to vector<8x1x512xf32>
    %102 = vector.shape_cast %101 : vector<8x1x512xf32> to vector<8x512xf32>
    %103 = arith.truncf %99 : vector<8x128xf32> to vector<8x128xbf16>
    %cst_20 = arith.constant dense<0.000000e+00> : vector<8x512xf32>
    %104 = tpu.matmul %103, %5, %cst_20 {dimension_numbers = #tpu.dot_dimension_numbers<[1], [0], [0], [1], [0, 0, 1, 1], [], []>} : vector<8x128xbf16>, vector<128x512xbf16>, vector<8x512xf32> -> vector<8x512xf32>
    %105 = arith.addf %102, %104 : vector<8x512xf32>
    %106 = vector.extract_strided_slice %105 {offsets = [0, 0], sizes = [8, 128], strides = [1, 1]} : vector<8x512xf32> to vector<8x128xf32>
    %107 = arith.negf %106 : vector<8x128xf32>
    %108 = math.exp %107 : vector<8x128xf32>
    %cst_21 = arith.constant 1.000000e+00 : f32
    %109 = vector.broadcast %cst_21 : f32 to vector<8x128xf32>
    %110 = arith.addf %109, %108 : vector<8x128xf32>
    %111 = arith.divf %109, %110 : vector<8x128xf32>
    %112 = vector.extract_strided_slice %105 {offsets = [0, 128], sizes = [8, 128], strides = [1, 1]} : vector<8x512xf32> to vector<8x128xf32>
    %113 = arith.negf %112 : vector<8x128xf32>
    %114 = math.exp %113 : vector<8x128xf32>
    %cst_22 = arith.constant 1.000000e+00 : f32
    %115 = vector.broadcast %cst_22 : f32 to vector<8x128xf32>
    %116 = arith.addf %115, %114 : vector<8x128xf32>
    %117 = arith.divf %115, %116 : vector<8x128xf32>
    %118 = vector.extract_strided_slice %105 {offsets = [0, 256], sizes = [8, 128], strides = [1, 1]} : vector<8x512xf32> to vector<8x128xf32>
    %119 = math.tanh %118 : vector<8x128xf32>
    %120 = vector.extract_strided_slice %105 {offsets = [0, 384], sizes = [8, 128], strides = [1, 1]} : vector<8x512xf32> to vector<8x128xf32>
    %121 = arith.negf %120 : vector<8x128xf32>
    %122 = math.exp %121 : vector<8x128xf32>
    %cst_23 = arith.constant 1.000000e+00 : f32
    %123 = vector.broadcast %cst_23 : f32 to vector<8x128xf32>
    %124 = arith.addf %123, %122 : vector<8x128xf32>
    %125 = arith.divf %123, %124 : vector<8x128xf32>
    %126 = arith.mulf %117, %97 : vector<8x128xf32>
    %127 = arith.mulf %111, %119 : vector<8x128xf32>
    %128 = arith.addf %126, %127 : vector<8x128xf32>
    %129 = math.tanh %128 : vector<8x128xf32>
    %130 = arith.mulf %125, %129 : vector<8x128xf32>
    %131 = arith.truncf %130 : vector<8x128xf32> to vector<8x128xbf16>
    %132 = vector.extract_strided_slice %7 {offsets = [0, 4, 0], sizes = [8, 1, 512], strides = [1, 1, 1]} : vector<8x8x512xf32> to vector<8x1x512xf32>
    %133 = vector.shape_cast %132 : vector<8x1x512xf32> to vector<8x512xf32>
    %134 = arith.truncf %130 : vector<8x128xf32> to vector<8x128xbf16>
    %cst_24 = arith.constant dense<0.000000e+00> : vector<8x512xf32>
    %135 = tpu.matmul %134, %5, %cst_24 {dimension_numbers = #tpu.dot_dimension_numbers<[1], [0], [0], [1], [0, 0, 1, 1], [], []>} : vector<8x128xbf16>, vector<128x512xbf16>, vector<8x512xf32> -> vector<8x512xf32>
    %136 = arith.addf %133, %135 : vector<8x512xf32>
    %137 = vector.extract_strided_slice %136 {offsets = [0, 0], sizes = [8, 128], strides = [1, 1]} : vector<8x512xf32> to vector<8x128xf32>
    %138 = arith.negf %137 : vector<8x128xf32>
    %139 = math.exp %138 : vector<8x128xf32>
    %cst_25 = arith.constant 1.000000e+00 : f32
    %140 = vector.broadcast %cst_25 : f32 to vector<8x128xf32>
    %141 = arith.addf %140, %139 : vector<8x128xf32>
    %142 = arith.divf %140, %141 : vector<8x128xf32>
    %143 = vector.extract_strided_slice %136 {offsets = [0, 128], sizes = [8, 128], strides = [1, 1]} : vector<8x512xf32> to vector<8x128xf32>
    %144 = arith.negf %143 : vector<8x128xf32>
    %145 = math.exp %144 : vector<8x128xf32>
    %cst_26 = arith.constant 1.000000e+00 : f32
    %146 = vector.broadcast %cst_26 : f32 to vector<8x128xf32>
    %147 = arith.addf %146, %145 : vector<8x128xf32>
    %148 = arith.divf %146, %147 : vector<8x128xf32>
    %149 = vector.extract_strided_slice %136 {offsets = [0, 256], sizes = [8, 128], strides = [1, 1]} : vector<8x512xf32> to vector<8x128xf32>
    %150 = math.tanh %149 : vector<8x128xf32>
    %151 = vector.extract_strided_slice %136 {offsets = [0, 384], sizes = [8, 128], strides = [1, 1]} : vector<8x512xf32> to vector<8x128xf32>
    %152 = arith.negf %151 : vector<8x128xf32>
    %153 = math.exp %152 : vector<8x128xf32>
    %cst_27 = arith.constant 1.000000e+00 : f32
    %154 = vector.broadcast %cst_27 : f32 to vector<8x128xf32>
    %155 = arith.addf %154, %153 : vector<8x128xf32>
    %156 = arith.divf %154, %155 : vector<8x128xf32>
    %157 = arith.mulf %148, %128 : vector<8x128xf32>
    %158 = arith.mulf %142, %150 : vector<8x128xf32>
    %159 = arith.addf %157, %158 : vector<8x128xf32>
    %160 = math.tanh %159 : vector<8x128xf32>
    %161 = arith.mulf %156, %160 : vector<8x128xf32>
    %162 = arith.truncf %161 : vector<8x128xf32> to vector<8x128xbf16>
    %163 = vector.extract_strided_slice %7 {offsets = [0, 5, 0], sizes = [8, 1, 512], strides = [1, 1, 1]} : vector<8x8x512xf32> to vector<8x1x512xf32>
    %164 = vector.shape_cast %163 : vector<8x1x512xf32> to vector<8x512xf32>
    %165 = arith.truncf %161 : vector<8x128xf32> to vector<8x128xbf16>
    %cst_28 = arith.constant dense<0.000000e+00> : vector<8x512xf32>
    %166 = tpu.matmul %165, %5, %cst_28 {dimension_numbers = #tpu.dot_dimension_numbers<[1], [0], [0], [1], [0, 0, 1, 1], [], []>} : vector<8x128xbf16>, vector<128x512xbf16>, vector<8x512xf32> -> vector<8x512xf32>
    %167 = arith.addf %164, %166 : vector<8x512xf32>
    %168 = vector.extract_strided_slice %167 {offsets = [0, 0], sizes = [8, 128], strides = [1, 1]} : vector<8x512xf32> to vector<8x128xf32>
    %169 = arith.negf %168 : vector<8x128xf32>
    %170 = math.exp %169 : vector<8x128xf32>
    %cst_29 = arith.constant 1.000000e+00 : f32
    %171 = vector.broadcast %cst_29 : f32 to vector<8x128xf32>
    %172 = arith.addf %171, %170 : vector<8x128xf32>
    %173 = arith.divf %171, %172 : vector<8x128xf32>
    %174 = vector.extract_strided_slice %167 {offsets = [0, 128], sizes = [8, 128], strides = [1, 1]} : vector<8x512xf32> to vector<8x128xf32>
    %175 = arith.negf %174 : vector<8x128xf32>
    %176 = math.exp %175 : vector<8x128xf32>
    %cst_30 = arith.constant 1.000000e+00 : f32
    %177 = vector.broadcast %cst_30 : f32 to vector<8x128xf32>
    %178 = arith.addf %177, %176 : vector<8x128xf32>
    %179 = arith.divf %177, %178 : vector<8x128xf32>
    %180 = vector.extract_strided_slice %167 {offsets = [0, 256], sizes = [8, 128], strides = [1, 1]} : vector<8x512xf32> to vector<8x128xf32>
    %181 = math.tanh %180 : vector<8x128xf32>
    %182 = vector.extract_strided_slice %167 {offsets = [0, 384], sizes = [8, 128], strides = [1, 1]} : vector<8x512xf32> to vector<8x128xf32>
    %183 = arith.negf %182 : vector<8x128xf32>
    %184 = math.exp %183 : vector<8x128xf32>
    %cst_31 = arith.constant 1.000000e+00 : f32
    %185 = vector.broadcast %cst_31 : f32 to vector<8x128xf32>
    %186 = arith.addf %185, %184 : vector<8x128xf32>
    %187 = arith.divf %185, %186 : vector<8x128xf32>
    %188 = arith.mulf %179, %159 : vector<8x128xf32>
    %189 = arith.mulf %173, %181 : vector<8x128xf32>
    %190 = arith.addf %188, %189 : vector<8x128xf32>
    %191 = math.tanh %190 : vector<8x128xf32>
    %192 = arith.mulf %187, %191 : vector<8x128xf32>
    %193 = arith.truncf %192 : vector<8x128xf32> to vector<8x128xbf16>
    %194 = vector.extract_strided_slice %7 {offsets = [0, 6, 0], sizes = [8, 1, 512], strides = [1, 1, 1]} : vector<8x8x512xf32> to vector<8x1x512xf32>
    %195 = vector.shape_cast %194 : vector<8x1x512xf32> to vector<8x512xf32>
    %196 = arith.truncf %192 : vector<8x128xf32> to vector<8x128xbf16>
    %cst_32 = arith.constant dense<0.000000e+00> : vector<8x512xf32>
    %197 = tpu.matmul %196, %5, %cst_32 {dimension_numbers = #tpu.dot_dimension_numbers<[1], [0], [0], [1], [0, 0, 1, 1], [], []>} : vector<8x128xbf16>, vector<128x512xbf16>, vector<8x512xf32> -> vector<8x512xf32>
    %198 = arith.addf %195, %197 : vector<8x512xf32>
    %199 = vector.extract_strided_slice %198 {offsets = [0, 0], sizes = [8, 128], strides = [1, 1]} : vector<8x512xf32> to vector<8x128xf32>
    %200 = arith.negf %199 : vector<8x128xf32>
    %201 = math.exp %200 : vector<8x128xf32>
    %cst_33 = arith.constant 1.000000e+00 : f32
    %202 = vector.broadcast %cst_33 : f32 to vector<8x128xf32>
    %203 = arith.addf %202, %201 : vector<8x128xf32>
    %204 = arith.divf %202, %203 : vector<8x128xf32>
    %205 = vector.extract_strided_slice %198 {offsets = [0, 128], sizes = [8, 128], strides = [1, 1]} : vector<8x512xf32> to vector<8x128xf32>
    %206 = arith.negf %205 : vector<8x128xf32>
    %207 = math.exp %206 : vector<8x128xf32>
    %cst_34 = arith.constant 1.000000e+00 : f32
    %208 = vector.broadcast %cst_34 : f32 to vector<8x128xf32>
    %209 = arith.addf %208, %207 : vector<8x128xf32>
    %210 = arith.divf %208, %209 : vector<8x128xf32>
    %211 = vector.extract_strided_slice %198 {offsets = [0, 256], sizes = [8, 128], strides = [1, 1]} : vector<8x512xf32> to vector<8x128xf32>
    %212 = math.tanh %211 : vector<8x128xf32>
    %213 = vector.extract_strided_slice %198 {offsets = [0, 384], sizes = [8, 128], strides = [1, 1]} : vector<8x512xf32> to vector<8x128xf32>
    %214 = arith.negf %213 : vector<8x128xf32>
    %215 = math.exp %214 : vector<8x128xf32>
    %cst_35 = arith.constant 1.000000e+00 : f32
    %216 = vector.broadcast %cst_35 : f32 to vector<8x128xf32>
    %217 = arith.addf %216, %215 : vector<8x128xf32>
    %218 = arith.divf %216, %217 : vector<8x128xf32>
    %219 = arith.mulf %210, %190 : vector<8x128xf32>
    %220 = arith.mulf %204, %212 : vector<8x128xf32>
    %221 = arith.addf %219, %220 : vector<8x128xf32>
    %222 = math.tanh %221 : vector<8x128xf32>
    %223 = arith.mulf %218, %222 : vector<8x128xf32>
    %224 = arith.truncf %223 : vector<8x128xf32> to vector<8x128xbf16>
    %225 = vector.extract_strided_slice %7 {offsets = [0, 7, 0], sizes = [8, 1, 512], strides = [1, 1, 1]} : vector<8x8x512xf32> to vector<8x1x512xf32>
    %226 = vector.shape_cast %225 : vector<8x1x512xf32> to vector<8x512xf32>
    %227 = arith.truncf %223 : vector<8x128xf32> to vector<8x128xbf16>
    %cst_36 = arith.constant dense<0.000000e+00> : vector<8x512xf32>
    %228 = tpu.matmul %227, %5, %cst_36 {dimension_numbers = #tpu.dot_dimension_numbers<[1], [0], [0], [1], [0, 0, 1, 1], [], []>} : vector<8x128xbf16>, vector<128x512xbf16>, vector<8x512xf32> -> vector<8x512xf32>
    %229 = arith.addf %226, %228 : vector<8x512xf32>
    %230 = vector.extract_strided_slice %229 {offsets = [0, 0], sizes = [8, 128], strides = [1, 1]} : vector<8x512xf32> to vector<8x128xf32>
    %231 = arith.negf %230 : vector<8x128xf32>
    %232 = math.exp %231 : vector<8x128xf32>
    %cst_37 = arith.constant 1.000000e+00 : f32
    %233 = vector.broadcast %cst_37 : f32 to vector<8x128xf32>
    %234 = arith.addf %233, %232 : vector<8x128xf32>
    %235 = arith.divf %233, %234 : vector<8x128xf32>
    %236 = vector.extract_strided_slice %229 {offsets = [0, 128], sizes = [8, 128], strides = [1, 1]} : vector<8x512xf32> to vector<8x128xf32>
    %237 = arith.negf %236 : vector<8x128xf32>
    %238 = math.exp %237 : vector<8x128xf32>
    %cst_38 = arith.constant 1.000000e+00 : f32
    %239 = vector.broadcast %cst_38 : f32 to vector<8x128xf32>
    %240 = arith.addf %239, %238 : vector<8x128xf32>
    %241 = arith.divf %239, %240 : vector<8x128xf32>
    %242 = vector.extract_strided_slice %229 {offsets = [0, 256], sizes = [8, 128], strides = [1, 1]} : vector<8x512xf32> to vector<8x128xf32>
    %243 = math.tanh %242 : vector<8x128xf32>
    %244 = vector.extract_strided_slice %229 {offsets = [0, 384], sizes = [8, 128], strides = [1, 1]} : vector<8x512xf32> to vector<8x128xf32>
    %245 = arith.negf %244 : vector<8x128xf32>
    %246 = math.exp %245 : vector<8x128xf32>
    %cst_39 = arith.constant 1.000000e+00 : f32
    %247 = vector.broadcast %cst_39 : f32 to vector<8x128xf32>
    %248 = arith.addf %247, %246 : vector<8x128xf32>
    %249 = arith.divf %247, %248 : vector<8x128xf32>
    %250 = arith.mulf %241, %221 : vector<8x128xf32>
    %251 = arith.mulf %235, %243 : vector<8x128xf32>
    %252 = arith.addf %250, %251 : vector<8x128xf32>
    %253 = math.tanh %252 : vector<8x128xf32>
    %254 = arith.mulf %249, %253 : vector<8x128xf32>
    %255 = arith.truncf %254 : vector<8x128xf32> to vector<8x128xbf16>
    %256 = vector.shape_cast %38 : vector<8x128xbf16> to vector<8x1x128xbf16>
    %257 = vector.shape_cast %69 : vector<8x128xbf16> to vector<8x1x128xbf16>
    %258 = vector.shape_cast %100 : vector<8x128xbf16> to vector<8x1x128xbf16>
    %259 = vector.shape_cast %131 : vector<8x128xbf16> to vector<8x1x128xbf16>
    %260 = vector.shape_cast %162 : vector<8x128xbf16> to vector<8x1x128xbf16>
    %261 = vector.shape_cast %193 : vector<8x128xbf16> to vector<8x1x128xbf16>
    %262 = vector.shape_cast %224 : vector<8x128xbf16> to vector<8x1x128xbf16>
    %263 = vector.shape_cast %255 : vector<8x128xbf16> to vector<8x1x128xbf16>
    %264 = tpu.concatenate %256, %257, %258, %259, %260, %261, %262, %263 in 1 : vector<8x1x128xbf16>, vector<8x1x128xbf16>, vector<8x1x128xbf16>, vector<8x1x128xbf16>, vector<8x1x128xbf16>, vector<8x1x128xbf16>, vector<8x1x128xbf16>, vector<8x1x128xbf16> -> vector<8x8x128xbf16>
    %c0_40 = arith.constant 0 : index
    %c0_41 = arith.constant 0 : index
    %c0_42 = arith.constant 0 : index
    %265 = vector.load %arg4[%c0_40, %c0_41, %c0_42] : memref<8x8x128xbf16, #tpu.memory_space<vmem>>, vector<8x8x128xbf16>
    tpu.vector_store %arg4[%c0_40, %c0_41, %c0_42], %264 {strides = array<i32>} : memref<8x8x128xbf16, #tpu.memory_space<vmem>>, vector<8x8x128xbf16>,
    %c0_43 = arith.constant 0 : index
    %c0_44 = arith.constant 0 : index
    %266 = vector.load %arg5[%c0_43, %c0_44] : memref<8x128xf32, #tpu.memory_space<vmem>>, vector<8x128xf32>
    tpu.vector_store %arg5[%c0_43, %c0_44], %254 {strides = array<i32>} : memref<8x128xf32, #tpu.memory_space<vmem>>, vector<8x128xf32>,
    %c0_45 = arith.constant 0 : index
    %c0_46 = arith.constant 0 : index
    %267 = vector.load %arg6[%c0_45, %c0_46] : memref<8x128xf32, #tpu.memory_space<vmem>>, vector<8x128xf32>
    tpu.vector_store %arg6[%c0_45, %c0_46], %252 {strides = array<i32>} : memref<8x128xf32, #tpu.memory_space<vmem>>, vector<8x128xf32>,
    return
  }
  func.func @transform_0(%arg0: i32, %arg1: i32) -> (i32, i32, i32) {
    %c0_i32 = arith.constant 0 : i32
    %c0_i32_0 = arith.constant 0 : i32
    return %arg0, %arg1, %c0_i32 : i32, i32, i32
  }
  func.func @transform_1(%arg0: i32, %arg1: i32) -> (i32, i32) {
    %c0_i32 = arith.constant 0 : i32
    %c0_i32_0 = arith.constant 0 : i32
    %c0_i32_1 = arith.constant 0 : i32
    return %c0_i32, %c0_i32_0 : i32, i32
  }
  func.func @transform_2(%arg0: i32, %arg1: i32) -> (i32, i32, i32) {
    %c0_i32 = arith.constant 0 : i32
    %c0_i32_0 = arith.constant 0 : i32
    return %arg0, %arg1, %c0_i32 : i32, i32, i32
  }
  func.func @transform_3(%arg0: i32, %arg1: i32) -> (i32, i32) {
    %c0_i32 = arith.constant 0 : i32
    %c0_i32_0 = arith.constant 0 : i32
    return %arg0, %c0_i32 : i32, i32
  }
  func.func @transform_4(%arg0: i32, %arg1: i32) -> (i32, i32) {
    %c0_i32 = arith.constant 0 : i32
    %c0_i32_0 = arith.constant 0 : i32
    return %arg0, %c0_i32 : i32, i32
  }
}

module attributes {stable_mosaic.version = 11 : i64} {
  func.func @_matmul_bias_kernel(%arg0: i32, %arg1: i32, %arg2: memref<64x128xbf16, #tpu.memory_space<vmem>>, %arg3: memref<128x128xf32, #tpu.memory_space<vmem>>, %arg4: memref<1x128xf32, #tpu.memory_space<vmem>>, %arg5: memref<64x128xf32, #tpu.memory_space<vmem>>) attributes {dimension_semantics = [#tpu.dimension_semantics<parallel>, #tpu.dimension_semantics<parallel>], iteration_bounds = array<i64: 1, 1>, scalar_prefetch = 0 : i64, scratch_operands = 0 : i64, tpu.core_type = #tpu.core_type<tc>, window_params = [{transform_indices = @transform_0, window_bounds = array<i64: 64, 128>}, {transform_indices = @transform_1, window_bounds = array<i64: 128, 128>}, {transform_indices = @transform_2, window_bounds = array<i64: 1, 128>}, {transform_indices = @transform_3, window_bounds = array<i64: 64, 128>}]} {
    %c0 = arith.constant 0 : index
    %c0_0 = arith.constant 0 : index
    %0 = vector.load %arg2[%c0, %c0_0] : memref<64x128xbf16, #tpu.memory_space<vmem>>, vector<64x128xbf16>
    %c0_1 = arith.constant 0 : index
    %c0_2 = arith.constant 0 : index
    %1 = vector.load %arg3[%c0_1, %c0_2] : memref<128x128xf32, #tpu.memory_space<vmem>>, vector<128x128xf32>
    %2 = arith.truncf %1 : vector<128x128xf32> to vector<128x128xbf16>
    %cst = arith.constant dense<0.000000e+00> : vector<64x128xf32>
    %3 = tpu.matmul %0, %2, %cst {dimension_numbers = #tpu.dot_dimension_numbers<[1], [0], [0], [1], [0, 0, 1, 1], [], []>} : vector<64x128xbf16>, vector<128x128xbf16>, vector<64x128xf32> -> vector<64x128xf32>
    %c0_3 = arith.constant 0 : index
    %c0_4 = arith.constant 0 : index
    %4 = vector.load %arg4[%c0_3, %c0_4] : memref<1x128xf32, #tpu.memory_space<vmem>>, vector<1x128xf32>
    %5 = vector.broadcast %4 : vector<1x128xf32> to vector<64x128xf32>
    %6 = arith.addf %3, %5 : vector<64x128xf32>
    %c0_5 = arith.constant 0 : index
    %c0_6 = arith.constant 0 : index
    %7 = vector.load %arg5[%c0_5, %c0_6] : memref<64x128xf32, #tpu.memory_space<vmem>>, vector<64x128xf32>
    tpu.vector_store %arg5[%c0_5, %c0_6], %6 {strides = array<i32>} : memref<64x128xf32, #tpu.memory_space<vmem>>, vector<64x128xf32>,
    return
  }
  func.func @transform_0(%arg0: i32, %arg1: i32) -> (i32, i32) {
    %c0_i32 = arith.constant 0 : i32
    %c0_i32_0 = arith.constant 0 : i32
    return %arg0, %c0_i32 : i32, i32
  }
  func.func @transform_1(%arg0: i32, %arg1: i32) -> (i32, i32) {
    %c0_i32 = arith.constant 0 : i32
    %c0_i32_0 = arith.constant 0 : i32
    return %c0_i32, %arg1 : i32, i32
  }
  func.func @transform_2(%arg0: i32, %arg1: i32) -> (i32, i32) {
    %c0_i32 = arith.constant 0 : i32
    %c0_i32_0 = arith.constant 0 : i32
    return %c0_i32, %arg1 : i32, i32
  }
  func.func @transform_3(%arg0: i32, %arg1: i32) -> (i32, i32) {
    %c0_i32 = arith.constant 0 : i32
    return %arg0, %arg1 : i32, i32
  }
}

</mosaic_0001>

<llo_original>
// kernel: lstm_langmodel_forward.3
$region0: #{lstm_langmodel_forward.3}
  #allocation0 [shape = 'u32[]', space=smem, size = 0x4, offset = 0x4, fixed_abs, tag = 'smem constant byte address 0x4 - core index']
  #allocation1 [shape = 'u32[144,128]{1,0:T(1,128)}', space=vmem, size = 0x12000, scoped, tag = 'internal scratch']
  %s0 = inlined_call_operand.vmem [shape: f32[64,32], index: 0, kind: input, shape index: {}]
  %s1 = inlined_call_operand.vmem [shape: f32[32,512], index: 1, kind: input, shape index: {}]
  %s2 = inlined_call_operand.vmem [shape: f32[1,512], index: 2, kind: input, shape index: {}]
  %s3 = inlined_call_operand.vmem [shape: bf16[64,512], index: 3, kind: output, shape index: {}]
  %s4 = sld [smem:[#allocation0]]
  $region22: #{lstm_langmodel_forward.3} parent=0
    _
  %s6 = ssub.s32 1, %s4
  %s7 = scalar_select 0, %s6, %s4
  // Predicated region
  $region2: #{lstm_langmodel_forward.3} parent=0 // pred_check
    _
  $region3: #{lstm_langmodel_forward.3} parent=0 // pred_check_branch
    %9 = sbr.rel (0) target = $region5
  $region4: #{lstm_langmodel_forward.3} parent=0 // pred_region
    _
  $region5: #{lstm_langmodel_forward.3} parent=0 // pred_fallthru
    _
  // Predicated region
  $region6: #{lstm_langmodel_forward.3} parent=0 // pred_check
    _
  $region7: #{lstm_langmodel_forward.3} parent=0 // pred_check_branch
    %11 = sbr.rel (0) target = $region9
  $region8: #{lstm_langmodel_forward.3} parent=0 // pred_region
    _
  $region9: #{lstm_langmodel_forward.3} parent=0 // pred_fallthru
    _
  // Predicated region
  $region10: #{lstm_langmodel_forward.3} parent=0 // pred_check
    _
  $region11: #{lstm_langmodel_forward.3} parent=0 // pred_check_branch
    %13 = sbr.rel (0) target = $region13
  $region12: #{lstm_langmodel_forward.3} parent=0 // pred_region
    _
  $region13: #{lstm_langmodel_forward.3} parent=0 // pred_fallthru
    _
  %v15 = vld [vmem:[%s0] sm:$0xff]
  %v16 = vld [vmem:[%s0 + $0x8] sm:$0xff]
  %v17 = vld [vmem:[%s0 + $0x10] sm:$0xff]
  %v18 = vld [vmem:[%s0 + $0x18] sm:$0xff]
  %v19 = vld [vmem:[%s0 + $0x20] sm:$0xff]
  %v20 = vld [vmem:[%s0 + $0x28] sm:$0xff]
  %v21 = vld [vmem:[%s0 + $0x30] sm:$0xff]
  %v22 = vld [vmem:[%s0 + $0x38] sm:$0xff]
  %v23 = vpack.c.bf16 %v16, %v15
  %v24 = vpack.c.bf16 %v18, %v17
  %v25 = vpack.c.bf16 %v20, %v19
  %v26 = vpack.c.bf16 %v22, %v21
  %v27 = vld [vmem:[%s1] sm:$0xff]
  %v28 = vld [vmem:[%s1 + $0x8] sm:$0xff]
  %v29 = vld [vmem:[%s1 + $0x10] sm:$0xff]
  %v30 = vld [vmem:[%s1 + $0x18] sm:$0xff]
  %v31 = vld [vmem:[%s1 + $0x20] sm:$0xff]
  %v32 = vld [vmem:[%s1 + $0x28] sm:$0xff]
  %v33 = vld [vmem:[%s1 + $0x30] sm:$0xff]
  %v34 = vld [vmem:[%s1 + $0x38] sm:$0xff]
  %v35 = vld [vmem:[%s1 + $0x40] sm:$0xff]
  %v36 = vld [vmem:[%s1 + $0x48] sm:$0xff]
  %v37 = vld [vmem:[%s1 + $0x50] sm:$0xff]
  %v38 = vld [vmem:[%s1 + $0x58] sm:$0xff]
  %v39 = vld [vmem:[%s1 + $0x60] sm:$0xff]
  %v40 = vld [vmem:[%s1 + $0x68] sm:$0xff]
  %v41 = vld [vmem:[%s1 + $0x70] sm:$0xff]
  %v42 = vld [vmem:[%s1 + $0x78] sm:$0xff]
  %v43 = vpack.c.bf16 %v31, %v27
  %v44 = vpack.c.bf16 %v32, %v28
  %v45 = vpack.c.bf16 %v33, %v29
  %v46 = vpack.c.bf16 %v34, %v30
  %v47 = vpack.c.bf16 %v39, %v35
  %v48 = vpack.c.bf16 %v40, %v36
  %v49 = vpack.c.bf16 %v41, %v37
  %v50 = vpack.c.bf16 %v42, %v38
  %v51 = vld [vmem:[%s2] sm:$0xf]
  %v53 = vlaneseq
  %v54 = vshrl.u32 %v53, 7
  %v55 = vsub.s32 0, %v54
  %v56 = vrot.slane %v51, %v55
  %v57 = vlaneseq
  %v58 = vshrl.u32 %v57, 7
  %v59 = vsub.s32 1, %v58
  %v60 = vrot.slane %v51, %v59
  %v61 = vlaneseq
  %v62 = vshrl.u32 %v61, 7
  %v63 = vsub.s32 2, %v62
  %v64 = vrot.slane %v51, %v63
  %v65 = vlaneseq
  %v66 = vshrl.u32 %v65, 7
  %v67 = vsub.s32 3, %v66
  %v68 = vrot.slane %v51, %v67
  %vm73 = vcmask 261120
  %v75 = vsel %vm73, %v23, 0
  %v78 = vsel %vm73, %v24, 0
  %v81 = vsel %vm73, %v25, 0
  %v84 = vsel %vm73, %v26, 0
  %86 = vmatprep.subr.bf16.mxu0 %v44
  %87 = vmatpush1.bf16.msra.mxu0 %v43
  %88 = vmatprep.subr.bf16.mxu0 %v48
  %89 = vmatpush1.bf16.msra.mxu0 %v47
  %90 = vmatprep.subr.bf16.mxu0 0
  %91 = vmatpush1.bf16.msra.mxu0 0
  %92 = vmatprep.subr.bf16.mxu0 0
  %93 = vmatpush1.bf16.msra.mxu0 0
  %94 = vmatprep.subr.bf16.mxu0 0
  %95 = vmatpush1.bf16.msra.mxu0 0
  %96 = vmatprep.subr.bf16.mxu0 0
  %97 = vmatpush1.bf16.msra.mxu0 0
  %98 = vmatprep.subr.bf16.mxu0 0
  %99 = vmatpush1.bf16.msra.mxu0 0
  %100 = vmatprep.subr.bf16.mxu0 0
  %101 = vmatpush1.bf16.msra.mxu0 0
  %102 = vmatprep.subr.bf16.mxu0 0
  %103 = vmatpush1.bf16.msra.mxu0 0
  %104 = vmatprep.subr.bf16.mxu0 0
  %105 = vmatpush1.bf16.msra.mxu0 0
  %106 = vmatprep.subr.bf16.mxu0 0
  %107 = vmatpush1.bf16.msra.mxu0 0
  %108 = vmatprep.subr.bf16.mxu0 0
  %109 = vmatpush1.bf16.msra.mxu0 0
  %110 = vmatprep.subr.bf16.mxu0 0
  %111 = vmatpush1.bf16.msra.mxu0 0
  %112 = vmatprep.subr.bf16.mxu0 0
  %113 = vmatpush1.bf16.msra.mxu0 0
  %114 = vmatprep.subr.bf16.mxu0 0
  %115 = vmatpush1.bf16.msra.mxu0 0
  %116 = vmatprep.subr.bf16.mxu0 0
  %117 = vmatpush1.bf16.msra.mxu0 0
  %118 = vmatprep.mubr.bf16.mxu0 0
  %119 = vmatmul.mubr.bf16.gmra.mrb[0].mxu0 %v75
  %v120 = vpop.f32.mrb[0].mxu0
  %v121 = vadd.f32 %v56, %v120
  %v122 = vpop.f32.mrb[0].mxu0
  %v123 = vadd.f32 %v60, %v122
  %v124 = vpop.f32.mrb[0].mxu0
  %v125 = vadd.f32 %v56, %v124
  %v126 = vpop.f32.mrb[0].mxu0
  %v127 = vadd.f32 %v60, %v126
  %128 = vmatprep.mubr.bf16.mxu0 0
  %129 = vmatmul.mubr.bf16.gmra.mrb[0].mxu0 %v78
  %v130 = vpop.f32.mrb[0].mxu0
  %v131 = vadd.f32 %v56, %v130
  %v132 = vpop.f32.mrb[0].mxu0
  %v133 = vadd.f32 %v60, %v132
  %v134 = vpop.f32.mrb[0].mxu0
  %v135 = vadd.f32 %v56, %v134
  %v136 = vpop.f32.mrb[0].mxu0
  %v137 = vadd.f32 %v60, %v136
  %138 = vmatprep.mubr.bf16.mxu0 0
  %139 = vmatmul.mubr.bf16.gmra.mrb[0].mxu0 %v81
  %v140 = vpop.f32.mrb[0].mxu0
  %v141 = vadd.f32 %v56, %v140
  %v142 = vpop.f32.mrb[0].mxu0
  %v143 = vadd.f32 %v60, %v142
  %v144 = vpop.f32.mrb[0].mxu0
  %v145 = vadd.f32 %v56, %v144
  %v146 = vpop.f32.mrb[0].mxu0
  %v147 = vadd.f32 %v60, %v146
  %148 = vmatprep.mubr.bf16.mxu0 0
  %149 = vmatmul.mubr.bf16.gmra.mrb[0].mxu0 %v84
  %v150 = vpop.f32.mrb[0].mxu0
  %v151 = vadd.f32 %v56, %v150
  %v152 = vpop.f32.mrb[0].mxu0
  %v153 = vadd.f32 %v60, %v152
  %v154 = vpop.f32.mrb[0].mxu0
  %v155 = vadd.f32 %v56, %v154
  %v156 = vpop.f32.mrb[0].mxu0
  %v157 = vadd.f32 %v60, %v156
  %158 = vdwg.mxu0
  %159 = vmatprep.subr.bf16.mxu0 %v46
  %160 = vmatpush1.bf16.msra.mxu0 %v45
  %161 = vmatprep.subr.bf16.mxu0 %v50
  %162 = vmatpush1.bf16.msra.mxu0 %v49
  %163 = vmatprep.subr.bf16.mxu0 0
  %164 = vmatpush1.bf16.msra.mxu0 0
  %165 = vmatprep.subr.bf16.mxu0 0
  %166 = vmatpush1.bf16.msra.mxu0 0
  %167 = vmatprep.subr.bf16.mxu0 0
  %168 = vmatpush1.bf16.msra.mxu0 0
  %169 = vmatprep.subr.bf16.mxu0 0
  %170 = vmatpush1.bf16.msra.mxu0 0
  %171 = vmatprep.subr.bf16.mxu0 0
  %172 = vmatpush1.bf16.msra.mxu0 0
  %173 = vmatprep.subr.bf16.mxu0 0
  %174 = vmatpush1.bf16.msra.mxu0 0
  %175 = vmatprep.subr.bf16.mxu0 0
  %176 = vmatpush1.bf16.msra.mxu0 0
  %177 = vmatprep.subr.bf16.mxu0 0
  %178 = vmatpush1.bf16.msra.mxu0 0
  %179 = vmatprep.subr.bf16.mxu0 0
  %180 = vmatpush1.bf16.msra.mxu0 0
  %181 = vmatprep.subr.bf16.mxu0 0
  %182 = vmatpush1.bf16.msra.mxu0 0
  %183 = vmatprep.subr.bf16.mxu0 0
  %184 = vmatpush1.bf16.msra.mxu0 0
  %185 = vmatprep.subr.bf16.mxu0 0
  %186 = vmatpush1.bf16.msra.mxu0 0
  %187 = vmatprep.subr.bf16.mxu0 0
  %188 = vmatpush1.bf16.msra.mxu0 0
  %189 = vmatprep.subr.bf16.mxu0 0
  %190 = vmatpush1.bf16.msra.mxu0 0
  %191 = vmatprep.mubr.bf16.mxu0 0
  %192 = vmatmul.mubr.bf16.gmra.mrb[0].mxu0 %v75
  %v193 = vpop.f32.mrb[0].mxu0
  %v194 = vadd.f32 %v64, %v193
  %v195 = vpop.f32.mrb[0].mxu0
  %v196 = vadd.f32 %v68, %v195
  %v197 = vpop.f32.mrb[0].mxu0
  %v198 = vadd.f32 %v64, %v197
  %v199 = vpop.f32.mrb[0].mxu0
  %v200 = vadd.f32 %v68, %v199
  %201 = vmatprep.mubr.bf16.mxu0 0
  %202 = vmatmul.mubr.bf16.gmra.mrb[0].mxu0 %v78
  %v203 = vpop.f32.mrb[0].mxu0
  %v204 = vadd.f32 %v64, %v203
  %v205 = vpop.f32.mrb[0].mxu0
  %v206 = vadd.f32 %v68, %v205
  %v207 = vpop.f32.mrb[0].mxu0
  %v208 = vadd.f32 %v64, %v207
  %v209 = vpop.f32.mrb[0].mxu0
  %v210 = vadd.f32 %v68, %v209
  %211 = vmatprep.mubr.bf16.mxu0 0
  %212 = vmatmul.mubr.bf16.gmra.mrb[0].mxu0 %v81
  %v213 = vpop.f32.mrb[0].mxu0
  %v214 = vadd.f32 %v64, %v213
  %v215 = vpop.f32.mrb[0].mxu0
  %v216 = vadd.f32 %v68, %v215
  %v217 = vpop.f32.mrb[0].mxu0
  %v218 = vadd.f32 %v64, %v217
  %v219 = vpop.f32.mrb[0].mxu0
  %v220 = vadd.f32 %v68, %v219
  %221 = vmatprep.mubr.bf16.mxu0 0
  %222 = vmatmul.mubr.bf16.gmra.mrb[0].mxu0 %v84
  %v223 = vpop.f32.mrb[0].mxu0
  %v224 = vadd.f32 %v64, %v223
  %v225 = vpop.f32.mrb[0].mxu0
  %v226 = vadd.f32 %v68, %v225
  %v227 = vpop.f32.mrb[0].mxu0
  %v228 = vadd.f32 %v64, %v227
  %v229 = vpop.f32.mrb[0].mxu0
  %v230 = vadd.f32 %v68, %v229
  %231 = vdwg.mxu0
  %v232 = vpack.c.bf16 %v125, %v121
  %v233 = vpack.c.bf16 %v127, %v123
  %v234 = vpack.c.bf16 %v198, %v194
  %v235 = vpack.c.bf16 %v200, %v196
  %v236 = vpack.c.bf16 %v135, %v131
  %v237 = vpack.c.bf16 %v137, %v133
  %v238 = vpack.c.bf16 %v208, %v204
  %v239 = vpack.c.bf16 %v210, %v206
  %v240 = vpack.c.bf16 %v145, %v141
  %v241 = vpack.c.bf16 %v147, %v143
  %v242 = vpack.c.bf16 %v218, %v214
  %v243 = vpack.c.bf16 %v220, %v216
  %v244 = vpack.c.bf16 %v155, %v151
  %v245 = vpack.c.bf16 %v157, %v153
  %v246 = vpack.c.bf16 %v228, %v224
  %v247 = vpack.c.bf16 %v230, %v226
  %v264 = vunpack.c.l.b16 %v232
  %v265 = vunpack.c.l.b16 %v233
  %v266 = vunpack.c.l.b16 %v234
  %v267 = vunpack.c.l.b16 %v235
  %v268 = vunpack.c.h.b16 %v232
  %v269 = vunpack.c.h.b16 %v233
  %v270 = vunpack.c.h.b16 %v234
  %v271 = vunpack.c.h.b16 %v235
  %v272 = vunpack.c.l.b16 %v236
  %v273 = vunpack.c.l.b16 %v237
  %v274 = vunpack.c.l.b16 %v238
  %v275 = vunpack.c.l.b16 %v239
  %v276 = vunpack.c.h.b16 %v236
  %v277 = vunpack.c.h.b16 %v237
  %v278 = vunpack.c.h.b16 %v238
  %v279 = vunpack.c.h.b16 %v239
  %v280 = vunpack.c.l.b16 %v240
  %v281 = vunpack.c.l.b16 %v241
  %v282 = vunpack.c.l.b16 %v242
  %v283 = vunpack.c.l.b16 %v243
  %v284 = vunpack.c.h.b16 %v240
  %v285 = vunpack.c.h.b16 %v241
  %v286 = vunpack.c.h.b16 %v242
  %v287 = vunpack.c.h.b16 %v243
  %v288 = vunpack.c.l.b16 %v244
  %v289 = vunpack.c.l.b16 %v245
  %v290 = vunpack.c.l.b16 %v246
  %v291 = vunpack.c.l.b16 %v247
  %v292 = vunpack.c.h.b16 %v244
  %v293 = vunpack.c.h.b16 %v245
  %v294 = vunpack.c.h.b16 %v246
  %v295 = vunpack.c.h.b16 %v247
  %v296 = vpack.c.b16 %v265, %v264
  %v297 = vpack.c.b16 %v267, %v266
  %v298 = vpack.c.b16 %v269, %v268
  %v299 = vpack.c.b16 %v271, %v270
  %v300 = vpack.c.b16 %v273, %v272
  %v301 = vpack.c.b16 %v275, %v274
  %v302 = vpack.c.b16 %v277, %v276
  %v303 = vpack.c.b16 %v279, %v278
  %v304 = vpack.c.b16 %v281, %v280
  %v305 = vpack.c.b16 %v283, %v282
  %v306 = vpack.c.b16 %v285, %v284
  %v307 = vpack.c.b16 %v287, %v286
  %v308 = vpack.c.b16 %v289, %v288
  %v309 = vpack.c.b16 %v291, %v290
  %v310 = vpack.c.b16 %v293, %v292
  %v311 = vpack.c.b16 %v295, %v294
  %328 = vst [vmem:[%s3] sm:$0xff] %v296
  %329 = vst [vmem:[%s3 + $0x8] sm:$0xff] %v297
  %330 = vst [vmem:[%s3 + $0x10] sm:$0xff] %v298
  %331 = vst [vmem:[%s3 + $0x18] sm:$0xff] %v299
  %332 = vst [vmem:[%s3 + $0x20] sm:$0xff] %v300
  %333 = vst [vmem:[%s3 + $0x28] sm:$0xff] %v301
  %334 = vst [vmem:[%s3 + $0x30] sm:$0xff] %v302
  %335 = vst [vmem:[%s3 + $0x38] sm:$0xff] %v303
  %336 = vst [vmem:[%s3 + $0x40] sm:$0xff] %v304
  %337 = vst [vmem:[%s3 + $0x48] sm:$0xff] %v305
  %338 = vst [vmem:[%s3 + $0x50] sm:$0xff] %v306
  %339 = vst [vmem:[%s3 + $0x58] sm:$0xff] %v307
  %340 = vst [vmem:[%s3 + $0x60] sm:$0xff] %v308
  %341 = vst [vmem:[%s3 + $0x68] sm:$0xff] %v309
  %342 = vst [vmem:[%s3 + $0x70] sm:$0xff] %v310
  %343 = vst [vmem:[%s3 + $0x78] sm:$0xff] %v311
  // Predicated region
  $region14: #{lstm_langmodel_forward.3} parent=0 // pred_check
    _
  $region15: #{lstm_langmodel_forward.3} parent=0 // pred_check_branch
    %345 = sbr.rel (0) target = $region17
  $region16: #{lstm_langmodel_forward.3} parent=0 // pred_region
    _
  $region17: #{lstm_langmodel_forward.3} parent=0 // pred_fallthru
    _
  // Predicated region
  $region18: #{lstm_langmodel_forward.3} parent=0 // pred_check
    _
  $region19: #{lstm_langmodel_forward.3} parent=0 // pred_check_branch
    %347 = sbr.rel (0) target = $region21
  $region20: #{lstm_langmodel_forward.3} parent=0 // pred_region
    _
  $region21: #{lstm_langmodel_forward.3} parent=0 // pred_fallthru
    _

// kernel: lstm_langmodel_forward.5
$region0: #{lstm_langmodel_forward.5}
  #allocation0 [shape = 'u32[]', space=smem, size = 0x4, offset = 0x4, fixed_abs, tag = 'smem constant byte address 0x4 - core index']
  #allocation1 [shape = 'u32[144,128]{1,0:T(1,128)}', space=vmem, size = 0x12000, scoped, tag = 'internal scratch']
  %s0 = inlined_call_operand.vmem [shape: bf16[64,128], index: 0, kind: input, shape index: {}]
  %s1 = inlined_call_operand.vmem [shape: f32[128,128], index: 1, kind: input, shape index: {}]
  %s2 = inlined_call_operand.vmem [shape: f32[1,128], index: 2, kind: input, shape index: {}]
  %s3 = inlined_call_operand.hbm [shape: f32[64,128], index: 3, kind: output, shape index: {}]
  %s4 = sld [smem:[#allocation0]]
  $region22: #{lstm_langmodel_forward.5} parent=0
    _
  %s6 = ssub.s32 1, %s4
  %s7 = scalar_select 0, %s6, %s4
  $region1: #{lstm_langmodel_forward.5} parent=0
    #allocation2 [shape = 'u8[32768]{0}', space=vmem, size = 0x8000, scoped, tag = 'output window, operand 0, single buffered']
    #allocation3 [shape = 's32[1]{0}', space=sflag, size = 0x4, scoped, tag = 'scoped memory for lstm_langmodel_forward.5']
    %8 = vsyncpa [#allocation3], 0
    // Predicated region
    $region2: #{lstm_langmodel_forward.5} parent=1 // pred_check
      _
    $region3: #{lstm_langmodel_forward.5} parent=1 // pred_check_branch
      %10 = sbr.rel (0) target = $region5
    $region4: #{lstm_langmodel_forward.5} parent=1 // pred_region
      _
    $region5: #{lstm_langmodel_forward.5} parent=1 // pred_fallthru
      _
    // Predicated region
    $region6: #{lstm_langmodel_forward.5} parent=1 // pred_check
      _
    $region7: #{lstm_langmodel_forward.5} parent=1 // pred_check_branch
      %12 = sbr.rel (0) target = $region9
    $region8: #{lstm_langmodel_forward.5} parent=1 // pred_region
      _
    $region9: #{lstm_langmodel_forward.5} parent=1 // pred_fallthru
      _
    // Predicated region
    $region10: #{lstm_langmodel_forward.5} parent=1 // pred_check
      _
    $region11: #{lstm_langmodel_forward.5} parent=1 // pred_check_branch
      %14 = sbr.rel (0) target = $region13
    $region12: #{lstm_langmodel_forward.5} parent=1 // pred_region
      _
    $region13: #{lstm_langmodel_forward.5} parent=1 // pred_fallthru
      _
    %v16 = vld [vmem:[%s0] sm:$0xf]
    %v17 = vld [vmem:[%s0 + $0x4] sm:$0xf]
    %v18 = vld [vmem:[%s0 + $0x8] sm:$0xf]
    %v19 = vld [vmem:[%s0 + $0xc] sm:$0xf]
    %v20 = vld [vmem:[%s0 + $0x10] sm:$0xf]
    %v21 = vld [vmem:[%s0 + $0x14] sm:$0xf]
    %v22 = vld [vmem:[%s0 + $0x18] sm:$0xf]
    %v23 = vld [vmem:[%s0 + $0x1c] sm:$0xf]
    %v24 = vld [vmem:[%s1] sm:$0xff]
    %v25 = vld [vmem:[%s1 + $0x8] sm:$0xff]
    %v26 = vld [vmem:[%s1 + $0x10] sm:$0xff]
    %v27 = vld [vmem:[%s1 + $0x18] sm:$0xff]
    %v28 = vld [vmem:[%s1 + $0x20] sm:$0xff]
    %v29 = vld [vmem:[%s1 + $0x28] sm:$0xff]
    %v30 = vld [vmem:[%s1 + $0x30] sm:$0xff]
    %v31 = vld [vmem:[%s1 + $0x38] sm:$0xff]
    %v32 = vld [vmem:[%s1 + $0x40] sm:$0xff]
    %v33 = vld [vmem:[%s1 + $0x48] sm:$0xff]
    %v34 = vld [vmem:[%s1 + $0x50] sm:$0xff]
    %v35 = vld [vmem:[%s1 + $0x58] sm:$0xff]
    %v36 = vld [vmem:[%s1 + $0x60] sm:$0xff]
    %v37 = vld [vmem:[%s1 + $0x68] sm:$0xff]
    %v38 = vld [vmem:[%s1 + $0x70] sm:$0xff]
    %v39 = vld [vmem:[%s1 + $0x78] sm:$0xff]
    %v40 = vpack.c.bf16 %v25, %v24
    %v41 = vpack.c.bf16 %v27, %v26
    %v42 = vpack.c.bf16 %v29, %v28
    %v43 = vpack.c.bf16 %v31, %v30
    %v44 = vpack.c.bf16 %v33, %v32
    %v45 = vpack.c.bf16 %v35, %v34
    %v46 = vpack.c.bf16 %v37, %v36
    %v47 = vpack.c.bf16 %v39, %v38
    %v48 = vld [vmem:[%s2] sm:$0x1]
    %v50 = vlaneseq
    %v51 = vshrl.u32 %v50, 7
    %v52 = vsub.s32 0, %v51
    %v53 = vrot.slane %v48, %v52
    %v63 = vunpack.c.l.b16 %v16
    %v64 = vunpack.c.l.b16 %v17
    %v65 = vunpack.c.l.b16 %v18
    %v66 = vunpack.c.l.b16 %v19
    %v67 = vunpack.c.l.b16 %v20
    %v68 = vunpack.c.l.b16 %v21
    %v69 = vunpack.c.l.b16 %v22
    %v70 = vunpack.c.l.b16 %v23
    %v71 = vpack.c.b16 %v64, %v63
    %v72 = vpack.c.b16 %v66, %v65
    %v73 = vpack.c.b16 %v68, %v67
    %v74 = vpack.c.b16 %v70, %v69
    %79 = vmatprep.subr.bf16.mxu0 0
    %80 = vmatpush1.bf16.msra.mxu0 %v40
    %81 = vmatprep.subr.bf16.mxu0 0
    %82 = vmatpush1.bf16.msra.mxu0 %v41
    %83 = vmatprep.subr.bf16.mxu0 0
    %84 = vmatpush1.bf16.msra.mxu0 %v42
    %85 = vmatprep.subr.bf16.mxu0 0
    %86 = vmatpush1.bf16.msra.mxu0 %v43
    %87 = vmatprep.subr.bf16.mxu0 0
    %88 = vmatpush1.bf16.msra.mxu0 %v44
    %89 = vmatprep.subr.bf16.mxu0 0
    %90 = vmatpush1.bf16.msra.mxu0 %v45
    %91 = vmatprep.subr.bf16.mxu0 0
    %92 = vmatpush1.bf16.msra.mxu0 %v46
    %93 = vmatprep.subr.bf16.mxu0 0
    %94 = vmatpush1.bf16.msra.mxu0 %v47
    %95 = vmatprep.subr.bf16.mxu0 0
    %96 = vmatpush1.bf16.msra.mxu0 0
    %97 = vmatprep.subr.bf16.mxu0 0
    %98 = vmatpush1.bf16.msra.mxu0 0
    %99 = vmatprep.subr.bf16.mxu0 0
    %100 = vmatpush1.bf16.msra.mxu0 0
    %101 = vmatprep.subr.bf16.mxu0 0
    %102 = vmatpush1.bf16.msra.mxu0 0
    %103 = vmatprep.subr.bf16.mxu0 0
    %104 = vmatpush1.bf16.msra.mxu0 0
    %105 = vmatprep.subr.bf16.mxu0 0
    %106 = vmatpush1.bf16.msra.mxu0 0
    %107 = vmatprep.subr.bf16.mxu0 0
    %108 = vmatpush1.bf16.msra.mxu0 0
    %109 = vmatprep.subr.bf16.mxu0 0
    %110 = vmatpush1.bf16.msra.mxu0 0
    %111 = vmatprep.mubr.bf16.mxu0 0
    %112 = vmatmul.mubr.bf16.gmra.mrb[0].mxu0 %v71
    %v113 = vpop.f32.mrb[0].mxu0
    %v114 = vadd.f32 %v53, %v113
    %v115 = vpop.f32.mrb[0].mxu0
    %v116 = vpop.f32.mrb[0].mxu0
    %v117 = vadd.f32 %v53, %v116
    %v118 = vpop.f32.mrb[0].mxu0
    %119 = vmatprep.mubr.bf16.mxu0 0
    %120 = vmatmul.mubr.bf16.gmra.mrb[0].mxu0 %v72
    %v121 = vpop.f32.mrb[0].mxu0
    %v122 = vadd.f32 %v53, %v121
    %v123 = vpop.f32.mrb[0].mxu0
    %v124 = vpop.f32.mrb[0].mxu0
    %v125 = vadd.f32 %v53, %v124
    %v126 = vpop.f32.mrb[0].mxu0
    %127 = vmatprep.mubr.bf16.mxu0 0
    %128 = vmatmul.mubr.bf16.gmra.mrb[0].mxu0 %v73
    %v129 = vpop.f32.mrb[0].mxu0
    %v130 = vadd.f32 %v53, %v129
    %v131 = vpop.f32.mrb[0].mxu0
    %v132 = vpop.f32.mrb[0].mxu0
    %v133 = vadd.f32 %v53, %v132
    %v134 = vpop.f32.mrb[0].mxu0
    %135 = vmatprep.mubr.bf16.mxu0 0
    %136 = vmatmul.mubr.bf16.gmra.mrb[0].mxu0 %v74
    %v137 = vpop.f32.mrb[0].mxu0
    %v138 = vadd.f32 %v53, %v137
    %v139 = vpop.f32.mrb[0].mxu0
    %v140 = vpop.f32.mrb[0].mxu0
    %v141 = vadd.f32 %v53, %v140
    %v142 = vpop.f32.mrb[0].mxu0
    %143 = vdwg.mxu0
    %144 = vst [vmem:[#allocation2] sm:$0xff] %v114
    %145 = vst [vmem:[#allocation2 + $0x8] sm:$0xff] %v117
    %146 = vst [vmem:[#allocation2 + $0x10] sm:$0xff] %v122
    %147 = vst [vmem:[#allocation2 + $0x18] sm:$0xff] %v125
    %148 = vst [vmem:[#allocation2 + $0x20] sm:$0xff] %v130
    %149 = vst [vmem:[#allocation2 + $0x28] sm:$0xff] %v133
    %150 = vst [vmem:[#allocation2 + $0x30] sm:$0xff] %v138
    %151 = vst [vmem:[#allocation2 + $0x38] sm:$0xff] %v141
    // Predicated region
    $region14: #{lstm_langmodel_forward.5} parent=1 // pred_check
      _
    $region15: #{lstm_langmodel_forward.5} parent=1 // pred_check_branch
      %153 = sbr.rel (0) target = $region17
    $region16: #{lstm_langmodel_forward.5} parent=1 // pred_region
      %s155 = ssub.s32 1024, 1024
      %156 = vsyncadd [#allocation3], %s155
      %s157 = sshll.u32 [#allocation2], 4
      %s158 = int_to_ptr.vmem [resolvable:$true] %s157
      %163 = dma.vmem_to_hbm [thread:$0]  %s158, 1024, %s3, [#allocation3], 128, 128, 8
    $region17: #{lstm_langmodel_forward.5} parent=1 // pred_fallthru
      _
    // Predicated region
    $region18: #{lstm_langmodel_forward.5} parent=1 // pred_check
      _
    $region19: #{lstm_langmodel_forward.5} parent=1 // pred_check_branch
      %165 = sbr.rel (0) target = $region21
    $region20: #{lstm_langmodel_forward.5} parent=1 // pred_region
      %166 = dma.done [#allocation3], 1024
    $region21: #{lstm_langmodel_forward.5} parent=1 // pred_fallthru
      _
    %167 = vsyncpa [#allocation3], 1

// kernel: lstm_langmodel_forward.4
$region0: #{lstm_langmodel_forward.4}
  #allocation0 [shape = 'u32[]', space=smem, size = 0x4, offset = 0x4, fixed_abs, tag = 'smem constant byte address 0x4 - core index']
  #allocation1 [shape = 'u32[144,128]{1,0:T(1,128)}', space=vmem, size = 0x12000, scoped, tag = 'internal scratch']
  %s0 = inlined_call_operand.vmem [shape: bf16[8,8,512], index: 0, kind: input, shape index: {}]
  %s1 = inlined_call_operand.vmem [shape: bf16[128,512], index: 1, kind: input, shape index: {}]
  %s2 = inlined_call_operand.vmem [shape: bf16[8,8,128], index: 2, kind: output, shape index: {0}]
  %s3 = inlined_call_operand.vmem [shape: f32[8,128], index: 3, kind: output, shape index: {1}]
  %s4 = inlined_call_operand.vmem [shape: f32[8,128], index: 4, kind: output, shape index: {2}]
  %5 = xla_tuple %s2, %s3, %s4
  %s6 = sld [smem:[#allocation0]]
  $region38: #{lstm_langmodel_forward.4} parent=0
    _
  %s8 = ssub.s32 1, %s6
  %s9 = scalar_select 0, %s8, %s6
  // Predicated region
  $region2: #{lstm_langmodel_forward.4} parent=0 // pred_check
    _
  $region3: #{lstm_langmodel_forward.4} parent=0 // pred_check_branch
    %11 = sbr.rel (0) target = $region5
  $region4: #{lstm_langmodel_forward.4} parent=0 // pred_region
    _
  $region5: #{lstm_langmodel_forward.4} parent=0 // pred_fallthru
    _
  // Predicated region
  $region6: #{lstm_langmodel_forward.4} parent=0 // pred_check
    _
  $region7: #{lstm_langmodel_forward.4} parent=0 // pred_check_branch
    %13 = sbr.rel (0) target = $region9
  $region8: #{lstm_langmodel_forward.4} parent=0 // pred_region
    _
  $region9: #{lstm_langmodel_forward.4} parent=0 // pred_fallthru
    _
  %p15 = scmp.eq.s32.totalorder 0, 0
  // Predicated region
  $region10: #{lstm_langmodel_forward.4} parent=0 // pred_check
    %p16 = pneg %p15
  $region11: #{lstm_langmodel_forward.4} parent=0 // pred_check_branch
    %18 = sbr.rel (%p16) target = $region13
  $region12: #{lstm_langmodel_forward.4} parent=0 // pred_region
    %19 = vst [vmem:[%s3] sm:$0xff] 0.0
    %20 = vst [vmem:[%s4] sm:$0xff] 0.0
  $region13: #{lstm_langmodel_forward.4} parent=0 // pred_fallthru
    _
  %v21 = vld [vmem:[%s3] sm:$0xff]
  %v22 = vld [vmem:[%s4] sm:$0xff]
  %v23 = vld [vmem:[%s1] sm:$0xff]
  %v24 = vld [vmem:[%s1 + $0x8] sm:$0xff]
  %v25 = vld [vmem:[%s1 + $0x10] sm:$0xff]
  %v26 = vld [vmem:[%s1 + $0x18] sm:$0xff]
  %v27 = vld [vmem:[%s1 + $0x20] sm:$0xff]
  %v28 = vld [vmem:[%s1 + $0x28] sm:$0xff]
  %v29 = vld [vmem:[%s1 + $0x30] sm:$0xff]
  %v30 = vld [vmem:[%s1 + $0x38] sm:$0xff]
  %v31 = vld [vmem:[%s1 + $0x40] sm:$0xff]
  %v32 = vld [vmem:[%s1 + $0x48] sm:$0xff]
  %v33 = vld [vmem:[%s1 + $0x50] sm:$0xff]
  %v34 = vld [vmem:[%s1 + $0x58] sm:$0xff]
  %v35 = vld [vmem:[%s1 + $0x60] sm:$0xff]
  %v36 = vld [vmem:[%s1 + $0x68] sm:$0xff]
  %v37 = vld [vmem:[%s1 + $0x70] sm:$0xff]
  %v38 = vld [vmem:[%s1 + $0x78] sm:$0xff]
  %v39 = vld [vmem:[%s1 + $0x80] sm:$0xff]
  %v40 = vld [vmem:[%s1 + $0x88] sm:$0xff]
  %v41 = vld [vmem:[%s1 + $0x90] sm:$0xff]
  %v42 = vld [vmem:[%s1 + $0x98] sm:$0xff]
  %v43 = vld [vmem:[%s1 + $0xa0] sm:$0xff]
  %v44 = vld [vmem:[%s1 + $0xa8] sm:$0xff]
  %v45 = vld [vmem:[%s1 + $0xb0] sm:$0xff]
  %v46 = vld [vmem:[%s1 + $0xb8] sm:$0xff]
  %v47 = vld [vmem:[%s1 + $0xc0] sm:$0xff]
  %v48 = vld [vmem:[%s1 + $0xc8] sm:$0xff]
  %v49 = vld [vmem:[%s1 + $0xd0] sm:$0xff]
  %v50 = vld [vmem:[%s1 + $0xd8] sm:$0xff]
  %v51 = vld [vmem:[%s1 + $0xe0] sm:$0xff]
  %v52 = vld [vmem:[%s1 + $0xe8] sm:$0xff]
  %v53 = vld [vmem:[%s1 + $0xf0] sm:$0xff]
  %v54 = vld [vmem:[%s1 + $0xf8] sm:$0xff]
  %v55 = vld [vmem:[%s0] sm:$0xff]
  %v56 = vld [vmem:[%s0 + $0x8] sm:$0xff]
  %v57 = vld [vmem:[%s0 + $0x10] sm:$0xff]
  %v58 = vld [vmem:[%s0 + $0x18] sm:$0xff]
  %v59 = vld [vmem:[%s0 + $0x20] sm:$0xff]
  %v60 = vld [vmem:[%s0 + $0x28] sm:$0xff]
  %v61 = vld [vmem:[%s0 + $0x30] sm:$0xff]
  %v62 = vld [vmem:[%s0 + $0x38] sm:$0xff]
  %v63 = vld [vmem:[%s0 + $0x40] sm:$0xff]
  %v64 = vld [vmem:[%s0 + $0x48] sm:$0xff]
  %v65 = vld [vmem:[%s0 + $0x50] sm:$0xff]
  %v66 = vld [vmem:[%s0 + $0x58] sm:$0xff]
  %v67 = vld [vmem:[%s0 + $0x60] sm:$0xff]
  %v68 = vld [vmem:[%s0 + $0x68] sm:$0xff]
  %v69 = vld [vmem:[%s0 + $0x70] sm:$0xff]
  %v70 = vld [vmem:[%s0 + $0x78] sm:$0xff]
  %v71 = vunpack.c.l.bf16 %v55
  %v72 = vunpack.c.h.bf16 %v55
  %v73 = vunpack.c.l.bf16 %v56
  %v74 = vunpack.c.h.bf16 %v56
  %v75 = vunpack.c.l.bf16 %v57
  %v76 = vunpack.c.h.bf16 %v57
  %v77 = vunpack.c.l.bf16 %v58
  %v78 = vunpack.c.h.bf16 %v58
  %v79 = vunpack.c.l.bf16 %v59
  %v80 = vunpack.c.h.bf16 %v59
  %v81 = vunpack.c.l.bf16 %v60
  %v82 = vunpack.c.h.bf16 %v60
  %v83 = vunpack.c.l.bf16 %v61
  %v84 = vunpack.c.h.bf16 %v61
  %v85 = vunpack.c.l.bf16 %v62
  %v86 = vunpack.c.h.bf16 %v62
  %v87 = vunpack.c.l.bf16 %v63
  %v88 = vunpack.c.h.bf16 %v63
  %v89 = vunpack.c.l.bf16 %v64
  %v90 = vunpack.c.h.bf16 %v64
  %v91 = vunpack.c.l.bf16 %v65
  %v92 = vunpack.c.h.bf16 %v65
  %v93 = vunpack.c.l.bf16 %v66
  %v94 = vunpack.c.h.bf16 %v66
  %v95 = vunpack.c.l.bf16 %v67
  %v96 = vunpack.c.h.bf16 %v67
  %v97 = vunpack.c.l.bf16 %v68
  %v98 = vunpack.c.h.bf16 %v68
  %v99 = vunpack.c.l.bf16 %v69
  %v100 = vunpack.c.h.bf16 %v69
  %v101 = vunpack.c.l.bf16 %v70
  %v102 = vunpack.c.h.bf16 %v70
  %v103 = vpack.c.bf16 %v21, %v21
  %v136 = vunpack.c.l.b16 %v23
  %v137 = vunpack.c.h.b16 %v23
  %v138 = vunpack.c.l.b16 %v24
  %v139 = vunpack.c.h.b16 %v24
  %v140 = vunpack.c.l.b16 %v25
  %v141 = vunpack.c.h.b16 %v25
  %v142 = vunpack.c.l.b16 %v26
  %v143 = vunpack.c.h.b16 %v26
  %v144 = vunpack.c.l.b16 %v27
  %v145 = vunpack.c.h.b16 %v27
  %v146 = vunpack.c.l.b16 %v28
  %v147 = vunpack.c.h.b16 %v28
  %v148 = vunpack.c.l.b16 %v29
  %v149 = vunpack.c.h.b16 %v29
  %v150 = vunpack.c.l.b16 %v30
  %v151 = vunpack.c.h.b16 %v30
  %v152 = vunpack.c.l.b16 %v31
  %v153 = vunpack.c.h.b16 %v31
  %v154 = vunpack.c.l.b16 %v32
  %v155 = vunpack.c.h.b16 %v32
  %v156 = vunpack.c.l.b16 %v33
  %v157 = vunpack.c.h.b16 %v33
  %v158 = vunpack.c.l.b16 %v34
  %v159 = vunpack.c.h.b16 %v34
  %v160 = vunpack.c.l.b16 %v35
  %v161 = vunpack.c.h.b16 %v35
  %v162 = vunpack.c.l.b16 %v36
  %v163 = vunpack.c.h.b16 %v36
  %v164 = vunpack.c.l.b16 %v37
  %v165 = vunpack.c.h.b16 %v37
  %v166 = vunpack.c.l.b16 %v38
  %v167 = vunpack.c.h.b16 %v38
  %v168 = vunpack.c.l.b16 %v39
  %v169 = vunpack.c.h.b16 %v39
  %v170 = vunpack.c.l.b16 %v40
  %v171 = vunpack.c.h.b16 %v40
  %v172 = vunpack.c.l.b16 %v41
  %v173 = vunpack.c.h.b16 %v41
  %v174 = vunpack.c.l.b16 %v42
  %v175 = vunpack.c.h.b16 %v42
  %v176 = vunpack.c.l.b16 %v43
  %v177 = vunpack.c.h.b16 %v43
  %v178 = vunpack.c.l.b16 %v44
  %v179 = vunpack.c.h.b16 %v44
  %v180 = vunpack.c.l.b16 %v45
  %v181 = vunpack.c.h.b16 %v45
  %v182 = vunpack.c.l.b16 %v46
  %v183 = vunpack.c.h.b16 %v46
  %v184 = vunpack.c.l.b16 %v47
  %v185 = vunpack.c.h.b16 %v47
  %v186 = vunpack.c.l.b16 %v48
  %v187 = vunpack.c.h.b16 %v48
  %v188 = vunpack.c.l.b16 %v49
  %v189 = vunpack.c.h.b16 %v49
  %v190 = vunpack.c.l.b16 %v50
  %v191 = vunpack.c.h.b16 %v50
  %v192 = vunpack.c.l.b16 %v51
  %v193 = vunpack.c.h.b16 %v51
  %v194 = vunpack.c.l.b16 %v52
  %v195 = vunpack.c.h.b16 %v52
  %v196 = vunpack.c.l.b16 %v53
  %v197 = vunpack.c.h.b16 %v53
  %v198 = vunpack.c.l.b16 %v54
  %v199 = vunpack.c.h.b16 %v54
  %v200 = vpack.c.b16 %v140, %v136
  %v201 = vpack.c.b16 %v141, %v137
  %v202 = vpack.c.b16 %v142, %v138
  %v203 = vpack.c.b16 %v143, %v139
  %v204 = vpack.c.b16 %v148, %v144
  %v205 = vpack.c.b16 %v149, %v145
  %v206 = vpack.c.b16 %v150, %v146
  %v207 = vpack.c.b16 %v151, %v147
  %v208 = vpack.c.b16 %v156, %v152
  %v209 = vpack.c.b16 %v157, %v153
  %v210 = vpack.c.b16 %v158, %v154
  %v211 = vpack.c.b16 %v159, %v155
  %v212 = vpack.c.b16 %v164, %v160
  %v213 = vpack.c.b16 %v165, %v161
  %v214 = vpack.c.b16 %v166, %v162
  %v215 = vpack.c.b16 %v167, %v163
  %v216 = vpack.c.b16 %v172, %v168
  %v217 = vpack.c.b16 %v173, %v169
  %v218 = vpack.c.b16 %v174, %v170
  %v219 = vpack.c.b16 %v175, %v171
  %v220 = vpack.c.b16 %v180, %v176
  %v221 = vpack.c.b16 %v181, %v177
  %v222 = vpack.c.b16 %v182, %v178
  %v223 = vpack.c.b16 %v183, %v179
  %v224 = vpack.c.b16 %v188, %v184
  %v225 = vpack.c.b16 %v189, %v185
  %v226 = vpack.c.b16 %v190, %v186
  %v227 = vpack.c.b16 %v191, %v187
  %v228 = vpack.c.b16 %v196, %v192
  %v229 = vpack.c.b16 %v197, %v193
  %v230 = vpack.c.b16 %v198, %v194
  %v231 = vpack.c.b16 %v199, %v195
  %264 = vmatprep.subr.bf16.mxu0 %v201
  %265 = vmatpush1.bf16.msra.mxu0 %v200
  %266 = vmatprep.subr.bf16.mxu0 %v205
  %267 = vmatpush1.bf16.msra.mxu0 %v204
  %268 = vmatprep.subr.bf16.mxu0 %v209
  %269 = vmatpush1.bf16.msra.mxu0 %v208
  %270 = vmatprep.subr.bf16.mxu0 %v213
  %271 = vmatpush1.bf16.msra.mxu0 %v212
  %272 = vmatprep.subr.bf16.mxu0 %v217
  %273 = vmatpush1.bf16.msra.mxu0 %v216
  %274 = vmatprep.subr.bf16.mxu0 %v221
  %275 = vmatpush1.bf16.msra.mxu0 %v220
  %276 = vmatprep.subr.bf16.mxu0 %v225
  %277 = vmatpush1.bf16.msra.mxu0 %v224
  %278 = vmatprep.subr.bf16.mxu0 %v229
  %279 = vmatpush1.bf16.msra.mxu0 %v228
  %280 = vmatprep.subr.bf16.mxu0 0
  %281 = vmatpush1.bf16.msra.mxu0 0
  %282 = vmatprep.subr.bf16.mxu0 0
  %283 = vmatpush1.bf16.msra.mxu0 0
  %284 = vmatprep.subr.bf16.mxu0 0
  %285 = vmatpush1.bf16.msra.mxu0 0
  %286 = vmatprep.subr.bf16.mxu0 0
  %287 = vmatpush1.bf16.msra.mxu0 0
  %288 = vmatprep.subr.bf16.mxu0 0
  %289 = vmatpush1.bf16.msra.mxu0 0
  %290 = vmatprep.subr.bf16.mxu0 0
  %291 = vmatpush1.bf16.msra.mxu0 0
  %292 = vmatprep.subr.bf16.mxu0 0
  %293 = vmatpush1.bf16.msra.mxu0 0
  %294 = vmatprep.subr.bf16.mxu0 0
  %295 = vmatpush1.bf16.msra.mxu0 0
  %296 = vmatprep.mubr.bf16.mxu0 0
  %297 = vmatmul.mubr.bf16.gmra.mrb[0].mxu0 %v103
  %v298 = vpop.f32.mrb[0].mxu0
  %v299 = vadd.f32 0.0, %v298
  %v300 = vpop.f32.mrb[0].mxu0
  %v301 = vadd.f32 0.0, %v300
  %v302 = vpop.f32.mrb[0].mxu0
  %v303 = vpop.f32.mrb[0].mxu0
  %304 = vdwg.mxu0
  %305 = vmatprep.subr.bf16.mxu0 %v203
  %306 = vmatpush1.bf16.msra.mxu0 %v202
  %307 = vmatprep.subr.bf16.mxu0 %v207
  %308 = vmatpush1.bf16.msra.mxu0 %v206
  %309 = vmatprep.subr.bf16.mxu0 %v211
  %310 = vmatpush1.bf16.msra.mxu0 %v210
  %311 = vmatprep.subr.bf16.mxu0 %v215
  %312 = vmatpush1.bf16.msra.mxu0 %v214
  %313 = vmatprep.subr.bf16.mxu0 %v219
  %314 = vmatpush1.bf16.msra.mxu0 %v218
  %315 = vmatprep.subr.bf16.mxu0 %v223
  %316 = vmatpush1.bf16.msra.mxu0 %v222
  %317 = vmatprep.subr.bf16.mxu0 %v227
  %318 = vmatpush1.bf16.msra.mxu0 %v226
  %319 = vmatprep.subr.bf16.mxu0 %v231
  %320 = vmatpush1.bf16.msra.mxu0 %v230
  %321 = vmatprep.subr.bf16.mxu0 0
  %322 = vmatpush1.bf16.msra.mxu0 0
  %323 = vmatprep.subr.bf16.mxu0 0
  %324 = vmatpush1.bf16.msra.mxu0 0
  %325 = vmatprep.subr.bf16.mxu0 0
  %326 = vmatpush1.bf16.msra.mxu0 0
  %327 = vmatprep.subr.bf16.mxu0 0
  %328 = vmatpush1.bf16.msra.mxu0 0
  %329 = vmatprep.subr.bf16.mxu0 0
  %330 = vmatpush1.bf16.msra.mxu0 0
  %331 = vmatprep.subr.bf16.mxu0 0
  %332 = vmatpush1.bf16.msra.mxu0 0
  %333 = vmatprep.subr.bf16.mxu0 0
  %334 = vmatpush1.bf16.msra.mxu0 0
  %335 = vmatprep.subr.bf16.mxu0 0
  %336 = vmatpush1.bf16.msra.mxu0 0
  %337 = vmatprep.mubr.bf16.mxu0 0
  %338 = vmatmul.mubr.bf16.gmra.mrb[0].mxu0 %v103
  %v339 = vpop.f32.mrb[0].mxu0
  %v340 = vadd.f32 0.0, %v339
  %v341 = vpop.f32.mrb[0].mxu0
  %v342 = vadd.f32 0.0, %v341
  %v343 = vpop.f32.mrb[0].mxu0
  %v344 = vpop.f32.mrb[0].mxu0
  %345 = vdwg.mxu0
  %v350 = vrot.slane %v299, 1
  %v351 = vrot.slane %v301, 1
  %v352 = vrot.slane %v340, 1
  %v353 = vrot.slane %v342, 1
  %v354 = vrot.slane %v299, 2
  %v355 = vrot.slane %v301, 2
  %v356 = vrot.slane %v340, 2
  %v357 = vrot.slane %v342, 2
  %v358 = vrot.slane %v299, 3
  %v359 = vrot.slane %v301, 3
  %v360 = vrot.slane %v340, 3
  %v361 = vrot.slane %v342, 3
  %v362 = vrot.slane %v299, 4
  %v363 = vrot.slane %v301, 4
  %v364 = vrot.slane %v340, 4
  %v365 = vrot.slane %v342, 4
  %v366 = vrot.slane %v299, 5
  %v367 = vrot.slane %v301, 5
  %v368 = vrot.slane %v340, 5
  %v369 = vrot.slane %v342, 5
  %v370 = vrot.slane %v299, 6
  %v371 = vrot.slane %v301, 6
  %v372 = vrot.slane %v340, 6
  %v373 = vrot.slane %v342, 6
  %v374 = vrot.slane %v299, 7
  %v375 = vrot.slane %v301, 7
  %v376 = vrot.slane %v340, 7
  %v377 = vrot.slane %v342, 7
  %v410 = vadd.f32 %v71, %v299
  %v411 = vadd.f32 %v72, %v301
  %v412 = vadd.f32 %v73, %v340
  %v413 = vadd.f32 %v74, %v342
  %v414 = vadd.f32 %v75, %v350
  %v415 = vadd.f32 %v76, %v351
  %v416 = vadd.f32 %v77, %v352
  %v417 = vadd.f32 %v78, %v353
  %v418 = vadd.f32 %v79, %v354
  %v419 = vadd.f32 %v80, %v355
  %v420 = vadd.f32 %v81, %v356
  %v421 = vadd.f32 %v82, %v357
  %v422 = vadd.f32 %v83, %v358
  %v423 = vadd.f32 %v84, %v359
  %v424 = vadd.f32 %v85, %v360
  %v425 = vadd.f32 %v86, %v361
  %v426 = vadd.f32 %v87, %v362
  %v427 = vadd.f32 %v88, %v363
  %v428 = vadd.f32 %v89, %v364
  %v429 = vadd.f32 %v90, %v365
  %v430 = vadd.f32 %v91, %v366
  %v431 = vadd.f32 %v92, %v367
  %v432 = vadd.f32 %v93, %v368
  %v433 = vadd.f32 %v94, %v369
  %v434 = vadd.f32 %v95, %v370
  %v435 = vadd.f32 %v96, %v371
  %v436 = vadd.f32 %v97, %v372
  %v437 = vadd.f32 %v98, %v373
  %v438 = vadd.f32 %v99, %v374
  %v439 = vadd.f32 %v100, %v375
  %v440 = vadd.f32 %v101, %v376
  %v441 = vadd.f32 %v102, %v377
  %v442 = vxor.u32 %v410, 2147483648
  %v443 = vxor.u32 %v414, 2147483648
  %v444 = vxor.u32 %v418, 2147483648
  %v445 = vxor.u32 %v422, 2147483648
  %v446 = vxor.u32 %v426, 2147483648
  %v447 = vxor.u32 %v430, 2147483648
  %v448 = vxor.u32 %v434, 2147483648
  %v449 = vxor.u32 %v438, 2147483648
  %v450 = vmul.f32 %v442, 1.442695
  %v451 = vpow.pop %v450
  %v452 = vmul.f32 %v443, 1.442695
  %v453 = vpow.pop %v452
  %v454 = vmul.f32 %v444, 1.442695
  %v455 = vpow.pop %v454
  %v456 = vmul.f32 %v445, 1.442695
  %v457 = vpow.pop %v456
  %v458 = vmul.f32 %v446, 1.442695
  %v459 = vpow.pop %v458
  %v460 = vmul.f32 %v447, 1.442695
  %v461 = vpow.pop %v460
  %v462 = vmul.f32 %v448, 1.442695
  %v463 = vpow.pop %v462
  %v464 = vmul.f32 %v449, 1.442695
  %v465 = vpow.pop %v464
  %v466 = vadd.f32 %v451, 1.0
  %v467 = vadd.f32 %v453, 1.0
  %v468 = vadd.f32 %v455, 1.0
  %v469 = vadd.f32 %v457, 1.0
  %v470 = vadd.f32 %v459, 1.0
  %v471 = vadd.f32 %v461, 1.0
  %v472 = vadd.f32 %v463, 1.0
  %v473 = vadd.f32 %v465, 1.0
  %v474 = vrcp.pop %v466
  %v475 = vmul.f32 1.0, %v474
  %v476 = vrcp.pop %v467
  %v477 = vmul.f32 1.0, %v476
  %v478 = vrcp.pop %v468
  %v479 = vmul.f32 1.0, %v478
  %v480 = vrcp.pop %v469
  %v481 = vmul.f32 1.0, %v480
  %v482 = vrcp.pop %v470
  %v483 = vmul.f32 1.0, %v482
  %v484 = vrcp.pop %v471
  %v485 = vmul.f32 1.0, %v484
  %v486 = vrcp.pop %v472
  %v487 = vmul.f32 1.0, %v486
  %v488 = vrcp.pop %v473
  %v489 = vmul.f32 1.0, %v488
  %v490 = vxor.u32 %v411, 2147483648
  %v491 = vxor.u32 %v415, 2147483648
  %v492 = vxor.u32 %v419, 2147483648
  %v493 = vxor.u32 %v423, 2147483648
  %v494 = vxor.u32 %v427, 2147483648
  %v495 = vxor.u32 %v431, 2147483648
  %v496 = vxor.u32 %v435, 2147483648
  %v497 = vxor.u32 %v439, 2147483648
  %v498 = vmul.f32 %v490, 1.442695
  %v499 = vpow.pop %v498
  %v500 = vmul.f32 %v491, 1.442695
  %v501 = vpow.pop %v500
  %v502 = vmul.f32 %v492, 1.442695
  %v503 = vpow.pop %v502
  %v504 = vmul.f32 %v493, 1.442695
  %v505 = vpow.pop %v504
  %v506 = vmul.f32 %v494, 1.442695
  %v507 = vpow.pop %v506
  %v508 = vmul.f32 %v495, 1.442695
  %v509 = vpow.pop %v508
  %v510 = vmul.f32 %v496, 1.442695
  %v511 = vpow.pop %v510
  %v512 = vmul.f32 %v497, 1.442695
  %v513 = vpow.pop %v512
  %v514 = vadd.f32 %v499, 1.0
  %v515 = vadd.f32 %v501, 1.0
  %v516 = vadd.f32 %v503, 1.0
  %v517 = vadd.f32 %v505, 1.0
  %v518 = vadd.f32 %v507, 1.0
  %v519 = vadd.f32 %v509, 1.0
  %v520 = vadd.f32 %v511, 1.0
  %v521 = vadd.f32 %v513, 1.0
  %v522 = vrcp.pop %v514
  %v523 = vmul.f32 1.0, %v522
  %v524 = vrcp.pop %v515
  %v525 = vmul.f32 1.0, %v524
  %v526 = vrcp.pop %v516
  %v527 = vmul.f32 1.0, %v526
  %v528 = vrcp.pop %v517
  %v529 = vmul.f32 1.0, %v528
  %v530 = vrcp.pop %v518
  %v531 = vmul.f32 1.0, %v530
  %v532 = vrcp.pop %v519
  %v533 = vmul.f32 1.0, %v532
  %v534 = vrcp.pop %v520
  %v535 = vmul.f32 1.0, %v534
  %v536 = vrcp.pop %v521
  %v537 = vmul.f32 1.0, %v536
  %v538 = vtanh.pop %v412
  %v539 = vtanh.pop %v416
  %v540 = vtanh.pop %v420
  %v541 = vtanh.pop %v424
  %v542 = vtanh.pop %v428
  %v543 = vtanh.pop %v432
  %v544 = vtanh.pop %v436
  %v545 = vtanh.pop %v440
  %v546 = vxor.u32 %v413, 2147483648
  %v547 = vxor.u32 %v417, 2147483648
  %v548 = vxor.u32 %v421, 2147483648
  %v549 = vxor.u32 %v425, 2147483648
  %v550 = vxor.u32 %v429, 2147483648
  %v551 = vxor.u32 %v433, 2147483648
  %v552 = vxor.u32 %v437, 2147483648
  %v553 = vxor.u32 %v441, 2147483648
  %v554 = vmul.f32 %v546, 1.442695
  %v555 = vpow.pop %v554
  %v556 = vmul.f32 %v547, 1.442695
  %v557 = vpow.pop %v556
  %v558 = vmul.f32 %v548, 1.442695
  %v559 = vpow.pop %v558
  %v560 = vmul.f32 %v549, 1.442695
  %v561 = vpow.pop %v560
  %v562 = vmul.f32 %v550, 1.442695
  %v563 = vpow.pop %v562
  %v564 = vmul.f32 %v551, 1.442695
  %v565 = vpow.pop %v564
  %v566 = vmul.f32 %v552, 1.442695
  %v567 = vpow.pop %v566
  %v568 = vmul.f32 %v553, 1.442695
  %v569 = vpow.pop %v568
  %v570 = vadd.f32 %v555, 1.0
  %v571 = vadd.f32 %v557, 1.0
  %v572 = vadd.f32 %v559, 1.0
  %v573 = vadd.f32 %v561, 1.0
  %v574 = vadd.f32 %v563, 1.0
  %v575 = vadd.f32 %v565, 1.0
  %v576 = vadd.f32 %v567, 1.0
  %v577 = vadd.f32 %v569, 1.0
  %v578 = vrcp.pop %v570
  %v579 = vmul.f32 1.0, %v578
  %v580 = vrcp.pop %v571
  %v581 = vmul.f32 1.0, %v580
  %v582 = vrcp.pop %v572
  %v583 = vmul.f32 1.0, %v582
  %v584 = vrcp.pop %v573
  %v585 = vmul.f32 1.0, %v584
  %v586 = vrcp.pop %v574
  %v587 = vmul.f32 1.0, %v586
  %v588 = vrcp.pop %v575
  %v589 = vmul.f32 1.0, %v588
  %v590 = vrcp.pop %v576
  %v591 = vmul.f32 1.0, %v590
  %v592 = vrcp.pop %v577
  %v593 = vmul.f32 1.0, %v592
  %v595 = vrot.slane %v22, 1
  %v596 = vrot.slane %v22, 2
  %v597 = vrot.slane %v22, 3
  %v598 = vrot.slane %v22, 4
  %v599 = vrot.slane %v22, 5
  %v600 = vrot.slane %v22, 6
  %v601 = vrot.slane %v22, 7
  %v610 = vmul.f32 %v523, %v22
  %v611 = vmul.f32 %v525, %v595
  %v612 = vmul.f32 %v527, %v596
  %v613 = vmul.f32 %v529, %v597
  %v614 = vmul.f32 %v531, %v598
  %v615 = vmul.f32 %v533, %v599
  %v616 = vmul.f32 %v535, %v600
  %v617 = vmul.f32 %v537, %v601
  %v618 = vmul.f32 %v475, %v538
  %v619 = vmul.f32 %v477, %v539
  %v620 = vmul.f32 %v479, %v540
  %v621 = vmul.f32 %v481, %v541
  %v622 = vmul.f32 %v483, %v542
  %v623 = vmul.f32 %v485, %v543
  %v624 = vmul.f32 %v487, %v544
  %v625 = vmul.f32 %v489, %v545
  %v626 = vadd.f32 %v610, %v618
  %v627 = vadd.f32 %v611, %v619
  %v628 = vadd.f32 %v612, %v620
  %v629 = vadd.f32 %v613, %v621
  %v630 = vadd.f32 %v614, %v622
  %v631 = vadd.f32 %v615, %v623
  %v632 = vadd.f32 %v616, %v624
  %v633 = vadd.f32 %v617, %v625
  %v634 = vtanh.pop %v626
  %v635 = vtanh.pop %v627
  %v636 = vtanh.pop %v628
  %v637 = vtanh.pop %v629
  %v638 = vtanh.pop %v630
  %v639 = vtanh.pop %v631
  %v640 = vtanh.pop %v632
  %v641 = vtanh.pop %v633
  %v642 = vmul.f32 %v579, %v634
  %v643 = vmul.f32 %v581, %v635
  %v644 = vmul.f32 %v583, %v636
  %v645 = vmul.f32 %v585, %v637
  %v646 = vmul.f32 %v587, %v638
  %v647 = vmul.f32 %v589, %v639
  %v648 = vmul.f32 %v591, %v640
  %v649 = vmul.f32 %v593, %v641
  %v650 = vpack.c.bf16 %v642, %v642
  %v651 = vpack.c.bf16 %v643, %v643
  %v652 = vpack.c.bf16 %v644, %v644
  %v653 = vpack.c.bf16 %v645, %v645
  %v654 = vpack.c.bf16 %v646, %v646
  %v655 = vpack.c.bf16 %v647, %v647
  %v656 = vpack.c.bf16 %v648, %v648
  %v657 = vpack.c.bf16 %v649, %v649
  %v666 = vunpack.c.l.b16 %v650
  %v667 = vunpack.c.l.b16 %v651
  %v668 = vunpack.c.l.b16 %v652
  %v669 = vunpack.c.l.b16 %v653
  %v670 = vunpack.c.l.b16 %v654
  %v671 = vunpack.c.l.b16 %v655
  %v672 = vunpack.c.l.b16 %v656
  %v673 = vunpack.c.l.b16 %v657
  %v674 = vrot.slane %v667, 7
  %vm675 = vcmask 1041409
  %v676 = vsel %vm675, %v674, %v666
  %v677 = vrot.slane %v668, 6
  %vm678 = vcmask 1042434
  %v679 = vsel %vm678, %v677, %v676
  %v680 = vrot.slane %v669, 5
  %vm681 = vcmask 1043459
  %v682 = vsel %vm681, %v680, %v679
  %v683 = vrot.slane %v670, 4
  %vm684 = vcmask 1044484
  %v685 = vsel %vm684, %v683, %v682
  %v686 = vrot.slane %v671, 3
  %vm687 = vcmask 1045509
  %v688 = vsel %vm687, %v686, %v685
  %v689 = vrot.slane %v672, 2
  %vm690 = vcmask 1046534
  %v691 = vsel %vm690, %v689, %v688
  %v692 = vrot.slane %v673, 1
  %vm693 = vcmask 1047559
  %v694 = vsel %vm693, %v692, %v691
  %v695 = vpack.c.b16 %v694, %v694
  %697 = vmatprep.subr.bf16.mxu0 %v201
  %698 = vmatpush1.bf16.msra.mxu0 %v200
  %699 = vmatprep.subr.bf16.mxu0 %v205
  %700 = vmatpush1.bf16.msra.mxu0 %v204
  %701 = vmatprep.subr.bf16.mxu0 %v209
  %702 = vmatpush1.bf16.msra.mxu0 %v208
  %703 = vmatprep.subr.bf16.mxu0 %v213
  %704 = vmatpush1.bf16.msra.mxu0 %v212
  %705 = vmatprep.subr.bf16.mxu0 %v217
  %706 = vmatpush1.bf16.msra.mxu0 %v216
  %707 = vmatprep.subr.bf16.mxu0 %v221
  %708 = vmatpush1.bf16.msra.mxu0 %v220
  %709 = vmatprep.subr.bf16.mxu0 %v225
  %710 = vmatpush1.bf16.msra.mxu0 %v224
  %711 = vmatprep.subr.bf16.mxu0 %v229
  %712 = vmatpush1.bf16.msra.mxu0 %v228
  %713 = vmatprep.subr.bf16.mxu0 0
  %714 = vmatpush1.bf16.msra.mxu0 0
  %715 = vmatprep.subr.bf16.mxu0 0
  %716 = vmatpush1.bf16.msra.mxu0 0
  %717 = vmatprep.subr.bf16.mxu0 0
  %718 = vmatpush1.bf16.msra.mxu0 0
  %719 = vmatprep.subr.bf16.mxu0 0
  %720 = vmatpush1.bf16.msra.mxu0 0
  %721 = vmatprep.subr.bf16.mxu0 0
  %722 = vmatpush1.bf16.msra.mxu0 0
  %723 = vmatprep.subr.bf16.mxu0 0
  %724 = vmatpush1.bf16.msra.mxu0 0
  %725 = vmatprep.subr.bf16.mxu0 0
  %726 = vmatpush1.bf16.msra.mxu0 0
  %727 = vmatprep.subr.bf16.mxu0 0
  %728 = vmatpush1.bf16.msra.mxu0 0
  %729 = vmatprep.mubr.bf16.mxu0 0
  %730 = vmatmul.mubr.bf16.gmra.mrb[0].mxu0 %v695
  %v731 = vpop.f32.mrb[0].mxu0
  %v732 = vadd.f32 0.0, %v731
  %v733 = vpop.f32.mrb[0].mxu0
  %v734 = vadd.f32 0.0, %v733
  %v735 = vpop.f32.mrb[0].mxu0
  %v736 = vpop.f32.mrb[0].mxu0
  %737 = vdwg.mxu0
  %738 = vmatprep.subr.bf16.mxu0 %v203
  %739 = vmatpush1.bf16.msra.mxu0 %v202
  %740 = vmatprep.subr.bf16.mxu0 %v207
  %741 = vmatpush1.bf16.msra.mxu0 %v206
  %742 = vmatprep.subr.bf16.mxu0 %v211
  %743 = vmatpush1.bf16.msra.mxu0 %v210
  %744 = vmatprep.subr.bf16.mxu0 %v215
  %745 = vmatpush1.bf16.msra.mxu0 %v214
  %746 = vmatprep.subr.bf16.mxu0 %v219
  %747 = vmatpush1.bf16.msra.mxu0 %v218
  %748 = vmatprep.subr.bf16.mxu0 %v223
  %749 = vmatpush1.bf16.msra.mxu0 %v222
  %750 = vmatprep.subr.bf16.mxu0 %v227
  %751 = vmatpush1.bf16.msra.mxu0 %v226
  %752 = vmatprep.subr.bf16.mxu0 %v231
  %753 = vmatpush1.bf16.msra.mxu0 %v230
  %754 = vmatprep.subr.bf16.mxu0 0
  %755 = vmatpush1.bf16.msra.mxu0 0
  %756 = vmatprep.subr.bf16.mxu0 0
  %757 = vmatpush1.bf16.msra.mxu0 0
  %758 = vmatprep.subr.bf16.mxu0 0
  %759 = vmatpush1.bf16.msra.mxu0 0
  %760 = vmatprep.subr.bf16.mxu0 0
  %761 = vmatpush1.bf16.msra.mxu0 0
  %762 = vmatprep.subr.bf16.mxu0 0
  %763 = vmatpush1.bf16.msra.mxu0 0
  %764 = vmatprep.subr.bf16.mxu0 0
  %765 = vmatpush1.bf16.msra.mxu0 0
  %766 = vmatprep.subr.bf16.mxu0 0
  %767 = vmatpush1.bf16.msra.mxu0 0
  %768 = vmatprep.subr.bf16.mxu0 0
  %769 = vmatpush1.bf16.msra.mxu0 0
  %770 = vmatprep.mubr.bf16.mxu0 0
  %771 = vmatmul.mubr.bf16.gmra.mrb[0].mxu0 %v695
  %v772 = vpop.f32.mrb[0].mxu0
  %v773 = vadd.f32 0.0, %v772
  %v774 = vpop.f32.mrb[0].mxu0
  %v775 = vadd.f32 0.0, %v774
  %v776 = vpop.f32.mrb[0].mxu0
  %v777 = vpop.f32.mrb[0].mxu0
  %778 = vdwg.mxu0
  %v783 = vrot.slane %v732, 7
  %v784 = vrot.slane %v734, 7
  %v785 = vrot.slane %v773, 7
  %v786 = vrot.slane %v775, 7
  %v787 = vrot.slane %v732, 1
  %v788 = vrot.slane %v734, 1
  %v789 = vrot.slane %v773, 1
  %v790 = vrot.slane %v775, 1
  %v791 = vrot.slane %v732, 2
  %v792 = vrot.slane %v734, 2
  %v793 = vrot.slane %v773, 2
  %v794 = vrot.slane %v775, 2
  %v795 = vrot.slane %v732, 3
  %v796 = vrot.slane %v734, 3
  %v797 = vrot.slane %v773, 3
  %v798 = vrot.slane %v775, 3
  %v799 = vrot.slane %v732, 4
  %v800 = vrot.slane %v734, 4
  %v801 = vrot.slane %v773, 4
  %v802 = vrot.slane %v775, 4
  %v803 = vrot.slane %v732, 5
  %v804 = vrot.slane %v734, 5
  %v805 = vrot.slane %v773, 5
  %v806 = vrot.slane %v775, 5
  %v807 = vrot.slane %v732, 6
  %v808 = vrot.slane %v734, 6
  %v809 = vrot.slane %v773, 6
  %v810 = vrot.slane %v775, 6
  %v843 = vadd.f32 %v71, %v783
  %v844 = vadd.f32 %v72, %v784
  %v845 = vadd.f32 %v73, %v785
  %v846 = vadd.f32 %v74, %v786
  %v847 = vadd.f32 %v75, %v732
  %v848 = vadd.f32 %v76, %v734
  %v849 = vadd.f32 %v77, %v773
  %v850 = vadd.f32 %v78, %v775
  %v851 = vadd.f32 %v79, %v787
  %v852 = vadd.f32 %v80, %v788
  %v853 = vadd.f32 %v81, %v789
  %v854 = vadd.f32 %v82, %v790
  %v855 = vadd.f32 %v83, %v791
  %v856 = vadd.f32 %v84, %v792
  %v857 = vadd.f32 %v85, %v793
  %v858 = vadd.f32 %v86, %v794
  %v859 = vadd.f32 %v87, %v795
  %v860 = vadd.f32 %v88, %v796
  %v861 = vadd.f32 %v89, %v797
  %v862 = vadd.f32 %v90, %v798
  %v863 = vadd.f32 %v91, %v799
  %v864 = vadd.f32 %v92, %v800
  %v865 = vadd.f32 %v93, %v801
  %v866 = vadd.f32 %v94, %v802
  %v867 = vadd.f32 %v95, %v803
  %v868 = vadd.f32 %v96, %v804
  %v869 = vadd.f32 %v97, %v805
  %v870 = vadd.f32 %v98, %v806
  %v871 = vadd.f32 %v99, %v807
  %v872 = vadd.f32 %v100, %v808
  %v873 = vadd.f32 %v101, %v809
  %v874 = vadd.f32 %v102, %v810
  %v875 = vxor.u32 %v843, 2147483648
  %v876 = vxor.u32 %v847, 2147483648
  %v877 = vxor.u32 %v851, 2147483648
  %v878 = vxor.u32 %v855, 2147483648
  %v879 = vxor.u32 %v859, 2147483648
  %v880 = vxor.u32 %v863, 2147483648
  %v881 = vxor.u32 %v867, 2147483648
  %v882 = vxor.u32 %v871, 2147483648
  %v883 = vmul.f32 %v875, 1.442695
  %v884 = vpow.pop %v883
  %v885 = vmul.f32 %v876, 1.442695
  %v886 = vpow.pop %v885
  %v887 = vmul.f32 %v877, 1.442695
  %v888 = vpow.pop %v887
  %v889 = vmul.f32 %v878, 1.442695
  %v890 = vpow.pop %v889
  %v891 = vmul.f32 %v879, 1.442695
  %v892 = vpow.pop %v891
  %v893 = vmul.f32 %v880, 1.442695
  %v894 = vpow.pop %v893
  %v895 = vmul.f32 %v881, 1.442695
  %v896 = vpow.pop %v895
  %v897 = vmul.f32 %v882, 1.442695
  %v898 = vpow.pop %v897
  %v899 = vadd.f32 %v884, 1.0
  %v900 = vadd.f32 %v886, 1.0
  %v901 = vadd.f32 %v888, 1.0
  %v902 = vadd.f32 %v890, 1.0
  %v903 = vadd.f32 %v892, 1.0
  %v904 = vadd.f32 %v894, 1.0
  %v905 = vadd.f32 %v896, 1.0
  %v906 = vadd.f32 %v898, 1.0
  %v907 = vrcp.pop %v899
  %v908 = vmul.f32 1.0, %v907
  %v909 = vrcp.pop %v900
  %v910 = vmul.f32 1.0, %v909
  %v911 = vrcp.pop %v901
  %v912 = vmul.f32 1.0, %v911
  %v913 = vrcp.pop %v902
  %v914 = vmul.f32 1.0, %v913
  %v915 = vrcp.pop %v903
  %v916 = vmul.f32 1.0, %v915
  %v917 = vrcp.pop %v904
  %v918 = vmul.f32 1.0, %v917
  %v919 = vrcp.pop %v905
  %v920 = vmul.f32 1.0, %v919
  %v921 = vrcp.pop %v906
  %v922 = vmul.f32 1.0, %v921
  %v923 = vxor.u32 %v844, 2147483648
  %v924 = vxor.u32 %v848, 2147483648
  %v925 = vxor.u32 %v852, 2147483648
  %v926 = vxor.u32 %v856, 2147483648
  %v927 = vxor.u32 %v860, 2147483648
  %v928 = vxor.u32 %v864, 2147483648
  %v929 = vxor.u32 %v868, 2147483648
  %v930 = vxor.u32 %v872, 2147483648
  %v931 = vmul.f32 %v923, 1.442695
  %v932 = vpow.pop %v931
  %v933 = vmul.f32 %v924, 1.442695
  %v934 = vpow.pop %v933
  %v935 = vmul.f32 %v925, 1.442695
  %v936 = vpow.pop %v935
  %v937 = vmul.f32 %v926, 1.442695
  %v938 = vpow.pop %v937
  %v939 = vmul.f32 %v927, 1.442695
  %v940 = vpow.pop %v939
  %v941 = vmul.f32 %v928, 1.442695
  %v942 = vpow.pop %v941
  %v943 = vmul.f32 %v929, 1.442695
  %v944 = vpow.pop %v943
  %v945 = vmul.f32 %v930, 1.442695
  %v946 = vpow.pop %v945
  %v947 = vadd.f32 %v932, 1.0
  %v948 = vadd.f32 %v934, 1.0
  %v949 = vadd.f32 %v936, 1.0
  %v950 = vadd.f32 %v938, 1.0
  %v951 = vadd.f32 %v940, 1.0
  %v952 = vadd.f32 %v942, 1.0
  %v953 = vadd.f32 %v944, 1.0
  %v954 = vadd.f32 %v946, 1.0
  %v955 = vrcp.pop %v947
  %v956 = vmul.f32 1.0, %v955
  %v957 = vrcp.pop %v948
  %v958 = vmul.f32 1.0, %v957
  %v959 = vrcp.pop %v949
  %v960 = vmul.f32 1.0, %v959
  %v961 = vrcp.pop %v950
  %v962 = vmul.f32 1.0, %v961
  %v963 = vrcp.pop %v951
  %v964 = vmul.f32 1.0, %v963
  %v965 = vrcp.pop %v952
  %v966 = vmul.f32 1.0, %v965
  %v967 = vrcp.pop %v953
  %v968 = vmul.f32 1.0, %v967
  %v969 = vrcp.pop %v954
  %v970 = vmul.f32 1.0, %v969
  %v971 = vtanh.pop %v845
  %v972 = vtanh.pop %v849
  %v973 = vtanh.pop %v853
  %v974 = vtanh.pop %v857
  %v975 = vtanh.pop %v861
  %v976 = vtanh.pop %v865
  %v977 = vtanh.pop %v869
  %v978 = vtanh.pop %v873
  %v979 = vxor.u32 %v846, 2147483648
  %v980 = vxor.u32 %v850, 2147483648
  %v981 = vxor.u32 %v854, 2147483648
  %v982 = vxor.u32 %v858, 2147483648
  %v983 = vxor.u32 %v862, 2147483648
  %v984 = vxor.u32 %v866, 2147483648
  %v985 = vxor.u32 %v870, 2147483648
  %v986 = vxor.u32 %v874, 2147483648
  %v987 = vmul.f32 %v979, 1.442695
  %v988 = vpow.pop %v987
  %v989 = vmul.f32 %v980, 1.442695
  %v990 = vpow.pop %v989
  %v991 = vmul.f32 %v981, 1.442695
  %v992 = vpow.pop %v991
  %v993 = vmul.f32 %v982, 1.442695
  %v994 = vpow.pop %v993
  %v995 = vmul.f32 %v983, 1.442695
  %v996 = vpow.pop %v995
  %v997 = vmul.f32 %v984, 1.442695
  %v998 = vpow.pop %v997
  %v999 = vmul.f32 %v985, 1.442695
  %v1000 = vpow.pop %v999
  %v1001 = vmul.f32 %v986, 1.442695
  %v1002 = vpow.pop %v1001
  %v1003 = vadd.f32 %v988, 1.0
  %v1004 = vadd.f32 %v990, 1.0
  %v1005 = vadd.f32 %v992, 1.0
  %v1006 = vadd.f32 %v994, 1.0
  %v1007 = vadd.f32 %v996, 1.0
  %v1008 = vadd.f32 %v998, 1.0
  %v1009 = vadd.f32 %v1000, 1.0
  %v1010 = vadd.f32 %v1002, 1.0
  %v1011 = vrcp.pop %v1003
  %v1012 = vmul.f32 1.0, %v1011
  %v1013 = vrcp.pop %v1004
  %v1014 = vmul.f32 1.0, %v1013
  %v1015 = vrcp.pop %v1005
  %v1016 = vmul.f32 1.0, %v1015
  %v1017 = vrcp.pop %v1006
  %v1018 = vmul.f32 1.0, %v1017
  %v1019 = vrcp.pop %v1007
  %v1020 = vmul.f32 1.0, %v1019
  %v1021 = vrcp.pop %v1008
  %v1022 = vmul.f32 1.0, %v1021
  %v1023 = vrcp.pop %v1009
  %v1024 = vmul.f32 1.0, %v1023
  %v1025 = vrcp.pop %v1010
  %v1026 = vmul.f32 1.0, %v1025
  %v1035 = vrot.slane %v626, 7
  %v1036 = vrot.slane %v627, 7
  %v1037 = vrot.slane %v628, 7
  %v1038 = vrot.slane %v629, 7
  %v1039 = vrot.slane %v630, 7
  %v1040 = vrot.slane %v631, 7
  %v1041 = vrot.slane %v632, 7
  %v1042 = vrot.slane %v633, 7
  %v1051 = vmul.f32 %v956, %v1035
  %v1052 = vmul.f32 %v958, %v1036
  %v1053 = vmul.f32 %v960, %v1037
  %v1054 = vmul.f32 %v962, %v1038
  %v1055 = vmul.f32 %v964, %v1039
  %v1056 = vmul.f32 %v966, %v1040
  %v1057 = vmul.f32 %v968, %v1041
  %v1058 = vmul.f32 %v970, %v1042
  %v1059 = vmul.f32 %v908, %v971
  %v1060 = vmul.f32 %v910, %v972
  %v1061 = vmul.f32 %v912, %v973
  %v1062 = vmul.f32 %v914, %v974
  %v1063 = vmul.f32 %v916, %v975
  %v1064 = vmul.f32 %v918, %v976
  %v1065 = vmul.f32 %v920, %v977
  %v1066 = vmul.f32 %v922, %v978
  %v1067 = vadd.f32 %v1051, %v1059
  %v1068 = vadd.f32 %v1052, %v1060
  %v1069 = vadd.f32 %v1053, %v1061
  %v1070 = vadd.f32 %v1054, %v1062
  %v1071 = vadd.f32 %v1055, %v1063
  %v1072 = vadd.f32 %v1056, %v1064
  %v1073 = vadd.f32 %v1057, %v1065
  %v1074 = vadd.f32 %v1058, %v1066
  %v1075 = vtanh.pop %v1067
  %v1076 = vtanh.pop %v1068
  %v1077 = vtanh.pop %v1069
  %v1078 = vtanh.pop %v1070
  %v1079 = vtanh.pop %v1071
  %v1080 = vtanh.pop %v1072
  %v1081 = vtanh.pop %v1073
  %v1082 = vtanh.pop %v1074
  %v1083 = vmul.f32 %v1012, %v1075
  %v1084 = vmul.f32 %v1014, %v1076
  %v1085 = vmul.f32 %v1016, %v1077
  %v1086 = vmul.f32 %v1018, %v1078
  %v1087 = vmul.f32 %v1020, %v1079
  %v1088 = vmul.f32 %v1022, %v1080
  %v1089 = vmul.f32 %v1024, %v1081
  %v1090 = vmul.f32 %v1026, %v1082
  %v1091 = vpack.c.bf16 %v1083, %v1083
  %v1092 = vpack.c.bf16 %v1084, %v1084
  %v1093 = vpack.c.bf16 %v1085, %v1085
  %v1094 = vpack.c.bf16 %v1086, %v1086
  %v1095 = vpack.c.bf16 %v1087, %v1087
  %v1096 = vpack.c.bf16 %v1088, %v1088
  %v1097 = vpack.c.bf16 %v1089, %v1089
  %v1098 = vpack.c.bf16 %v1090, %v1090
  %v1107 = vunpack.c.l.b16 %v1091
  %v1108 = vunpack.c.l.b16 %v1092
  %v1109 = vunpack.c.l.b16 %v1093
  %v1110 = vunpack.c.l.b16 %v1094
  %v1111 = vunpack.c.l.b16 %v1095
  %v1112 = vunpack.c.l.b16 %v1096
  %v1113 = vunpack.c.l.b16 %v1097
  %v1114 = vunpack.c.l.b16 %v1098
  %v1115 = vrot.slane %v1107, 1
  %v1116 = vsel %vm675, %v1108, %v1115
  %v1117 = vrot.slane %v1109, 7
  %v1118 = vsel %vm678, %v1117, %v1116
  %v1119 = vrot.slane %v1110, 6
  %v1120 = vsel %vm681, %v1119, %v1118
  %v1121 = vrot.slane %v1111, 5
  %v1122 = vsel %vm684, %v1121, %v1120
  %v1123 = vrot.slane %v1112, 4
  %v1124 = vsel %vm687, %v1123, %v1122
  %v1125 = vrot.slane %v1113, 3
  %v1126 = vsel %vm690, %v1125, %v1124
  %v1127 = vrot.slane %v1114, 2
  %v1128 = vsel %vm693, %v1127, %v1126
  %v1129 = vpack.c.b16 %v1128, %v1128
  %1131 = vmatprep.subr.bf16.mxu0 %v201
  %1132 = vmatpush1.bf16.msra.mxu0 %v200
  %1133 = vmatprep.subr.bf16.mxu0 %v205
  %1134 = vmatpush1.bf16.msra.mxu0 %v204
  %1135 = vmatprep.subr.bf16.mxu0 %v209
  %1136 = vmatpush1.bf16.msra.mxu0 %v208
  %1137 = vmatprep.subr.bf16.mxu0 %v213
  %1138 = vmatpush1.bf16.msra.mxu0 %v212
  %1139 = vmatprep.subr.bf16.mxu0 %v217
  %1140 = vmatpush1.bf16.msra.mxu0 %v216
  %1141 = vmatprep.subr.bf16.mxu0 %v221
  %1142 = vmatpush1.bf16.msra.mxu0 %v220
  %1143 = vmatprep.subr.bf16.mxu0 %v225
  %1144 = vmatpush1.bf16.msra.mxu0 %v224
  %1145 = vmatprep.subr.bf16.mxu0 %v229
  %1146 = vmatpush1.bf16.msra.mxu0 %v228
  %1147 = vmatprep.subr.bf16.mxu0 0
  %1148 = vmatpush1.bf16.msra.mxu0 0
  %1149 = vmatprep.subr.bf16.mxu0 0
  %1150 = vmatpush1.bf16.msra.mxu0 0
  %1151 = vmatprep.subr.bf16.mxu0 0
  %1152 = vmatpush1.bf16.msra.mxu0 0
  %1153 = vmatprep.subr.bf16.mxu0 0
  %1154 = vmatpush1.bf16.msra.mxu0 0
  %1155 = vmatprep.subr.bf16.mxu0 0
  %1156 = vmatpush1.bf16.msra.mxu0 0
  %1157 = vmatprep.subr.bf16.mxu0 0
  %1158 = vmatpush1.bf16.msra.mxu0 0
  %1159 = vmatprep.subr.bf16.mxu0 0
  %1160 = vmatpush1.bf16.msra.mxu0 0
  %1161 = vmatprep.subr.bf16.mxu0 0
  %1162 = vmatpush1.bf16.msra.mxu0 0
  %1163 = vmatprep.mubr.bf16.mxu0 0
  %1164 = vmatmul.mubr.bf16.gmra.mrb[0].mxu0 %v1129
  %v1165 = vpop.f32.mrb[0].mxu0
  %v1166 = vadd.f32 0.0, %v1165
  %v1167 = vpop.f32.mrb[0].mxu0
  %v1168 = vadd.f32 0.0, %v1167
  %v1169 = vpop.f32.mrb[0].mxu0
  %v1170 = vpop.f32.mrb[0].mxu0
  %1171 = vdwg.mxu0
  %1172 = vmatprep.subr.bf16.mxu0 %v203
  %1173 = vmatpush1.bf16.msra.mxu0 %v202
  %1174 = vmatprep.subr.bf16.mxu0 %v207
  %1175 = vmatpush1.bf16.msra.mxu0 %v206
  %1176 = vmatprep.subr.bf16.mxu0 %v211
  %1177 = vmatpush1.bf16.msra.mxu0 %v210
  %1178 = vmatprep.subr.bf16.mxu0 %v215
  %1179 = vmatpush1.bf16.msra.mxu0 %v214
  %1180 = vmatprep.subr.bf16.mxu0 %v219
  %1181 = vmatpush1.bf16.msra.mxu0 %v218
  %1182 = vmatprep.subr.bf16.mxu0 %v223
  %1183 = vmatpush1.bf16.msra.mxu0 %v222
  %1184 = vmatprep.subr.bf16.mxu0 %v227
  %1185 = vmatpush1.bf16.msra.mxu0 %v226
  %1186 = vmatprep.subr.bf16.mxu0 %v231
  %1187 = vmatpush1.bf16.msra.mxu0 %v230
  %1188 = vmatprep.subr.bf16.mxu0 0
  %1189 = vmatpush1.bf16.msra.mxu0 0
  %1190 = vmatprep.subr.bf16.mxu0 0
  %1191 = vmatpush1.bf16.msra.mxu0 0
  %1192 = vmatprep.subr.bf16.mxu0 0
  %1193 = vmatpush1.bf16.msra.mxu0 0
  %1194 = vmatprep.subr.bf16.mxu0 0
  %1195 = vmatpush1.bf16.msra.mxu0 0
  %1196 = vmatprep.subr.bf16.mxu0 0
  %1197 = vmatpush1.bf16.msra.mxu0 0
  %1198 = vmatprep.subr.bf16.mxu0 0
  %1199 = vmatpush1.bf16.msra.mxu0 0
  %1200 = vmatprep.subr.bf16.mxu0 0
  %1201 = vmatpush1.bf16.msra.mxu0 0
  %1202 = vmatprep.subr.bf16.mxu0 0
  %1203 = vmatpush1.bf16.msra.mxu0 0
  %1204 = vmatprep.mubr.bf16.mxu0 0
  %1205 = vmatmul.mubr.bf16.gmra.mrb[0].mxu0 %v1129
  %v1206 = vpop.f32.mrb[0].mxu0
  %v1207 = vadd.f32 0.0, %v1206
  %v1208 = vpop.f32.mrb[0].mxu0
  %v1209 = vadd.f32 0.0, %v1208
  %v1210 = vpop.f32.mrb[0].mxu0
  %v1211 = vpop.f32.mrb[0].mxu0
  %1212 = vdwg.mxu0
  %v1217 = vrot.slane %v1166, 6
  %v1218 = vrot.slane %v1168, 6
  %v1219 = vrot.slane %v1207, 6
  %v1220 = vrot.slane %v1209, 6
  %v1221 = vrot.slane %v1166, 7
  %v1222 = vrot.slane %v1168, 7
  %v1223 = vrot.slane %v1207, 7
  %v1224 = vrot.slane %v1209, 7
  %v1225 = vrot.slane %v1166, 1
  %v1226 = vrot.slane %v1168, 1
  %v1227 = vrot.slane %v1207, 1
  %v1228 = vrot.slane %v1209, 1
  %v1229 = vrot.slane %v1166, 2
  %v1230 = vrot.slane %v1168, 2
  %v1231 = vrot.slane %v1207, 2
  %v1232 = vrot.slane %v1209, 2
  %v1233 = vrot.slane %v1166, 3
  %v1234 = vrot.slane %v1168, 3
  %v1235 = vrot.slane %v1207, 3
  %v1236 = vrot.slane %v1209, 3
  %v1237 = vrot.slane %v1166, 4
  %v1238 = vrot.slane %v1168, 4
  %v1239 = vrot.slane %v1207, 4
  %v1240 = vrot.slane %v1209, 4
  %v1241 = vrot.slane %v1166, 5
  %v1242 = vrot.slane %v1168, 5
  %v1243 = vrot.slane %v1207, 5
  %v1244 = vrot.slane %v1209, 5
  %v1277 = vadd.f32 %v71, %v1217
  %v1278 = vadd.f32 %v72, %v1218
  %v1279 = vadd.f32 %v73, %v1219
  %v1280 = vadd.f32 %v74, %v1220
  %v1281 = vadd.f32 %v75, %v1221
  %v1282 = vadd.f32 %v76, %v1222
  %v1283 = vadd.f32 %v77, %v1223
  %v1284 = vadd.f32 %v78, %v1224
  %v1285 = vadd.f32 %v79, %v1166
  %v1286 = vadd.f32 %v80, %v1168
  %v1287 = vadd.f32 %v81, %v1207
  %v1288 = vadd.f32 %v82, %v1209
  %v1289 = vadd.f32 %v83, %v1225
  %v1290 = vadd.f32 %v84, %v1226
  %v1291 = vadd.f32 %v85, %v1227
  %v1292 = vadd.f32 %v86, %v1228
  %v1293 = vadd.f32 %v87, %v1229
  %v1294 = vadd.f32 %v88, %v1230
  %v1295 = vadd.f32 %v89, %v1231
  %v1296 = vadd.f32 %v90, %v1232
  %v1297 = vadd.f32 %v91, %v1233
  %v1298 = vadd.f32 %v92, %v1234
  %v1299 = vadd.f32 %v93, %v1235
  %v1300 = vadd.f32 %v94, %v1236
  %v1301 = vadd.f32 %v95, %v1237
  %v1302 = vadd.f32 %v96, %v1238
  %v1303 = vadd.f32 %v97, %v1239
  %v1304 = vadd.f32 %v98, %v1240
  %v1305 = vadd.f32 %v99, %v1241
  %v1306 = vadd.f32 %v100, %v1242
  %v1307 = vadd.f32 %v101, %v1243
  %v1308 = vadd.f32 %v102, %v1244
  %v1309 = vxor.u32 %v1277, 2147483648
  %v1310 = vxor.u32 %v1281, 2147483648
  %v1311 = vxor.u32 %v1285, 2147483648
  %v1312 = vxor.u32 %v1289, 2147483648
  %v1313 = vxor.u32 %v1293, 2147483648
  %v1314 = vxor.u32 %v1297, 2147483648
  %v1315 = vxor.u32 %v1301, 2147483648
  %v1316 = vxor.u32 %v1305, 2147483648
  %v1317 = vmul.f32 %v1309, 1.442695
  %v1318 = vpow.pop %v1317
  %v1319 = vmul.f32 %v1310, 1.442695
  %v1320 = vpow.pop %v1319
  %v1321 = vmul.f32 %v1311, 1.442695
  %v1322 = vpow.pop %v1321
  %v1323 = vmul.f32 %v1312, 1.442695
  %v1324 = vpow.pop %v1323
  %v1325 = vmul.f32 %v1313, 1.442695
  %v1326 = vpow.pop %v1325
  %v1327 = vmul.f32 %v1314, 1.442695
  %v1328 = vpow.pop %v1327
  %v1329 = vmul.f32 %v1315, 1.442695
  %v1330 = vpow.pop %v1329
  %v1331 = vmul.f32 %v1316, 1.442695
  %v1332 = vpow.pop %v1331
  %v1333 = vadd.f32 %v1318, 1.0
  %v1334 = vadd.f32 %v1320, 1.0
  %v1335 = vadd.f32 %v1322, 1.0
  %v1336 = vadd.f32 %v1324, 1.0
  %v1337 = vadd.f32 %v1326, 1.0
  %v1338 = vadd.f32 %v1328, 1.0
  %v1339 = vadd.f32 %v1330, 1.0
  %v1340 = vadd.f32 %v1332, 1.0
  %v1341 = vrcp.pop %v1333
  %v1342 = vmul.f32 1.0, %v1341
  %v1343 = vrcp.pop %v1334
  %v1344 = vmul.f32 1.0, %v1343
  %v1345 = vrcp.pop %v1335
  %v1346 = vmul.f32 1.0, %v1345
  %v1347 = vrcp.pop %v1336
  %v1348 = vmul.f32 1.0, %v1347
  %v1349 = vrcp.pop %v1337
  %v1350 = vmul.f32 1.0, %v1349
  %v1351 = vrcp.pop %v1338
  %v1352 = vmul.f32 1.0, %v1351
  %v1353 = vrcp.pop %v1339
  %v1354 = vmul.f32 1.0, %v1353
  %v1355 = vrcp.pop %v1340
  %v1356 = vmul.f32 1.0, %v1355
  %v1357 = vxor.u32 %v1278, 2147483648
  %v1358 = vxor.u32 %v1282, 2147483648
  %v1359 = vxor.u32 %v1286, 2147483648
  %v1360 = vxor.u32 %v1290, 2147483648
  %v1361 = vxor.u32 %v1294, 2147483648
  %v1362 = vxor.u32 %v1298, 2147483648
  %v1363 = vxor.u32 %v1302, 2147483648
  %v1364 = vxor.u32 %v1306, 2147483648
  %v1365 = vmul.f32 %v1357, 1.442695
  %v1366 = vpow.pop %v1365
  %v1367 = vmul.f32 %v1358, 1.442695
  %v1368 = vpow.pop %v1367
  %v1369 = vmul.f32 %v1359, 1.442695
  %v1370 = vpow.pop %v1369
  %v1371 = vmul.f32 %v1360, 1.442695
  %v1372 = vpow.pop %v1371
  %v1373 = vmul.f32 %v1361, 1.442695
  %v1374 = vpow.pop %v1373
  %v1375 = vmul.f32 %v1362, 1.442695
  %v1376 = vpow.pop %v1375
  %v1377 = vmul.f32 %v1363, 1.442695
  %v1378 = vpow.pop %v1377
  %v1379 = vmul.f32 %v1364, 1.442695
  %v1380 = vpow.pop %v1379
  %v1381 = vadd.f32 %v1366, 1.0
  %v1382 = vadd.f32 %v1368, 1.0
  %v1383 = vadd.f32 %v1370, 1.0
  %v1384 = vadd.f32 %v1372, 1.0
  %v1385 = vadd.f32 %v1374, 1.0
  %v1386 = vadd.f32 %v1376, 1.0
  %v1387 = vadd.f32 %v1378, 1.0
  %v1388 = vadd.f32 %v1380, 1.0
  %v1389 = vrcp.pop %v1381
  %v1390 = vmul.f32 1.0, %v1389
  %v1391 = vrcp.pop %v1382
  %v1392 = vmul.f32 1.0, %v1391
  %v1393 = vrcp.pop %v1383
  %v1394 = vmul.f32 1.0, %v1393
  %v1395 = vrcp.pop %v1384
  %v1396 = vmul.f32 1.0, %v1395
  %v1397 = vrcp.pop %v1385
  %v1398 = vmul.f32 1.0, %v1397
  %v1399 = vrcp.pop %v1386
  %v1400 = vmul.f32 1.0, %v1399
  %v1401 = vrcp.pop %v1387
  %v1402 = vmul.f32 1.0, %v1401
  %v1403 = vrcp.pop %v1388
  %v1404 = vmul.f32 1.0, %v1403
  %v1405 = vtanh.pop %v1279
  %v1406 = vtanh.pop %v1283
  %v1407 = vtanh.pop %v1287
  %v1408 = vtanh.pop %v1291
  %v1409 = vtanh.pop %v1295
  %v1410 = vtanh.pop %v1299
  %v1411 = vtanh.pop %v1303
  %v1412 = vtanh.pop %v1307
  %v1413 = vxor.u32 %v1280, 2147483648
  %v1414 = vxor.u32 %v1284, 2147483648
  %v1415 = vxor.u32 %v1288, 2147483648
  %v1416 = vxor.u32 %v1292, 2147483648
  %v1417 = vxor.u32 %v1296, 2147483648
  %v1418 = vxor.u32 %v1300, 2147483648
  %v1419 = vxor.u32 %v1304, 2147483648
  %v1420 = vxor.u32 %v1308, 2147483648
  %v1421 = vmul.f32 %v1413, 1.442695
  %v1422 = vpow.pop %v1421
  %v1423 = vmul.f32 %v1414, 1.442695
  %v1424 = vpow.pop %v1423
  %v1425 = vmul.f32 %v1415, 1.442695
  %v1426 = vpow.pop %v1425
  %v1427 = vmul.f32 %v1416, 1.442695
  %v1428 = vpow.pop %v1427
  %v1429 = vmul.f32 %v1417, 1.442695
  %v1430 = vpow.pop %v1429
  %v1431 = vmul.f32 %v1418, 1.442695
  %v1432 = vpow.pop %v1431
  %v1433 = vmul.f32 %v1419, 1.442695
  %v1434 = vpow.pop %v1433
  %v1435 = vmul.f32 %v1420, 1.442695
  %v1436 = vpow.pop %v1435
  %v1437 = vadd.f32 %v1422, 1.0
  %v1438 = vadd.f32 %v1424, 1.0
  %v1439 = vadd.f32 %v1426, 1.0
  %v1440 = vadd.f32 %v1428, 1.0
  %v1441 = vadd.f32 %v1430, 1.0
  %v1442 = vadd.f32 %v1432, 1.0
  %v1443 = vadd.f32 %v1434, 1.0
  %v1444 = vadd.f32 %v1436, 1.0
  %v1445 = vrcp.pop %v1437
  %v1446 = vmul.f32 1.0, %v1445
  %v1447 = vrcp.pop %v1438
  %v1448 = vmul.f32 1.0, %v1447
  %v1449 = vrcp.pop %v1439
  %v1450 = vmul.f32 1.0, %v1449
  %v1451 = vrcp.pop %v1440
  %v1452 = vmul.f32 1.0, %v1451
  %v1453 = vrcp.pop %v1441
  %v1454 = vmul.f32 1.0, %v1453
  %v1455 = vrcp.pop %v1442
  %v1456 = vmul.f32 1.0, %v1455
  %v1457 = vrcp.pop %v1443
  %v1458 = vmul.f32 1.0, %v1457
  %v1459 = vrcp.pop %v1444
  %v1460 = vmul.f32 1.0, %v1459
  %v1469 = vrot.slane %v1067, 7
  %v1470 = vrot.slane %v1068, 7
  %v1471 = vrot.slane %v1069, 7
  %v1472 = vrot.slane %v1070, 7
  %v1473 = vrot.slane %v1071, 7
  %v1474 = vrot.slane %v1072, 7
  %v1475 = vrot.slane %v1073, 7
  %v1476 = vrot.slane %v1074, 7
  %v1485 = vmul.f32 %v1390, %v1469
  %v1486 = vmul.f32 %v1392, %v1470
  %v1487 = vmul.f32 %v1394, %v1471
  %v1488 = vmul.f32 %v1396, %v1472
  %v1489 = vmul.f32 %v1398, %v1473
  %v1490 = vmul.f32 %v1400, %v1474
  %v1491 = vmul.f32 %v1402, %v1475
  %v1492 = vmul.f32 %v1404, %v1476
  %v1493 = vmul.f32 %v1342, %v1405
  %v1494 = vmul.f32 %v1344, %v1406
  %v1495 = vmul.f32 %v1346, %v1407
  %v1496 = vmul.f32 %v1348, %v1408
  %v1497 = vmul.f32 %v1350, %v1409
  %v1498 = vmul.f32 %v1352, %v1410
  %v1499 = vmul.f32 %v1354, %v1411
  %v1500 = vmul.f32 %v1356, %v1412
  %v1501 = vadd.f32 %v1485, %v1493
  %v1502 = vadd.f32 %v1486, %v1494
  %v1503 = vadd.f32 %v1487, %v1495
  %v1504 = vadd.f32 %v1488, %v1496
  %v1505 = vadd.f32 %v1489, %v1497
  %v1506 = vadd.f32 %v1490, %v1498
  %v1507 = vadd.f32 %v1491, %v1499
  %v1508 = vadd.f32 %v1492, %v1500
  %v1509 = vtanh.pop %v1501
  %v1510 = vtanh.pop %v1502
  %v1511 = vtanh.pop %v1503
  %v1512 = vtanh.pop %v1504
  %v1513 = vtanh.pop %v1505
  %v1514 = vtanh.pop %v1506
  %v1515 = vtanh.pop %v1507
  %v1516 = vtanh.pop %v1508
  %v1517 = vmul.f32 %v1446, %v1509
  %v1518 = vmul.f32 %v1448, %v1510
  %v1519 = vmul.f32 %v1450, %v1511
  %v1520 = vmul.f32 %v1452, %v1512
  %v1521 = vmul.f32 %v1454, %v1513
  %v1522 = vmul.f32 %v1456, %v1514
  %v1523 = vmul.f32 %v1458, %v1515
  %v1524 = vmul.f32 %v1460, %v1516
  %v1525 = vpack.c.bf16 %v1517, %v1517
  %v1526 = vpack.c.bf16 %v1518, %v1518
  %v1527 = vpack.c.bf16 %v1519, %v1519
  %v1528 = vpack.c.bf16 %v1520, %v1520
  %v1529 = vpack.c.bf16 %v1521, %v1521
  %v1530 = vpack.c.bf16 %v1522, %v1522
  %v1531 = vpack.c.bf16 %v1523, %v1523
  %v1532 = vpack.c.bf16 %v1524, %v1524
  %v1541 = vunpack.c.l.b16 %v1525
  %v1542 = vunpack.c.l.b16 %v1526
  %v1543 = vunpack.c.l.b16 %v1527
  %v1544 = vunpack.c.l.b16 %v1528
  %v1545 = vunpack.c.l.b16 %v1529
  %v1546 = vunpack.c.l.b16 %v1530
  %v1547 = vunpack.c.l.b16 %v1531
  %v1548 = vunpack.c.l.b16 %v1532
  %v1549 = vrot.slane %v1541, 2
  %v1550 = vrot.slane %v1542, 1
  %v1551 = vsel %vm675, %v1550, %v1549
  %v1552 = vsel %vm678, %v1543, %v1551
  %v1553 = vrot.slane %v1544, 7
  %v1554 = vsel %vm681, %v1553, %v1552
  %v1555 = vrot.slane %v1545, 6
  %v1556 = vsel %vm684, %v1555, %v1554
  %v1557 = vrot.slane %v1546, 5
  %v1558 = vsel %vm687, %v1557, %v1556
  %v1559 = vrot.slane %v1547, 4
  %v1560 = vsel %vm690, %v1559, %v1558
  %v1561 = vrot.slane %v1548, 3
  %v1562 = vsel %vm693, %v1561, %v1560
  %v1563 = vpack.c.b16 %v1562, %v1562
  %1565 = vmatprep.subr.bf16.mxu0 %v201
  %1566 = vmatpush1.bf16.msra.mxu0 %v200
  %1567 = vmatprep.subr.bf16.mxu0 %v205
  %1568 = vmatpush1.bf16.msra.mxu0 %v204
  %1569 = vmatprep.subr.bf16.mxu0 %v209
  %1570 = vmatpush1.bf16.msra.mxu0 %v208
  %1571 = vmatprep.subr.bf16.mxu0 %v213
  %1572 = vmatpush1.bf16.msra.mxu0 %v212
  %1573 = vmatprep.subr.bf16.mxu0 %v217
  %1574 = vmatpush1.bf16.msra.mxu0 %v216
  %1575 = vmatprep.subr.bf16.mxu0 %v221
  %1576 = vmatpush1.bf16.msra.mxu0 %v220
  %1577 = vmatprep.subr.bf16.mxu0 %v225
  %1578 = vmatpush1.bf16.msra.mxu0 %v224
  %1579 = vmatprep.subr.bf16.mxu0 %v229
  %1580 = vmatpush1.bf16.msra.mxu0 %v228
  %1581 = vmatprep.subr.bf16.mxu0 0
  %1582 = vmatpush1.bf16.msra.mxu0 0
  %1583 = vmatprep.subr.bf16.mxu0 0
  %1584 = vmatpush1.bf16.msra.mxu0 0
  %1585 = vmatprep.subr.bf16.mxu0 0
  %1586 = vmatpush1.bf16.msra.mxu0 0
  %1587 = vmatprep.subr.bf16.mxu0 0
  %1588 = vmatpush1.bf16.msra.mxu0 0
  %1589 = vmatprep.subr.bf16.mxu0 0
  %1590 = vmatpush1.bf16.msra.mxu0 0
  %1591 = vmatprep.subr.bf16.mxu0 0
  %1592 = vmatpush1.bf16.msra.mxu0 0
  %1593 = vmatprep.subr.bf16.mxu0 0
  %1594 = vmatpush1.bf16.msra.mxu0 0
  %1595 = vmatprep.subr.bf16.mxu0 0
  %1596 = vmatpush1.bf16.msra.mxu0 0
  %1597 = vmatprep.mubr.bf16.mxu0 0
  %1598 = vmatmul.mubr.bf16.gmra.mrb[0].mxu0 %v1563
  %v1599 = vpop.f32.mrb[0].mxu0
  %v1600 = vadd.f32 0.0, %v1599
  %v1601 = vpop.f32.mrb[0].mxu0
  %v1602 = vadd.f32 0.0, %v1601
  %v1603 = vpop.f32.mrb[0].mxu0
  %v1604 = vpop.f32.mrb[0].mxu0
  %1605 = vdwg.mxu0
  %1606 = vmatprep.subr.bf16.mxu0 %v203
  %1607 = vmatpush1.bf16.msra.mxu0 %v202
  %1608 = vmatprep.subr.bf16.mxu0 %v207
  %1609 = vmatpush1.bf16.msra.mxu0 %v206
  %1610 = vmatprep.subr.bf16.mxu0 %v211
  %1611 = vmatpush1.bf16.msra.mxu0 %v210
  %1612 = vmatprep.subr.bf16.mxu0 %v215
  %1613 = vmatpush1.bf16.msra.mxu0 %v214
  %1614 = vmatprep.subr.bf16.mxu0 %v219
  %1615 = vmatpush1.bf16.msra.mxu0 %v218
  %1616 = vmatprep.subr.bf16.mxu0 %v223
  %1617 = vmatpush1.bf16.msra.mxu0 %v222
  %1618 = vmatprep.subr.bf16.mxu0 %v227
  %1619 = vmatpush1.bf16.msra.mxu0 %v226
  %1620 = vmatprep.subr.bf16.mxu0 %v231
  %1621 = vmatpush1.bf16.msra.mxu0 %v230
  %1622 = vmatprep.subr.bf16.mxu0 0
  %1623 = vmatpush1.bf16.msra.mxu0 0
  %1624 = vmatprep.subr.bf16.mxu0 0
  %1625 = vmatpush1.bf16.msra.mxu0 0
  %1626 = vmatprep.subr.bf16.mxu0 0
  %1627 = vmatpush1.bf16.msra.mxu0 0
  %1628 = vmatprep.subr.bf16.mxu0 0
  %1629 = vmatpush1.bf16.msra.mxu0 0
  %1630 = vmatprep.subr.bf16.mxu0 0
  %1631 = vmatpush1.bf16.msra.mxu0 0
  %1632 = vmatprep.subr.bf16.mxu0 0
  %1633 = vmatpush1.bf16.msra.mxu0 0
  %1634 = vmatprep.subr.bf16.mxu0 0
  %1635 = vmatpush1.bf16.msra.mxu0 0
  %1636 = vmatprep.subr.bf16.mxu0 0
  %1637 = vmatpush1.bf16.msra.mxu0 0
  %1638 = vmatprep.mubr.bf16.mxu0 0
  %1639 = vmatmul.mubr.bf16.gmra.mrb[0].mxu0 %v1563
  %v1640 = vpop.f32.mrb[0].mxu0
  %v1641 = vadd.f32 0.0, %v1640
  %v1642 = vpop.f32.mrb[0].mxu0
  %v1643 = vadd.f32 0.0, %v1642
  %v1644 = vpop.f32.mrb[0].mxu0
  %v1645 = vpop.f32.mrb[0].mxu0
  %1646 = vdwg.mxu0
  %v1651 = vrot.slane %v1600, 5
  %v1652 = vrot.slane %v1602, 5
  %v1653 = vrot.slane %v1641, 5
  %v1654 = vrot.slane %v1643, 5
  %v1655 = vrot.slane %v1600, 6
  %v1656 = vrot.slane %v1602, 6
  %v1657 = vrot.slane %v1641, 6
  %v1658 = vrot.slane %v1643, 6
  %v1659 = vrot.slane %v1600, 7
  %v1660 = vrot.slane %v1602, 7
  %v1661 = vrot.slane %v1641, 7
  %v1662 = vrot.slane %v1643, 7
  %v1663 = vrot.slane %v1600, 1
  %v1664 = vrot.slane %v1602, 1
  %v1665 = vrot.slane %v1641, 1
  %v1666 = vrot.slane %v1643, 1
  %v1667 = vrot.slane %v1600, 2
  %v1668 = vrot.slane %v1602, 2
  %v1669 = vrot.slane %v1641, 2
  %v1670 = vrot.slane %v1643, 2
  %v1671 = vrot.slane %v1600, 3
  %v1672 = vrot.slane %v1602, 3
  %v1673 = vrot.slane %v1641, 3
  %v1674 = vrot.slane %v1643, 3
  %v1675 = vrot.slane %v1600, 4
  %v1676 = vrot.slane %v1602, 4
  %v1677 = vrot.slane %v1641, 4
  %v1678 = vrot.slane %v1643, 4
  %v1711 = vadd.f32 %v71, %v1651
  %v1712 = vadd.f32 %v72, %v1652
  %v1713 = vadd.f32 %v73, %v1653
  %v1714 = vadd.f32 %v74, %v1654
  %v1715 = vadd.f32 %v75, %v1655
  %v1716 = vadd.f32 %v76, %v1656
  %v1717 = vadd.f32 %v77, %v1657
  %v1718 = vadd.f32 %v78, %v1658
  %v1719 = vadd.f32 %v79, %v1659
  %v1720 = vadd.f32 %v80, %v1660
  %v1721 = vadd.f32 %v81, %v1661
  %v1722 = vadd.f32 %v82, %v1662
  %v1723 = vadd.f32 %v83, %v1600
  %v1724 = vadd.f32 %v84, %v1602
  %v1725 = vadd.f32 %v85, %v1641
  %v1726 = vadd.f32 %v86, %v1643
  %v1727 = vadd.f32 %v87, %v1663
  %v1728 = vadd.f32 %v88, %v1664
  %v1729 = vadd.f32 %v89, %v1665
  %v1730 = vadd.f32 %v90, %v1666
  %v1731 = vadd.f32 %v91, %v1667
  %v1732 = vadd.f32 %v92, %v1668
  %v1733 = vadd.f32 %v93, %v1669
  %v1734 = vadd.f32 %v94, %v1670
  %v1735 = vadd.f32 %v95, %v1671
  %v1736 = vadd.f32 %v96, %v1672
  %v1737 = vadd.f32 %v97, %v1673
  %v1738 = vadd.f32 %v98, %v1674
  %v1739 = vadd.f32 %v99, %v1675
  %v1740 = vadd.f32 %v100, %v1676
  %v1741 = vadd.f32 %v101, %v1677
  %v1742 = vadd.f32 %v102, %v1678
  %v1743 = vxor.u32 %v1711, 2147483648
  %v1744 = vxor.u32 %v1715, 2147483648
  %v1745 = vxor.u32 %v1719, 2147483648
  %v1746 = vxor.u32 %v1723, 2147483648
  %v1747 = vxor.u32 %v1727, 2147483648
  %v1748 = vxor.u32 %v1731, 2147483648
  %v1749 = vxor.u32 %v1735, 2147483648
  %v1750 = vxor.u32 %v1739, 2147483648
  %v1751 = vmul.f32 %v1743, 1.442695
  %v1752 = vpow.pop %v1751
  %v1753 = vmul.f32 %v1744, 1.442695
  %v1754 = vpow.pop %v1753
  %v1755 = vmul.f32 %v1745, 1.442695
  %v1756 = vpow.pop %v1755
  %v1757 = vmul.f32 %v1746, 1.442695
  %v1758 = vpow.pop %v1757
  %v1759 = vmul.f32 %v1747, 1.442695
  %v1760 = vpow.pop %v1759
  %v1761 = vmul.f32 %v1748, 1.442695
  %v1762 = vpow.pop %v1761
  %v1763 = vmul.f32 %v1749, 1.442695
  %v1764 = vpow.pop %v1763
  %v1765 = vmul.f32 %v1750, 1.442695
  %v1766 = vpow.pop %v1765
  %v1767 = vadd.f32 %v1752, 1.0
  %v1768 = vadd.f32 %v1754, 1.0
  %v1769 = vadd.f32 %v1756, 1.0
  %v1770 = vadd.f32 %v1758, 1.0
  %v1771 = vadd.f32 %v1760, 1.0
  %v1772 = vadd.f32 %v1762, 1.0
  %v1773 = vadd.f32 %v1764, 1.0
  %v1774 = vadd.f32 %v1766, 1.0
  %v1775 = vrcp.pop %v1767
  %v1776 = vmul.f32 1.0, %v1775
  %v1777 = vrcp.pop %v1768
  %v1778 = vmul.f32 1.0, %v1777
  %v1779 = vrcp.pop %v1769
  %v1780 = vmul.f32 1.0, %v1779
  %v1781 = vrcp.pop %v1770
  %v1782 = vmul.f32 1.0, %v1781
  %v1783 = vrcp.pop %v1771
  %v1784 = vmul.f32 1.0, %v1783
  %v1785 = vrcp.pop %v1772
  %v1786 = vmul.f32 1.0, %v1785
  %v1787 = vrcp.pop %v1773
  %v1788 = vmul.f32 1.0, %v1787
  %v1789 = vrcp.pop %v1774
  %v1790 = vmul.f32 1.0, %v1789
  %v1791 = vxor.u32 %v1712, 2147483648
  %v1792 = vxor.u32 %v1716, 2147483648
  %v1793 = vxor.u32 %v1720, 2147483648
  %v1794 = vxor.u32 %v1724, 2147483648
  %v1795 = vxor.u32 %v1728, 2147483648
  %v1796 = vxor.u32 %v1732, 2147483648
  %v1797 = vxor.u32 %v1736, 2147483648
  %v1798 = vxor.u32 %v1740, 2147483648
  %v1799 = vmul.f32 %v1791, 1.442695
  %v1800 = vpow.pop %v1799
  %v1801 = vmul.f32 %v1792, 1.442695
  %v1802 = vpow.pop %v1801
  %v1803 = vmul.f32 %v1793, 1.442695
  %v1804 = vpow.pop %v1803
  %v1805 = vmul.f32 %v1794, 1.442695
  %v1806 = vpow.pop %v1805
  %v1807 = vmul.f32 %v1795, 1.442695
  %v1808 = vpow.pop %v1807
  %v1809 = vmul.f32 %v1796, 1.442695
  %v1810 = vpow.pop %v1809
  %v1811 = vmul.f32 %v1797, 1.442695
  %v1812 = vpow.pop %v1811
  %v1813 = vmul.f32 %v1798, 1.442695
  %v1814 = vpow.pop %v1813
  %v1815 = vadd.f32 %v1800, 1.0
  %v1816 = vadd.f32 %v1802, 1.0
  %v1817 = vadd.f32 %v1804, 1.0
  %v1818 = vadd.f32 %v1806, 1.0
  %v1819 = vadd.f32 %v1808, 1.0
  %v1820 = vadd.f32 %v1810, 1.0
  %v1821 = vadd.f32 %v1812, 1.0
  %v1822 = vadd.f32 %v1814, 1.0
  %v1823 = vrcp.pop %v1815
  %v1824 = vmul.f32 1.0, %v1823
  %v1825 = vrcp.pop %v1816
  %v1826 = vmul.f32 1.0, %v1825
  %v1827 = vrcp.pop %v1817
  %v1828 = vmul.f32 1.0, %v1827
  %v1829 = vrcp.pop %v1818
  %v1830 = vmul.f32 1.0, %v1829
  %v1831 = vrcp.pop %v1819
  %v1832 = vmul.f32 1.0, %v1831
  %v1833 = vrcp.pop %v1820
  %v1834 = vmul.f32 1.0, %v1833
  %v1835 = vrcp.pop %v1821
  %v1836 = vmul.f32 1.0, %v1835
  %v1837 = vrcp.pop %v1822
  %v1838 = vmul.f32 1.0, %v1837
  %v1839 = vtanh.pop %v1713
  %v1840 = vtanh.pop %v1717
  %v1841 = vtanh.pop %v1721
  %v1842 = vtanh.pop %v1725
  %v1843 = vtanh.pop %v1729
  %v1844 = vtanh.pop %v1733
  %v1845 = vtanh.pop %v1737
  %v1846 = vtanh.pop %v1741
  %v1847 = vxor.u32 %v1714, 2147483648
  %v1848 = vxor.u32 %v1718, 2147483648
  %v1849 = vxor.u32 %v1722, 2147483648
  %v1850 = vxor.u32 %v1726, 2147483648
  %v1851 = vxor.u32 %v1730, 2147483648
  %v1852 = vxor.u32 %v1734, 2147483648
  %v1853 = vxor.u32 %v1738, 2147483648
  %v1854 = vxor.u32 %v1742, 2147483648
  %v1855 = vmul.f32 %v1847, 1.442695
  %v1856 = vpow.pop %v1855
  %v1857 = vmul.f32 %v1848, 1.442695
  %v1858 = vpow.pop %v1857
  %v1859 = vmul.f32 %v1849, 1.442695
  %v1860 = vpow.pop %v1859
  %v1861 = vmul.f32 %v1850, 1.442695
  %v1862 = vpow.pop %v1861
  %v1863 = vmul.f32 %v1851, 1.442695
  %v1864 = vpow.pop %v1863
  %v1865 = vmul.f32 %v1852, 1.442695
  %v1866 = vpow.pop %v1865
  %v1867 = vmul.f32 %v1853, 1.442695
  %v1868 = vpow.pop %v1867
  %v1869 = vmul.f32 %v1854, 1.442695
  %v1870 = vpow.pop %v1869
  %v1871 = vadd.f32 %v1856, 1.0
  %v1872 = vadd.f32 %v1858, 1.0
  %v1873 = vadd.f32 %v1860, 1.0
  %v1874 = vadd.f32 %v1862, 1.0
  %v1875 = vadd.f32 %v1864, 1.0
  %v1876 = vadd.f32 %v1866, 1.0
  %v1877 = vadd.f32 %v1868, 1.0
  %v1878 = vadd.f32 %v1870, 1.0
  %v1879 = vrcp.pop %v1871
  %v1880 = vmul.f32 1.0, %v1879
  %v1881 = vrcp.pop %v1872
  %v1882 = vmul.f32 1.0, %v1881
  %v1883 = vrcp.pop %v1873
  %v1884 = vmul.f32 1.0, %v1883
  %v1885 = vrcp.pop %v1874
  %v1886 = vmul.f32 1.0, %v1885
  %v1887 = vrcp.pop %v1875
  %v1888 = vmul.f32 1.0, %v1887
  %v1889 = vrcp.pop %v1876
  %v1890 = vmul.f32 1.0, %v1889
  %v1891 = vrcp.pop %v1877
  %v1892 = vmul.f32 1.0, %v1891
  %v1893 = vrcp.pop %v1878
  %v1894 = vmul.f32 1.0, %v1893
  %v1903 = vrot.slane %v1501, 7
  %v1904 = vrot.slane %v1502, 7
  %v1905 = vrot.slane %v1503, 7
  %v1906 = vrot.slane %v1504, 7
  %v1907 = vrot.slane %v1505, 7
  %v1908 = vrot.slane %v1506, 7
  %v1909 = vrot.slane %v1507, 7
  %v1910 = vrot.slane %v1508, 7
  %v1919 = vmul.f32 %v1824, %v1903
  %v1920 = vmul.f32 %v1826, %v1904
  %v1921 = vmul.f32 %v1828, %v1905
  %v1922 = vmul.f32 %v1830, %v1906
  %v1923 = vmul.f32 %v1832, %v1907
  %v1924 = vmul.f32 %v1834, %v1908
  %v1925 = vmul.f32 %v1836, %v1909
  %v1926 = vmul.f32 %v1838, %v1910
  %v1927 = vmul.f32 %v1776, %v1839
  %v1928 = vmul.f32 %v1778, %v1840
  %v1929 = vmul.f32 %v1780, %v1841
  %v1930 = vmul.f32 %v1782, %v1842
  %v1931 = vmul.f32 %v1784, %v1843
  %v1932 = vmul.f32 %v1786, %v1844
  %v1933 = vmul.f32 %v1788, %v1845
  %v1934 = vmul.f32 %v1790, %v1846
  %v1935 = vadd.f32 %v1919, %v1927
  %v1936 = vadd.f32 %v1920, %v1928
  %v1937 = vadd.f32 %v1921, %v1929
  %v1938 = vadd.f32 %v1922, %v1930
  %v1939 = vadd.f32 %v1923, %v1931
  %v1940 = vadd.f32 %v1924, %v1932
  %v1941 = vadd.f32 %v1925, %v1933
  %v1942 = vadd.f32 %v1926, %v1934
  %v1943 = vtanh.pop %v1935
  %v1944 = vtanh.pop %v1936
  %v1945 = vtanh.pop %v1937
  %v1946 = vtanh.pop %v1938
  %v1947 = vtanh.pop %v1939
  %v1948 = vtanh.pop %v1940
  %v1949 = vtanh.pop %v1941
  %v1950 = vtanh.pop %v1942
  %v1951 = vmul.f32 %v1880, %v1943
  %v1952 = vmul.f32 %v1882, %v1944
  %v1953 = vmul.f32 %v1884, %v1945
  %v1954 = vmul.f32 %v1886, %v1946
  %v1955 = vmul.f32 %v1888, %v1947
  %v1956 = vmul.f32 %v1890, %v1948
  %v1957 = vmul.f32 %v1892, %v1949
  %v1958 = vmul.f32 %v1894, %v1950
  %v1959 = vpack.c.bf16 %v1951, %v1951
  %v1960 = vpack.c.bf16 %v1952, %v1952
  %v1961 = vpack.c.bf16 %v1953, %v1953
  %v1962 = vpack.c.bf16 %v1954, %v1954
  %v1963 = vpack.c.bf16 %v1955, %v1955
  %v1964 = vpack.c.bf16 %v1956, %v1956
  %v1965 = vpack.c.bf16 %v1957, %v1957
  %v1966 = vpack.c.bf16 %v1958, %v1958
  %v1975 = vunpack.c.l.b16 %v1959
  %v1976 = vunpack.c.l.b16 %v1960
  %v1977 = vunpack.c.l.b16 %v1961
  %v1978 = vunpack.c.l.b16 %v1962
  %v1979 = vunpack.c.l.b16 %v1963
  %v1980 = vunpack.c.l.b16 %v1964
  %v1981 = vunpack.c.l.b16 %v1965
  %v1982 = vunpack.c.l.b16 %v1966
  %v1983 = vrot.slane %v1975, 3
  %v1984 = vrot.slane %v1976, 2
  %v1985 = vsel %vm675, %v1984, %v1983
  %v1986 = vrot.slane %v1977, 1
  %v1987 = vsel %vm678, %v1986, %v1985
  %v1988 = vsel %vm681, %v1978, %v1987
  %v1989 = vrot.slane %v1979, 7
  %v1990 = vsel %vm684, %v1989, %v1988
  %v1991 = vrot.slane %v1980, 6
  %v1992 = vsel %vm687, %v1991, %v1990
  %v1993 = vrot.slane %v1981, 5
  %v1994 = vsel %vm690, %v1993, %v1992
  %v1995 = vrot.slane %v1982, 4
  %v1996 = vsel %vm693, %v1995, %v1994
  %v1997 = vpack.c.b16 %v1996, %v1996
  %1999 = vmatprep.subr.bf16.mxu0 %v201
  %2000 = vmatpush1.bf16.msra.mxu0 %v200
  %2001 = vmatprep.subr.bf16.mxu0 %v205
  %2002 = vmatpush1.bf16.msra.mxu0 %v204
  %2003 = vmatprep.subr.bf16.mxu0 %v209
  %2004 = vmatpush1.bf16.msra.mxu0 %v208
  %2005 = vmatprep.subr.bf16.mxu0 %v213
  %2006 = vmatpush1.bf16.msra.mxu0 %v212
  %2007 = vmatprep.subr.bf16.mxu0 %v217
  %2008 = vmatpush1.bf16.msra.mxu0 %v216
  %2009 = vmatprep.subr.bf16.mxu0 %v221
  %2010 = vmatpush1.bf16.msra.mxu0 %v220
  %2011 = vmatprep.subr.bf16.mxu0 %v225
  %2012 = vmatpush1.bf16.msra.mxu0 %v224
  %2013 = vmatprep.subr.bf16.mxu0 %v229
  %2014 = vmatpush1.bf16.msra.mxu0 %v228
  %2015 = vmatprep.subr.bf16.mxu0 0
  %2016 = vmatpush1.bf16.msra.mxu0 0
  %2017 = vmatprep.subr.bf16.mxu0 0
  %2018 = vmatpush1.bf16.msra.mxu0 0
  %2019 = vmatprep.subr.bf16.mxu0 0
  %2020 = vmatpush1.bf16.msra.mxu0 0
  %2021 = vmatprep.subr.bf16.mxu0 0
  %2022 = vmatpush1.bf16.msra.mxu0 0
  %2023 = vmatprep.subr.bf16.mxu0 0
  %2024 = vmatpush1.bf16.msra.mxu0 0
  %2025 = vmatprep.subr.bf16.mxu0 0
  %2026 = vmatpush1.bf16.msra.mxu0 0
  %2027 = vmatprep.subr.bf16.mxu0 0
  %2028 = vmatpush1.bf16.msra.mxu0 0
  %2029 = vmatprep.subr.bf16.mxu0 0
  %2030 = vmatpush1.bf16.msra.mxu0 0
  %2031 = vmatprep.mubr.bf16.mxu0 0
  %2032 = vmatmul.mubr.bf16.gmra.mrb[0].mxu0 %v1997
  %v2033 = vpop.f32.mrb[0].mxu0
  %v2034 = vadd.f32 0.0, %v2033
  %v2035 = vpop.f32.mrb[0].mxu0
  %v2036 = vadd.f32 0.0, %v2035
  %v2037 = vpop.f32.mrb[0].mxu0
  %v2038 = vpop.f32.mrb[0].mxu0
  %2039 = vdwg.mxu0
  %2040 = vmatprep.subr.bf16.mxu0 %v203
  %2041 = vmatpush1.bf16.msra.mxu0 %v202
  %2042 = vmatprep.subr.bf16.mxu0 %v207
  %2043 = vmatpush1.bf16.msra.mxu0 %v206
  %2044 = vmatprep.subr.bf16.mxu0 %v211
  %2045 = vmatpush1.bf16.msra.mxu0 %v210
  %2046 = vmatprep.subr.bf16.mxu0 %v215
  %2047 = vmatpush1.bf16.msra.mxu0 %v214
  %2048 = vmatprep.subr.bf16.mxu0 %v219
  %2049 = vmatpush1.bf16.msra.mxu0 %v218
  %2050 = vmatprep.subr.bf16.mxu0 %v223
  %2051 = vmatpush1.bf16.msra.mxu0 %v222
  %2052 = vmatprep.subr.bf16.mxu0 %v227
  %2053 = vmatpush1.bf16.msra.mxu0 %v226
  %2054 = vmatprep.subr.bf16.mxu0 %v231
  %2055 = vmatpush1.bf16.msra.mxu0 %v230
  %2056 = vmatprep.subr.bf16.mxu0 0
  %2057 = vmatpush1.bf16.msra.mxu0 0
  %2058 = vmatprep.subr.bf16.mxu0 0
  %2059 = vmatpush1.bf16.msra.mxu0 0
  %2060 = vmatprep.subr.bf16.mxu0 0
  %2061 = vmatpush1.bf16.msra.mxu0 0
  %2062 = vmatprep.subr.bf16.mxu0 0
  %2063 = vmatpush1.bf16.msra.mxu0 0
  %2064 = vmatprep.subr.bf16.mxu0 0
  %2065 = vmatpush1.bf16.msra.mxu0 0
  %2066 = vmatprep.subr.bf16.mxu0 0
  %2067 = vmatpush1.bf16.msra.mxu0 0
  %2068 = vmatprep.subr.bf16.mxu0 0
  %2069 = vmatpush1.bf16.msra.mxu0 0
  %2070 = vmatprep.subr.bf16.mxu0 0
  %2071 = vmatpush1.bf16.msra.mxu0 0
  %2072 = vmatprep.mubr.bf16.mxu0 0
  %2073 = vmatmul.mubr.bf16.gmra.mrb[0].mxu0 %v1997
  %v2074 = vpop.f32.mrb[0].mxu0
  %v2075 = vadd.f32 0.0, %v2074
  %v2076 = vpop.f32.mrb[0].mxu0
  %v2077 = vadd.f32 0.0, %v2076
  %v2078 = vpop.f32.mrb[0].mxu0
  %v2079 = vpop.f32.mrb[0].mxu0
  %2080 = vdwg.mxu0
  %v2085 = vrot.slane %v2034, 4
  %v2086 = vrot.slane %v2036, 4
  %v2087 = vrot.slane %v2075, 4
  %v2088 = vrot.slane %v2077, 4
  %v2089 = vrot.slane %v2034, 5
  %v2090 = vrot.slane %v2036, 5
  %v2091 = vrot.slane %v2075, 5
  %v2092 = vrot.slane %v2077, 5
  %v2093 = vrot.slane %v2034, 6
  %v2094 = vrot.slane %v2036, 6
  %v2095 = vrot.slane %v2075, 6
  %v2096 = vrot.slane %v2077, 6
  %v2097 = vrot.slane %v2034, 7
  %v2098 = vrot.slane %v2036, 7
  %v2099 = vrot.slane %v2075, 7
  %v2100 = vrot.slane %v2077, 7
  %v2101 = vrot.slane %v2034, 1
  %v2102 = vrot.slane %v2036, 1
  %v2103 = vrot.slane %v2075, 1
  %v2104 = vrot.slane %v2077, 1
  %v2105 = vrot.slane %v2034, 2
  %v2106 = vrot.slane %v2036, 2
  %v2107 = vrot.slane %v2075, 2
  %v2108 = vrot.slane %v2077, 2
  %v2109 = vrot.slane %v2034, 3
  %v2110 = vrot.slane %v2036, 3
  %v2111 = vrot.slane %v2075, 3
  %v2112 = vrot.slane %v2077, 3
  %v2145 = vadd.f32 %v71, %v2085
  %v2146 = vadd.f32 %v72, %v2086
  %v2147 = vadd.f32 %v73, %v2087
  %v2148 = vadd.f32 %v74, %v2088
  %v2149 = vadd.f32 %v75, %v2089
  %v2150 = vadd.f32 %v76, %v2090
  %v2151 = vadd.f32 %v77, %v2091
  %v2152 = vadd.f32 %v78, %v2092
  %v2153 = vadd.f32 %v79, %v2093
  %v2154 = vadd.f32 %v80, %v2094
  %v2155 = vadd.f32 %v81, %v2095
  %v2156 = vadd.f32 %v82, %v2096
  %v2157 = vadd.f32 %v83, %v2097
  %v2158 = vadd.f32 %v84, %v2098
  %v2159 = vadd.f32 %v85, %v2099
  %v2160 = vadd.f32 %v86, %v2100
  %v2161 = vadd.f32 %v87, %v2034
  %v2162 = vadd.f32 %v88, %v2036
  %v2163 = vadd.f32 %v89, %v2075
  %v2164 = vadd.f32 %v90, %v2077
  %v2165 = vadd.f32 %v91, %v2101
  %v2166 = vadd.f32 %v92, %v2102
  %v2167 = vadd.f32 %v93, %v2103
  %v2168 = vadd.f32 %v94, %v2104
  %v2169 = vadd.f32 %v95, %v2105
  %v2170 = vadd.f32 %v96, %v2106
  %v2171 = vadd.f32 %v97, %v2107
  %v2172 = vadd.f32 %v98, %v2108
  %v2173 = vadd.f32 %v99, %v2109
  %v2174 = vadd.f32 %v100, %v2110
  %v2175 = vadd.f32 %v101, %v2111
  %v2176 = vadd.f32 %v102, %v2112
  %v2177 = vxor.u32 %v2145, 2147483648
  %v2178 = vxor.u32 %v2149, 2147483648
  %v2179 = vxor.u32 %v2153, 2147483648
  %v2180 = vxor.u32 %v2157, 2147483648
  %v2181 = vxor.u32 %v2161, 2147483648
  %v2182 = vxor.u32 %v2165, 2147483648
  %v2183 = vxor.u32 %v2169, 2147483648
  %v2184 = vxor.u32 %v2173, 2147483648
  %v2185 = vmul.f32 %v2177, 1.442695
  %v2186 = vpow.pop %v2185
  %v2187 = vmul.f32 %v2178, 1.442695
  %v2188 = vpow.pop %v2187
  %v2189 = vmul.f32 %v2179, 1.442695
  %v2190 = vpow.pop %v2189
  %v2191 = vmul.f32 %v2180, 1.442695
  %v2192 = vpow.pop %v2191
  %v2193 = vmul.f32 %v2181, 1.442695
  %v2194 = vpow.pop %v2193
  %v2195 = vmul.f32 %v2182, 1.442695
  %v2196 = vpow.pop %v2195
  %v2197 = vmul.f32 %v2183, 1.442695
  %v2198 = vpow.pop %v2197
  %v2199 = vmul.f32 %v2184, 1.442695
  %v2200 = vpow.pop %v2199
  %v2201 = vadd.f32 %v2186, 1.0
  %v2202 = vadd.f32 %v2188, 1.0
  %v2203 = vadd.f32 %v2190, 1.0
  %v2204 = vadd.f32 %v2192, 1.0
  %v2205 = vadd.f32 %v2194, 1.0
  %v2206 = vadd.f32 %v2196, 1.0
  %v2207 = vadd.f32 %v2198, 1.0
  %v2208 = vadd.f32 %v2200, 1.0
  %v2209 = vrcp.pop %v2201
  %v2210 = vmul.f32 1.0, %v2209
  %v2211 = vrcp.pop %v2202
  %v2212 = vmul.f32 1.0, %v2211
  %v2213 = vrcp.pop %v2203
  %v2214 = vmul.f32 1.0, %v2213
  %v2215 = vrcp.pop %v2204
  %v2216 = vmul.f32 1.0, %v2215
  %v2217 = vrcp.pop %v2205
  %v2218 = vmul.f32 1.0, %v2217
  %v2219 = vrcp.pop %v2206
  %v2220 = vmul.f32 1.0, %v2219
  %v2221 = vrcp.pop %v2207
  %v2222 = vmul.f32 1.0, %v2221
  %v2223 = vrcp.pop %v2208
  %v2224 = vmul.f32 1.0, %v2223
  %v2225 = vxor.u32 %v2146, 2147483648
  %v2226 = vxor.u32 %v2150, 2147483648
  %v2227 = vxor.u32 %v2154, 2147483648
  %v2228 = vxor.u32 %v2158, 2147483648
  %v2229 = vxor.u32 %v2162, 2147483648
  %v2230 = vxor.u32 %v2166, 2147483648
  %v2231 = vxor.u32 %v2170, 2147483648
  %v2232 = vxor.u32 %v2174, 2147483648
  %v2233 = vmul.f32 %v2225, 1.442695
  %v2234 = vpow.pop %v2233
  %v2235 = vmul.f32 %v2226, 1.442695
  %v2236 = vpow.pop %v2235
  %v2237 = vmul.f32 %v2227, 1.442695
  %v2238 = vpow.pop %v2237
  %v2239 = vmul.f32 %v2228, 1.442695
  %v2240 = vpow.pop %v2239
  %v2241 = vmul.f32 %v2229, 1.442695
  %v2242 = vpow.pop %v2241
  %v2243 = vmul.f32 %v2230, 1.442695
  %v2244 = vpow.pop %v2243
  %v2245 = vmul.f32 %v2231, 1.442695
  %v2246 = vpow.pop %v2245
  %v2247 = vmul.f32 %v2232, 1.442695
  %v2248 = vpow.pop %v2247
  %v2249 = vadd.f32 %v2234, 1.0
  %v2250 = vadd.f32 %v2236, 1.0
  %v2251 = vadd.f32 %v2238, 1.0
  %v2252 = vadd.f32 %v2240, 1.0
  %v2253 = vadd.f32 %v2242, 1.0
  %v2254 = vadd.f32 %v2244, 1.0
  %v2255 = vadd.f32 %v2246, 1.0
  %v2256 = vadd.f32 %v2248, 1.0
  %v2257 = vrcp.pop %v2249
  %v2258 = vmul.f32 1.0, %v2257
  %v2259 = vrcp.pop %v2250
  %v2260 = vmul.f32 1.0, %v2259
  %v2261 = vrcp.pop %v2251
  %v2262 = vmul.f32 1.0, %v2261
  %v2263 = vrcp.pop %v2252
  %v2264 = vmul.f32 1.0, %v2263
  %v2265 = vrcp.pop %v2253
  %v2266 = vmul.f32 1.0, %v2265
  %v2267 = vrcp.pop %v2254
  %v2268 = vmul.f32 1.0, %v2267
  %v2269 = vrcp.pop %v2255
  %v2270 = vmul.f32 1.0, %v2269
  %v2271 = vrcp.pop %v2256
  %v2272 = vmul.f32 1.0, %v2271
  %v2273 = vtanh.pop %v2147
  %v2274 = vtanh.pop %v2151
  %v2275 = vtanh.pop %v2155
  %v2276 = vtanh.pop %v2159
  %v2277 = vtanh.pop %v2163
  %v2278 = vtanh.pop %v2167
  %v2279 = vtanh.pop %v2171
  %v2280 = vtanh.pop %v2175
  %v2281 = vxor.u32 %v2148, 2147483648
  %v2282 = vxor.u32 %v2152, 2147483648
  %v2283 = vxor.u32 %v2156, 2147483648
  %v2284 = vxor.u32 %v2160, 2147483648
  %v2285 = vxor.u32 %v2164, 2147483648
  %v2286 = vxor.u32 %v2168, 2147483648
  %v2287 = vxor.u32 %v2172, 2147483648
  %v2288 = vxor.u32 %v2176, 2147483648
  %v2289 = vmul.f32 %v2281, 1.442695
  %v2290 = vpow.pop %v2289
  %v2291 = vmul.f32 %v2282, 1.442695
  %v2292 = vpow.pop %v2291
  %v2293 = vmul.f32 %v2283, 1.442695
  %v2294 = vpow.pop %v2293
  %v2295 = vmul.f32 %v2284, 1.442695
  %v2296 = vpow.pop %v2295
  %v2297 = vmul.f32 %v2285, 1.442695
  %v2298 = vpow.pop %v2297
  %v2299 = vmul.f32 %v2286, 1.442695
  %v2300 = vpow.pop %v2299
  %v2301 = vmul.f32 %v2287, 1.442695
  %v2302 = vpow.pop %v2301
  %v2303 = vmul.f32 %v2288, 1.442695
  %v2304 = vpow.pop %v2303
  %v2305 = vadd.f32 %v2290, 1.0
  %v2306 = vadd.f32 %v2292, 1.0
  %v2307 = vadd.f32 %v2294, 1.0
  %v2308 = vadd.f32 %v2296, 1.0
  %v2309 = vadd.f32 %v2298, 1.0
  %v2310 = vadd.f32 %v2300, 1.0
  %v2311 = vadd.f32 %v2302, 1.0
  %v2312 = vadd.f32 %v2304, 1.0
  %v2313 = vrcp.pop %v2305
  %v2314 = vmul.f32 1.0, %v2313
  %v2315 = vrcp.pop %v2306
  %v2316 = vmul.f32 1.0, %v2315
  %v2317 = vrcp.pop %v2307
  %v2318 = vmul.f32 1.0, %v2317
  %v2319 = vrcp.pop %v2308
  %v2320 = vmul.f32 1.0, %v2319
  %v2321 = vrcp.pop %v2309
  %v2322 = vmul.f32 1.0, %v2321
  %v2323 = vrcp.pop %v2310
  %v2324 = vmul.f32 1.0, %v2323
  %v2325 = vrcp.pop %v2311
  %v2326 = vmul.f32 1.0, %v2325
  %v2327 = vrcp.pop %v2312
  %v2328 = vmul.f32 1.0, %v2327
  %v2337 = vrot.slane %v1935, 7
  %v2338 = vrot.slane %v1936, 7
  %v2339 = vrot.slane %v1937, 7
  %v2340 = vrot.slane %v1938, 7
  %v2341 = vrot.slane %v1939, 7
  %v2342 = vrot.slane %v1940, 7
  %v2343 = vrot.slane %v1941, 7
  %v2344 = vrot.slane %v1942, 7
  %v2353 = vmul.f32 %v2258, %v2337
  %v2354 = vmul.f32 %v2260, %v2338
  %v2355 = vmul.f32 %v2262, %v2339
  %v2356 = vmul.f32 %v2264, %v2340
  %v2357 = vmul.f32 %v2266, %v2341
  %v2358 = vmul.f32 %v2268, %v2342
  %v2359 = vmul.f32 %v2270, %v2343
  %v2360 = vmul.f32 %v2272, %v2344
  %v2361 = vmul.f32 %v2210, %v2273
  %v2362 = vmul.f32 %v2212, %v2274
  %v2363 = vmul.f32 %v2214, %v2275
  %v2364 = vmul.f32 %v2216, %v2276
  %v2365 = vmul.f32 %v2218, %v2277
  %v2366 = vmul.f32 %v2220, %v2278
  %v2367 = vmul.f32 %v2222, %v2279
  %v2368 = vmul.f32 %v2224, %v2280
  %v2369 = vadd.f32 %v2353, %v2361
  %v2370 = vadd.f32 %v2354, %v2362
  %v2371 = vadd.f32 %v2355, %v2363
  %v2372 = vadd.f32 %v2356, %v2364
  %v2373 = vadd.f32 %v2357, %v2365
  %v2374 = vadd.f32 %v2358, %v2366
  %v2375 = vadd.f32 %v2359, %v2367
  %v2376 = vadd.f32 %v2360, %v2368
  %v2377 = vtanh.pop %v2369
  %v2378 = vtanh.pop %v2370
  %v2379 = vtanh.pop %v2371
  %v2380 = vtanh.pop %v2372
  %v2381 = vtanh.pop %v2373
  %v2382 = vtanh.pop %v2374
  %v2383 = vtanh.pop %v2375
  %v2384 = vtanh.pop %v2376
  %v2385 = vmul.f32 %v2314, %v2377
  %v2386 = vmul.f32 %v2316, %v2378
  %v2387 = vmul.f32 %v2318, %v2379
  %v2388 = vmul.f32 %v2320, %v2380
  %v2389 = vmul.f32 %v2322, %v2381
  %v2390 = vmul.f32 %v2324, %v2382
  %v2391 = vmul.f32 %v2326, %v2383
  %v2392 = vmul.f32 %v2328, %v2384
  %v2393 = vpack.c.bf16 %v2385, %v2385
  %v2394 = vpack.c.bf16 %v2386, %v2386
  %v2395 = vpack.c.bf16 %v2387, %v2387
  %v2396 = vpack.c.bf16 %v2388, %v2388
  %v2397 = vpack.c.bf16 %v2389, %v2389
  %v2398 = vpack.c.bf16 %v2390, %v2390
  %v2399 = vpack.c.bf16 %v2391, %v2391
  %v2400 = vpack.c.bf16 %v2392, %v2392
  %v2409 = vunpack.c.l.b16 %v2393
  %v2410 = vunpack.c.l.b16 %v2394
  %v2411 = vunpack.c.l.b16 %v2395
  %v2412 = vunpack.c.l.b16 %v2396
  %v2413 = vunpack.c.l.b16 %v2397
  %v2414 = vunpack.c.l.b16 %v2398
  %v2415 = vunpack.c.l.b16 %v2399
  %v2416 = vunpack.c.l.b16 %v2400
  %v2417 = vrot.slane %v2409, 4
  %v2418 = vrot.slane %v2410, 3
  %v2419 = vsel %vm675, %v2418, %v2417
  %v2420 = vrot.slane %v2411, 2
  %v2421 = vsel %vm678, %v2420, %v2419
  %v2422 = vrot.slane %v2412, 1
  %v2423 = vsel %vm681, %v2422, %v2421
  %v2424 = vsel %vm684, %v2413, %v2423
  %v2425 = vrot.slane %v2414, 7
  %v2426 = vsel %vm687, %v2425, %v2424
  %v2427 = vrot.slane %v2415, 6
  %v2428 = vsel %vm690, %v2427, %v2426
  %v2429 = vrot.slane %v2416, 5
  %v2430 = vsel %vm693, %v2429, %v2428
  %v2431 = vpack.c.b16 %v2430, %v2430
  %2433 = vmatprep.subr.bf16.mxu0 %v201
  %2434 = vmatpush1.bf16.msra.mxu0 %v200
  %2435 = vmatprep.subr.bf16.mxu0 %v205
  %2436 = vmatpush1.bf16.msra.mxu0 %v204
  %2437 = vmatprep.subr.bf16.mxu0 %v209
  %2438 = vmatpush1.bf16.msra.mxu0 %v208
  %2439 = vmatprep.subr.bf16.mxu0 %v213
  %2440 = vmatpush1.bf16.msra.mxu0 %v212
  %2441 = vmatprep.subr.bf16.mxu0 %v217
  %2442 = vmatpush1.bf16.msra.mxu0 %v216
  %2443 = vmatprep.subr.bf16.mxu0 %v221
  %2444 = vmatpush1.bf16.msra.mxu0 %v220
  %2445 = vmatprep.subr.bf16.mxu0 %v225
  %2446 = vmatpush1.bf16.msra.mxu0 %v224
  %2447 = vmatprep.subr.bf16.mxu0 %v229
  %2448 = vmatpush1.bf16.msra.mxu0 %v228
  %2449 = vmatprep.subr.bf16.mxu0 0
  %2450 = vmatpush1.bf16.msra.mxu0 0
  %2451 = vmatprep.subr.bf16.mxu0 0
  %2452 = vmatpush1.bf16.msra.mxu0 0
  %2453 = vmatprep.subr.bf16.mxu0 0
  %2454 = vmatpush1.bf16.msra.mxu0 0
  %2455 = vmatprep.subr.bf16.mxu0 0
  %2456 = vmatpush1.bf16.msra.mxu0 0
  %2457 = vmatprep.subr.bf16.mxu0 0
  %2458 = vmatpush1.bf16.msra.mxu0 0
  %2459 = vmatprep.subr.bf16.mxu0 0
  %2460 = vmatpush1.bf16.msra.mxu0 0
  %2461 = vmatprep.subr.bf16.mxu0 0
  %2462 = vmatpush1.bf16.msra.mxu0 0
  %2463 = vmatprep.subr.bf16.mxu0 0
  %2464 = vmatpush1.bf16.msra.mxu0 0
  %2465 = vmatprep.mubr.bf16.mxu0 0
  %2466 = vmatmul.mubr.bf16.gmra.mrb[0].mxu0 %v2431
  %v2467 = vpop.f32.mrb[0].mxu0
  %v2468 = vadd.f32 0.0, %v2467
  %v2469 = vpop.f32.mrb[0].mxu0
  %v2470 = vadd.f32 0.0, %v2469
  %v2471 = vpop.f32.mrb[0].mxu0
  %v2472 = vpop.f32.mrb[0].mxu0
  %2473 = vdwg.mxu0
  %2474 = vmatprep.subr.bf16.mxu0 %v203
  %2475 = vmatpush1.bf16.msra.mxu0 %v202
  %2476 = vmatprep.subr.bf16.mxu0 %v207
  %2477 = vmatpush1.bf16.msra.mxu0 %v206
  %2478 = vmatprep.subr.bf16.mxu0 %v211
  %2479 = vmatpush1.bf16.msra.mxu0 %v210
  %2480 = vmatprep.subr.bf16.mxu0 %v215
  %2481 = vmatpush1.bf16.msra.mxu0 %v214
  %2482 = vmatprep.subr.bf16.mxu0 %v219
  %2483 = vmatpush1.bf16.msra.mxu0 %v218
  %2484 = vmatprep.subr.bf16.mxu0 %v223
  %2485 = vmatpush1.bf16.msra.mxu0 %v222
  %2486 = vmatprep.subr.bf16.mxu0 %v227
  %2487 = vmatpush1.bf16.msra.mxu0 %v226
  %2488 = vmatprep.subr.bf16.mxu0 %v231
  %2489 = vmatpush1.bf16.msra.mxu0 %v230
  %2490 = vmatprep.subr.bf16.mxu0 0
  %2491 = vmatpush1.bf16.msra.mxu0 0
  %2492 = vmatprep.subr.bf16.mxu0 0
  %2493 = vmatpush1.bf16.msra.mxu0 0
  %2494 = vmatprep.subr.bf16.mxu0 0
  %2495 = vmatpush1.bf16.msra.mxu0 0
  %2496 = vmatprep.subr.bf16.mxu0 0
  %2497 = vmatpush1.bf16.msra.mxu0 0
  %2498 = vmatprep.subr.bf16.mxu0 0
  %2499 = vmatpush1.bf16.msra.mxu0 0
  %2500 = vmatprep.subr.bf16.mxu0 0
  %2501 = vmatpush1.bf16.msra.mxu0 0
  %2502 = vmatprep.subr.bf16.mxu0 0
  %2503 = vmatpush1.bf16.msra.mxu0 0
  %2504 = vmatprep.subr.bf16.mxu0 0
  %2505 = vmatpush1.bf16.msra.mxu0 0
  %2506 = vmatprep.mubr.bf16.mxu0 0
  %2507 = vmatmul.mubr.bf16.gmra.mrb[0].mxu0 %v2431
  %v2508 = vpop.f32.mrb[0].mxu0
  %v2509 = vadd.f32 0.0, %v2508
  %v2510 = vpop.f32.mrb[0].mxu0
  %v2511 = vadd.f32 0.0, %v2510
  %v2512 = vpop.f32.mrb[0].mxu0
  %v2513 = vpop.f32.mrb[0].mxu0
  %2514 = vdwg.mxu0
  %v2519 = vrot.slane %v2468, 3
  %v2520 = vrot.slane %v2470, 3
  %v2521 = vrot.slane %v2509, 3
  %v2522 = vrot.slane %v2511, 3
  %v2523 = vrot.slane %v2468, 4
  %v2524 = vrot.slane %v2470, 4
  %v2525 = vrot.slane %v2509, 4
  %v2526 = vrot.slane %v2511, 4
  %v2527 = vrot.slane %v2468, 5
  %v2528 = vrot.slane %v2470, 5
  %v2529 = vrot.slane %v2509, 5
  %v2530 = vrot.slane %v2511, 5
  %v2531 = vrot.slane %v2468, 6
  %v2532 = vrot.slane %v2470, 6
  %v2533 = vrot.slane %v2509, 6
  %v2534 = vrot.slane %v2511, 6
  %v2535 = vrot.slane %v2468, 7
  %v2536 = vrot.slane %v2470, 7
  %v2537 = vrot.slane %v2509, 7
  %v2538 = vrot.slane %v2511, 7
  %v2539 = vrot.slane %v2468, 1
  %v2540 = vrot.slane %v2470, 1
  %v2541 = vrot.slane %v2509, 1
  %v2542 = vrot.slane %v2511, 1
  %v2543 = vrot.slane %v2468, 2
  %v2544 = vrot.slane %v2470, 2
  %v2545 = vrot.slane %v2509, 2
  %v2546 = vrot.slane %v2511, 2
  %v2579 = vadd.f32 %v71, %v2519
  %v2580 = vadd.f32 %v72, %v2520
  %v2581 = vadd.f32 %v73, %v2521
  %v2582 = vadd.f32 %v74, %v2522
  %v2583 = vadd.f32 %v75, %v2523
  %v2584 = vadd.f32 %v76, %v2524
  %v2585 = vadd.f32 %v77, %v2525
  %v2586 = vadd.f32 %v78, %v2526
  %v2587 = vadd.f32 %v79, %v2527
  %v2588 = vadd.f32 %v80, %v2528
  %v2589 = vadd.f32 %v81, %v2529
  %v2590 = vadd.f32 %v82, %v2530
  %v2591 = vadd.f32 %v83, %v2531
  %v2592 = vadd.f32 %v84, %v2532
  %v2593 = vadd.f32 %v85, %v2533
  %v2594 = vadd.f32 %v86, %v2534
  %v2595 = vadd.f32 %v87, %v2535
  %v2596 = vadd.f32 %v88, %v2536
  %v2597 = vadd.f32 %v89, %v2537
  %v2598 = vadd.f32 %v90, %v2538
  %v2599 = vadd.f32 %v91, %v2468
  %v2600 = vadd.f32 %v92, %v2470
  %v2601 = vadd.f32 %v93, %v2509
  %v2602 = vadd.f32 %v94, %v2511
  %v2603 = vadd.f32 %v95, %v2539
  %v2604 = vadd.f32 %v96, %v2540
  %v2605 = vadd.f32 %v97, %v2541
  %v2606 = vadd.f32 %v98, %v2542
  %v2607 = vadd.f32 %v99, %v2543
  %v2608 = vadd.f32 %v100, %v2544
  %v2609 = vadd.f32 %v101, %v2545
  %v2610 = vadd.f32 %v102, %v2546
  %v2611 = vxor.u32 %v2579, 2147483648
  %v2612 = vxor.u32 %v2583, 2147483648
  %v2613 = vxor.u32 %v2587, 2147483648
  %v2614 = vxor.u32 %v2591, 2147483648
  %v2615 = vxor.u32 %v2595, 2147483648
  %v2616 = vxor.u32 %v2599, 2147483648
  %v2617 = vxor.u32 %v2603, 2147483648
  %v2618 = vxor.u32 %v2607, 2147483648
  %v2619 = vmul.f32 %v2611, 1.442695
  %v2620 = vpow.pop %v2619
  %v2621 = vmul.f32 %v2612, 1.442695
  %v2622 = vpow.pop %v2621
  %v2623 = vmul.f32 %v2613, 1.442695
  %v2624 = vpow.pop %v2623
  %v2625 = vmul.f32 %v2614, 1.442695
  %v2626 = vpow.pop %v2625
  %v2627 = vmul.f32 %v2615, 1.442695
  %v2628 = vpow.pop %v2627
  %v2629 = vmul.f32 %v2616, 1.442695
  %v2630 = vpow.pop %v2629
  %v2631 = vmul.f32 %v2617, 1.442695
  %v2632 = vpow.pop %v2631
  %v2633 = vmul.f32 %v2618, 1.442695
  %v2634 = vpow.pop %v2633
  %v2635 = vadd.f32 %v2620, 1.0
  %v2636 = vadd.f32 %v2622, 1.0
  %v2637 = vadd.f32 %v2624, 1.0
  %v2638 = vadd.f32 %v2626, 1.0
  %v2639 = vadd.f32 %v2628, 1.0
  %v2640 = vadd.f32 %v2630, 1.0
  %v2641 = vadd.f32 %v2632, 1.0
  %v2642 = vadd.f32 %v2634, 1.0
  %v2643 = vrcp.pop %v2635
  %v2644 = vmul.f32 1.0, %v2643
  %v2645 = vrcp.pop %v2636
  %v2646 = vmul.f32 1.0, %v2645
  %v2647 = vrcp.pop %v2637
  %v2648 = vmul.f32 1.0, %v2647
  %v2649 = vrcp.pop %v2638
  %v2650 = vmul.f32 1.0, %v2649
  %v2651 = vrcp.pop %v2639
  %v2652 = vmul.f32 1.0, %v2651
  %v2653 = vrcp.pop %v2640
  %v2654 = vmul.f32 1.0, %v2653
  %v2655 = vrcp.pop %v2641
  %v2656 = vmul.f32 1.0, %v2655
  %v2657 = vrcp.pop %v2642
  %v2658 = vmul.f32 1.0, %v2657
  %v2659 = vxor.u32 %v2580, 2147483648
  %v2660 = vxor.u32 %v2584, 2147483648
  %v2661 = vxor.u32 %v2588, 2147483648
  %v2662 = vxor.u32 %v2592, 2147483648
  %v2663 = vxor.u32 %v2596, 2147483648
  %v2664 = vxor.u32 %v2600, 2147483648
  %v2665 = vxor.u32 %v2604, 2147483648
  %v2666 = vxor.u32 %v2608, 2147483648
  %v2667 = vmul.f32 %v2659, 1.442695
  %v2668 = vpow.pop %v2667
  %v2669 = vmul.f32 %v2660, 1.442695
  %v2670 = vpow.pop %v2669
  %v2671 = vmul.f32 %v2661, 1.442695
  %v2672 = vpow.pop %v2671
  %v2673 = vmul.f32 %v2662, 1.442695
  %v2674 = vpow.pop %v2673
  %v2675 = vmul.f32 %v2663, 1.442695
  %v2676 = vpow.pop %v2675
  %v2677 = vmul.f32 %v2664, 1.442695
  %v2678 = vpow.pop %v2677
  %v2679 = vmul.f32 %v2665, 1.442695
  %v2680 = vpow.pop %v2679
  %v2681 = vmul.f32 %v2666, 1.442695
  %v2682 = vpow.pop %v2681
  %v2683 = vadd.f32 %v2668, 1.0
  %v2684 = vadd.f32 %v2670, 1.0
  %v2685 = vadd.f32 %v2672, 1.0
  %v2686 = vadd.f32 %v2674, 1.0
  %v2687 = vadd.f32 %v2676, 1.0
  %v2688 = vadd.f32 %v2678, 1.0
  %v2689 = vadd.f32 %v2680, 1.0
  %v2690 = vadd.f32 %v2682, 1.0
  %v2691 = vrcp.pop %v2683
  %v2692 = vmul.f32 1.0, %v2691
  %v2693 = vrcp.pop %v2684
  %v2694 = vmul.f32 1.0, %v2693
  %v2695 = vrcp.pop %v2685
  %v2696 = vmul.f32 1.0, %v2695
  %v2697 = vrcp.pop %v2686
  %v2698 = vmul.f32 1.0, %v2697
  %v2699 = vrcp.pop %v2687
  %v2700 = vmul.f32 1.0, %v2699
  %v2701 = vrcp.pop %v2688
  %v2702 = vmul.f32 1.0, %v2701
  %v2703 = vrcp.pop %v2689
  %v2704 = vmul.f32 1.0, %v2703
  %v2705 = vrcp.pop %v2690
  %v2706 = vmul.f32 1.0, %v2705
  %v2707 = vtanh.pop %v2581
  %v2708 = vtanh.pop %v2585
  %v2709 = vtanh.pop %v2589
  %v2710 = vtanh.pop %v2593
  %v2711 = vtanh.pop %v2597
  %v2712 = vtanh.pop %v2601
  %v2713 = vtanh.pop %v2605
  %v2714 = vtanh.pop %v2609
  %v2715 = vxor.u32 %v2582, 2147483648
  %v2716 = vxor.u32 %v2586, 2147483648
  %v2717 = vxor.u32 %v2590, 2147483648
  %v2718 = vxor.u32 %v2594, 2147483648
  %v2719 = vxor.u32 %v2598, 2147483648
  %v2720 = vxor.u32 %v2602, 2147483648
  %v2721 = vxor.u32 %v2606, 2147483648
  %v2722 = vxor.u32 %v2610, 2147483648
  %v2723 = vmul.f32 %v2715, 1.442695
  %v2724 = vpow.pop %v2723
  %v2725 = vmul.f32 %v2716, 1.442695
  %v2726 = vpow.pop %v2725
  %v2727 = vmul.f32 %v2717, 1.442695
  %v2728 = vpow.pop %v2727
  %v2729 = vmul.f32 %v2718, 1.442695
  %v2730 = vpow.pop %v2729
  %v2731 = vmul.f32 %v2719, 1.442695
  %v2732 = vpow.pop %v2731
  %v2733 = vmul.f32 %v2720, 1.442695
  %v2734 = vpow.pop %v2733
  %v2735 = vmul.f32 %v2721, 1.442695
  %v2736 = vpow.pop %v2735
  %v2737 = vmul.f32 %v2722, 1.442695
  %v2738 = vpow.pop %v2737
  %v2739 = vadd.f32 %v2724, 1.0
  %v2740 = vadd.f32 %v2726, 1.0
  %v2741 = vadd.f32 %v2728, 1.0
  %v2742 = vadd.f32 %v2730, 1.0
  %v2743 = vadd.f32 %v2732, 1.0
  %v2744 = vadd.f32 %v2734, 1.0
  %v2745 = vadd.f32 %v2736, 1.0
  %v2746 = vadd.f32 %v2738, 1.0
  %v2747 = vrcp.pop %v2739
  %v2748 = vmul.f32 1.0, %v2747
  %v2749 = vrcp.pop %v2740
  %v2750 = vmul.f32 1.0, %v2749
  %v2751 = vrcp.pop %v2741
  %v2752 = vmul.f32 1.0, %v2751
  %v2753 = vrcp.pop %v2742
  %v2754 = vmul.f32 1.0, %v2753
  %v2755 = vrcp.pop %v2743
  %v2756 = vmul.f32 1.0, %v2755
  %v2757 = vrcp.pop %v2744
  %v2758 = vmul.f32 1.0, %v2757
  %v2759 = vrcp.pop %v2745
  %v2760 = vmul.f32 1.0, %v2759
  %v2761 = vrcp.pop %v2746
  %v2762 = vmul.f32 1.0, %v2761
  %v2771 = vrot.slane %v2369, 7
  %v2772 = vrot.slane %v2370, 7
  %v2773 = vrot.slane %v2371, 7
  %v2774 = vrot.slane %v2372, 7
  %v2775 = vrot.slane %v2373, 7
  %v2776 = vrot.slane %v2374, 7
  %v2777 = vrot.slane %v2375, 7
  %v2778 = vrot.slane %v2376, 7
  %v2787 = vmul.f32 %v2692, %v2771
  %v2788 = vmul.f32 %v2694, %v2772
  %v2789 = vmul.f32 %v2696, %v2773
  %v2790 = vmul.f32 %v2698, %v2774
  %v2791 = vmul.f32 %v2700, %v2775
  %v2792 = vmul.f32 %v2702, %v2776
  %v2793 = vmul.f32 %v2704, %v2777
  %v2794 = vmul.f32 %v2706, %v2778
  %v2795 = vmul.f32 %v2644, %v2707
  %v2796 = vmul.f32 %v2646, %v2708
  %v2797 = vmul.f32 %v2648, %v2709
  %v2798 = vmul.f32 %v2650, %v2710
  %v2799 = vmul.f32 %v2652, %v2711
  %v2800 = vmul.f32 %v2654, %v2712
  %v2801 = vmul.f32 %v2656, %v2713
  %v2802 = vmul.f32 %v2658, %v2714
  %v2803 = vadd.f32 %v2787, %v2795
  %v2804 = vadd.f32 %v2788, %v2796
  %v2805 = vadd.f32 %v2789, %v2797
  %v2806 = vadd.f32 %v2790, %v2798
  %v2807 = vadd.f32 %v2791, %v2799
  %v2808 = vadd.f32 %v2792, %v2800
  %v2809 = vadd.f32 %v2793, %v2801
  %v2810 = vadd.f32 %v2794, %v2802
  %v2811 = vtanh.pop %v2803
  %v2812 = vtanh.pop %v2804
  %v2813 = vtanh.pop %v2805
  %v2814 = vtanh.pop %v2806
  %v2815 = vtanh.pop %v2807
  %v2816 = vtanh.pop %v2808
  %v2817 = vtanh.pop %v2809
  %v2818 = vtanh.pop %v2810
  %v2819 = vmul.f32 %v2748, %v2811
  %v2820 = vmul.f32 %v2750, %v2812
  %v2821 = vmul.f32 %v2752, %v2813
  %v2822 = vmul.f32 %v2754, %v2814
  %v2823 = vmul.f32 %v2756, %v2815
  %v2824 = vmul.f32 %v2758, %v2816
  %v2825 = vmul.f32 %v2760, %v2817
  %v2826 = vmul.f32 %v2762, %v2818
  %v2827 = vpack.c.bf16 %v2819, %v2819
  %v2828 = vpack.c.bf16 %v2820, %v2820
  %v2829 = vpack.c.bf16 %v2821, %v2821
  %v2830 = vpack.c.bf16 %v2822, %v2822
  %v2831 = vpack.c.bf16 %v2823, %v2823
  %v2832 = vpack.c.bf16 %v2824, %v2824
  %v2833 = vpack.c.bf16 %v2825, %v2825
  %v2834 = vpack.c.bf16 %v2826, %v2826
  %v2843 = vunpack.c.l.b16 %v2827
  %v2844 = vunpack.c.l.b16 %v2828
  %v2845 = vunpack.c.l.b16 %v2829
  %v2846 = vunpack.c.l.b16 %v2830
  %v2847 = vunpack.c.l.b16 %v2831
  %v2848 = vunpack.c.l.b16 %v2832
  %v2849 = vunpack.c.l.b16 %v2833
  %v2850 = vunpack.c.l.b16 %v2834
  %v2851 = vrot.slane %v2843, 5
  %v2852 = vrot.slane %v2844, 4
  %v2853 = vsel %vm675, %v2852, %v2851
  %v2854 = vrot.slane %v2845, 3
  %v2855 = vsel %vm678, %v2854, %v2853
  %v2856 = vrot.slane %v2846, 2
  %v2857 = vsel %vm681, %v2856, %v2855
  %v2858 = vrot.slane %v2847, 1
  %v2859 = vsel %vm684, %v2858, %v2857
  %v2860 = vsel %vm687, %v2848, %v2859
  %v2861 = vrot.slane %v2849, 7
  %v2862 = vsel %vm690, %v2861, %v2860
  %v2863 = vrot.slane %v2850, 6
  %v2864 = vsel %vm693, %v2863, %v2862
  %v2865 = vpack.c.b16 %v2864, %v2864
  %2867 = vmatprep.subr.bf16.mxu0 %v201
  %2868 = vmatpush1.bf16.msra.mxu0 %v200
  %2869 = vmatprep.subr.bf16.mxu0 %v205
  %2870 = vmatpush1.bf16.msra.mxu0 %v204
  %2871 = vmatprep.subr.bf16.mxu0 %v209
  %2872 = vmatpush1.bf16.msra.mxu0 %v208
  %2873 = vmatprep.subr.bf16.mxu0 %v213
  %2874 = vmatpush1.bf16.msra.mxu0 %v212
  %2875 = vmatprep.subr.bf16.mxu0 %v217
  %2876 = vmatpush1.bf16.msra.mxu0 %v216
  %2877 = vmatprep.subr.bf16.mxu0 %v221
  %2878 = vmatpush1.bf16.msra.mxu0 %v220
  %2879 = vmatprep.subr.bf16.mxu0 %v225
  %2880 = vmatpush1.bf16.msra.mxu0 %v224
  %2881 = vmatprep.subr.bf16.mxu0 %v229
  %2882 = vmatpush1.bf16.msra.mxu0 %v228
  %2883 = vmatprep.subr.bf16.mxu0 0
  %2884 = vmatpush1.bf16.msra.mxu0 0
  %2885 = vmatprep.subr.bf16.mxu0 0
  %2886 = vmatpush1.bf16.msra.mxu0 0
  %2887 = vmatprep.subr.bf16.mxu0 0
  %2888 = vmatpush1.bf16.msra.mxu0 0
  %2889 = vmatprep.subr.bf16.mxu0 0
  %2890 = vmatpush1.bf16.msra.mxu0 0
  %2891 = vmatprep.subr.bf16.mxu0 0
  %2892 = vmatpush1.bf16.msra.mxu0 0
  %2893 = vmatprep.subr.bf16.mxu0 0
  %2894 = vmatpush1.bf16.msra.mxu0 0
  %2895 = vmatprep.subr.bf16.mxu0 0
  %2896 = vmatpush1.bf16.msra.mxu0 0
  %2897 = vmatprep.subr.bf16.mxu0 0
  %2898 = vmatpush1.bf16.msra.mxu0 0
  %2899 = vmatprep.mubr.bf16.mxu0 0
  %2900 = vmatmul.mubr.bf16.gmra.mrb[0].mxu0 %v2865
  %v2901 = vpop.f32.mrb[0].mxu0
  %v2902 = vadd.f32 0.0, %v2901
  %v2903 = vpop.f32.mrb[0].mxu0
  %v2904 = vadd.f32 0.0, %v2903
  %v2905 = vpop.f32.mrb[0].mxu0
  %v2906 = vpop.f32.mrb[0].mxu0
  %2907 = vdwg.mxu0
  %2908 = vmatprep.subr.bf16.mxu0 %v203
  %2909 = vmatpush1.bf16.msra.mxu0 %v202
  %2910 = vmatprep.subr.bf16.mxu0 %v207
  %2911 = vmatpush1.bf16.msra.mxu0 %v206
  %2912 = vmatprep.subr.bf16.mxu0 %v211
  %2913 = vmatpush1.bf16.msra.mxu0 %v210
  %2914 = vmatprep.subr.bf16.mxu0 %v215
  %2915 = vmatpush1.bf16.msra.mxu0 %v214
  %2916 = vmatprep.subr.bf16.mxu0 %v219
  %2917 = vmatpush1.bf16.msra.mxu0 %v218
  %2918 = vmatprep.subr.bf16.mxu0 %v223
  %2919 = vmatpush1.bf16.msra.mxu0 %v222
  %2920 = vmatprep.subr.bf16.mxu0 %v227
  %2921 = vmatpush1.bf16.msra.mxu0 %v226
  %2922 = vmatprep.subr.bf16.mxu0 %v231
  %2923 = vmatpush1.bf16.msra.mxu0 %v230
  %2924 = vmatprep.subr.bf16.mxu0 0
  %2925 = vmatpush1.bf16.msra.mxu0 0
  %2926 = vmatprep.subr.bf16.mxu0 0
  %2927 = vmatpush1.bf16.msra.mxu0 0
  %2928 = vmatprep.subr.bf16.mxu0 0
  %2929 = vmatpush1.bf16.msra.mxu0 0
  %2930 = vmatprep.subr.bf16.mxu0 0
  %2931 = vmatpush1.bf16.msra.mxu0 0
  %2932 = vmatprep.subr.bf16.mxu0 0
  %2933 = vmatpush1.bf16.msra.mxu0 0
  %2934 = vmatprep.subr.bf16.mxu0 0
  %2935 = vmatpush1.bf16.msra.mxu0 0
  %2936 = vmatprep.subr.bf16.mxu0 0
  %2937 = vmatpush1.bf16.msra.mxu0 0
  %2938 = vmatprep.subr.bf16.mxu0 0
  %2939 = vmatpush1.bf16.msra.mxu0 0
  %2940 = vmatprep.mubr.bf16.mxu0 0
  %2941 = vmatmul.mubr.bf16.gmra.mrb[0].mxu0 %v2865
  %v2942 = vpop.f32.mrb[0].mxu0
  %v2943 = vadd.f32 0.0, %v2942
  %v2944 = vpop.f32.mrb[0].mxu0
  %v2945 = vadd.f32 0.0, %v2944
  %v2946 = vpop.f32.mrb[0].mxu0
  %v2947 = vpop.f32.mrb[0].mxu0
  %2948 = vdwg.mxu0
  %v2953 = vrot.slane %v2902, 2
  %v2954 = vrot.slane %v2904, 2
  %v2955 = vrot.slane %v2943, 2
  %v2956 = vrot.slane %v2945, 2
  %v2957 = vrot.slane %v2902, 3
  %v2958 = vrot.slane %v2904, 3
  %v2959 = vrot.slane %v2943, 3
  %v2960 = vrot.slane %v2945, 3
  %v2961 = vrot.slane %v2902, 4
  %v2962 = vrot.slane %v2904, 4
  %v2963 = vrot.slane %v2943, 4
  %v2964 = vrot.slane %v2945, 4
  %v2965 = vrot.slane %v2902, 5
  %v2966 = vrot.slane %v2904, 5
  %v2967 = vrot.slane %v2943, 5
  %v2968 = vrot.slane %v2945, 5
  %v2969 = vrot.slane %v2902, 6
  %v2970 = vrot.slane %v2904, 6
  %v2971 = vrot.slane %v2943, 6
  %v2972 = vrot.slane %v2945, 6
  %v2973 = vrot.slane %v2902, 7
  %v2974 = vrot.slane %v2904, 7
  %v2975 = vrot.slane %v2943, 7
  %v2976 = vrot.slane %v2945, 7
  %v2977 = vrot.slane %v2902, 1
  %v2978 = vrot.slane %v2904, 1
  %v2979 = vrot.slane %v2943, 1
  %v2980 = vrot.slane %v2945, 1
  %v3013 = vadd.f32 %v71, %v2953
  %v3014 = vadd.f32 %v72, %v2954
  %v3015 = vadd.f32 %v73, %v2955
  %v3016 = vadd.f32 %v74, %v2956
  %v3017 = vadd.f32 %v75, %v2957
  %v3018 = vadd.f32 %v76, %v2958
  %v3019 = vadd.f32 %v77, %v2959
  %v3020 = vadd.f32 %v78, %v2960
  %v3021 = vadd.f32 %v79, %v2961
  %v3022 = vadd.f32 %v80, %v2962
  %v3023 = vadd.f32 %v81, %v2963
  %v3024 = vadd.f32 %v82, %v2964
  %v3025 = vadd.f32 %v83, %v2965
  %v3026 = vadd.f32 %v84, %v2966
  %v3027 = vadd.f32 %v85, %v2967
  %v3028 = vadd.f32 %v86, %v2968
  %v3029 = vadd.f32 %v87, %v2969
  %v3030 = vadd.f32 %v88, %v2970
  %v3031 = vadd.f32 %v89, %v2971
  %v3032 = vadd.f32 %v90, %v2972
  %v3033 = vadd.f32 %v91, %v2973
  %v3034 = vadd.f32 %v92, %v2974
  %v3035 = vadd.f32 %v93, %v2975
  %v3036 = vadd.f32 %v94, %v2976
  %v3037 = vadd.f32 %v95, %v2902
  %v3038 = vadd.f32 %v96, %v2904
  %v3039 = vadd.f32 %v97, %v2943
  %v3040 = vadd.f32 %v98, %v2945
  %v3041 = vadd.f32 %v99, %v2977
  %v3042 = vadd.f32 %v100, %v2978
  %v3043 = vadd.f32 %v101, %v2979
  %v3044 = vadd.f32 %v102, %v2980
  %v3045 = vxor.u32 %v3013, 2147483648
  %v3046 = vxor.u32 %v3017, 2147483648
  %v3047 = vxor.u32 %v3021, 2147483648
  %v3048 = vxor.u32 %v3025, 2147483648
  %v3049 = vxor.u32 %v3029, 2147483648
  %v3050 = vxor.u32 %v3033, 2147483648
  %v3051 = vxor.u32 %v3037, 2147483648
  %v3052 = vxor.u32 %v3041, 2147483648
  %v3053 = vmul.f32 %v3045, 1.442695
  %v3054 = vpow.pop %v3053
  %v3055 = vmul.f32 %v3046, 1.442695
  %v3056 = vpow.pop %v3055
  %v3057 = vmul.f32 %v3047, 1.442695
  %v3058 = vpow.pop %v3057
  %v3059 = vmul.f32 %v3048, 1.442695
  %v3060 = vpow.pop %v3059
  %v3061 = vmul.f32 %v3049, 1.442695
  %v3062 = vpow.pop %v3061
  %v3063 = vmul.f32 %v3050, 1.442695
  %v3064 = vpow.pop %v3063
  %v3065 = vmul.f32 %v3051, 1.442695
  %v3066 = vpow.pop %v3065
  %v3067 = vmul.f32 %v3052, 1.442695
  %v3068 = vpow.pop %v3067
  %v3069 = vadd.f32 %v3054, 1.0
  %v3070 = vadd.f32 %v3056, 1.0
  %v3071 = vadd.f32 %v3058, 1.0
  %v3072 = vadd.f32 %v3060, 1.0
  %v3073 = vadd.f32 %v3062, 1.0
  %v3074 = vadd.f32 %v3064, 1.0
  %v3075 = vadd.f32 %v3066, 1.0
  %v3076 = vadd.f32 %v3068, 1.0
  %v3077 = vrcp.pop %v3069
  %v3078 = vmul.f32 1.0, %v3077
  %v3079 = vrcp.pop %v3070
  %v3080 = vmul.f32 1.0, %v3079
  %v3081 = vrcp.pop %v3071
  %v3082 = vmul.f32 1.0, %v3081
  %v3083 = vrcp.pop %v3072
  %v3084 = vmul.f32 1.0, %v3083
  %v3085 = vrcp.pop %v3073
  %v3086 = vmul.f32 1.0, %v3085
  %v3087 = vrcp.pop %v3074
  %v3088 = vmul.f32 1.0, %v3087
  %v3089 = vrcp.pop %v3075
  %v3090 = vmul.f32 1.0, %v3089
  %v3091 = vrcp.pop %v3076
  %v3092 = vmul.f32 1.0, %v3091
  %v3093 = vxor.u32 %v3014, 2147483648
  %v3094 = vxor.u32 %v3018, 2147483648
  %v3095 = vxor.u32 %v3022, 2147483648
  %v3096 = vxor.u32 %v3026, 2147483648
  %v3097 = vxor.u32 %v3030, 2147483648
  %v3098 = vxor.u32 %v3034, 2147483648
  %v3099 = vxor.u32 %v3038, 2147483648
  %v3100 = vxor.u32 %v3042, 2147483648
  %v3101 = vmul.f32 %v3093, 1.442695
  %v3102 = vpow.pop %v3101
  %v3103 = vmul.f32 %v3094, 1.442695
  %v3104 = vpow.pop %v3103
  %v3105 = vmul.f32 %v3095, 1.442695
  %v3106 = vpow.pop %v3105
  %v3107 = vmul.f32 %v3096, 1.442695
  %v3108 = vpow.pop %v3107
  %v3109 = vmul.f32 %v3097, 1.442695
  %v3110 = vpow.pop %v3109
  %v3111 = vmul.f32 %v3098, 1.442695
  %v3112 = vpow.pop %v3111
  %v3113 = vmul.f32 %v3099, 1.442695
  %v3114 = vpow.pop %v3113
  %v3115 = vmul.f32 %v3100, 1.442695
  %v3116 = vpow.pop %v3115
  %v3117 = vadd.f32 %v3102, 1.0
  %v3118 = vadd.f32 %v3104, 1.0
  %v3119 = vadd.f32 %v3106, 1.0
  %v3120 = vadd.f32 %v3108, 1.0
  %v3121 = vadd.f32 %v3110, 1.0
  %v3122 = vadd.f32 %v3112, 1.0
  %v3123 = vadd.f32 %v3114, 1.0
  %v3124 = vadd.f32 %v3116, 1.0
  %v3125 = vrcp.pop %v3117
  %v3126 = vmul.f32 1.0, %v3125
  %v3127 = vrcp.pop %v3118
  %v3128 = vmul.f32 1.0, %v3127
  %v3129 = vrcp.pop %v3119
  %v3130 = vmul.f32 1.0, %v3129
  %v3131 = vrcp.pop %v3120
  %v3132 = vmul.f32 1.0, %v3131
  %v3133 = vrcp.pop %v3121
  %v3134 = vmul.f32 1.0, %v3133
  %v3135 = vrcp.pop %v3122
  %v3136 = vmul.f32 1.0, %v3135
  %v3137 = vrcp.pop %v3123
  %v3138 = vmul.f32 1.0, %v3137
  %v3139 = vrcp.pop %v3124
  %v3140 = vmul.f32 1.0, %v3139
  %v3141 = vtanh.pop %v3015
  %v3142 = vtanh.pop %v3019
  %v3143 = vtanh.pop %v3023
  %v3144 = vtanh.pop %v3027
  %v3145 = vtanh.pop %v3031
  %v3146 = vtanh.pop %v3035
  %v3147 = vtanh.pop %v3039
  %v3148 = vtanh.pop %v3043
  %v3149 = vxor.u32 %v3016, 2147483648
  %v3150 = vxor.u32 %v3020, 2147483648
  %v3151 = vxor.u32 %v3024, 2147483648
  %v3152 = vxor.u32 %v3028, 2147483648
  %v3153 = vxor.u32 %v3032, 2147483648
  %v3154 = vxor.u32 %v3036, 2147483648
  %v3155 = vxor.u32 %v3040, 2147483648
  %v3156 = vxor.u32 %v3044, 2147483648
  %v3157 = vmul.f32 %v3149, 1.442695
  %v3158 = vpow.pop %v3157
  %v3159 = vmul.f32 %v3150, 1.442695
  %v3160 = vpow.pop %v3159
  %v3161 = vmul.f32 %v3151, 1.442695
  %v3162 = vpow.pop %v3161
  %v3163 = vmul.f32 %v3152, 1.442695
  %v3164 = vpow.pop %v3163
  %v3165 = vmul.f32 %v3153, 1.442695
  %v3166 = vpow.pop %v3165
  %v3167 = vmul.f32 %v3154, 1.442695
  %v3168 = vpow.pop %v3167
  %v3169 = vmul.f32 %v3155, 1.442695
  %v3170 = vpow.pop %v3169
  %v3171 = vmul.f32 %v3156, 1.442695
  %v3172 = vpow.pop %v3171
  %v3173 = vadd.f32 %v3158, 1.0
  %v3174 = vadd.f32 %v3160, 1.0
  %v3175 = vadd.f32 %v3162, 1.0
  %v3176 = vadd.f32 %v3164, 1.0
  %v3177 = vadd.f32 %v3166, 1.0
  %v3178 = vadd.f32 %v3168, 1.0
  %v3179 = vadd.f32 %v3170, 1.0
  %v3180 = vadd.f32 %v3172, 1.0
  %v3181 = vrcp.pop %v3173
  %v3182 = vmul.f32 1.0, %v3181
  %v3183 = vrcp.pop %v3174
  %v3184 = vmul.f32 1.0, %v3183
  %v3185 = vrcp.pop %v3175
  %v3186 = vmul.f32 1.0, %v3185
  %v3187 = vrcp.pop %v3176
  %v3188 = vmul.f32 1.0, %v3187
  %v3189 = vrcp.pop %v3177
  %v3190 = vmul.f32 1.0, %v3189
  %v3191 = vrcp.pop %v3178
  %v3192 = vmul.f32 1.0, %v3191
  %v3193 = vrcp.pop %v3179
  %v3194 = vmul.f32 1.0, %v3193
  %v3195 = vrcp.pop %v3180
  %v3196 = vmul.f32 1.0, %v3195
  %v3205 = vrot.slane %v2803, 7
  %v3206 = vrot.slane %v2804, 7
  %v3207 = vrot.slane %v2805, 7
  %v3208 = vrot.slane %v2806, 7
  %v3209 = vrot.slane %v2807, 7
  %v3210 = vrot.slane %v2808, 7
  %v3211 = vrot.slane %v2809, 7
  %v3212 = vrot.slane %v2810, 7
  %v3221 = vmul.f32 %v3126, %v3205
  %v3222 = vmul.f32 %v3128, %v3206
  %v3223 = vmul.f32 %v3130, %v3207
  %v3224 = vmul.f32 %v3132, %v3208
  %v3225 = vmul.f32 %v3134, %v3209
  %v3226 = vmul.f32 %v3136, %v3210
  %v3227 = vmul.f32 %v3138, %v3211
  %v3228 = vmul.f32 %v3140, %v3212
  %v3229 = vmul.f32 %v3078, %v3141
  %v3230 = vmul.f32 %v3080, %v3142
  %v3231 = vmul.f32 %v3082, %v3143
  %v3232 = vmul.f32 %v3084, %v3144
  %v3233 = vmul.f32 %v3086, %v3145
  %v3234 = vmul.f32 %v3088, %v3146
  %v3235 = vmul.f32 %v3090, %v3147
  %v3236 = vmul.f32 %v3092, %v3148
  %v3237 = vadd.f32 %v3221, %v3229
  %v3238 = vadd.f32 %v3222, %v3230
  %v3239 = vadd.f32 %v3223, %v3231
  %v3240 = vadd.f32 %v3224, %v3232
  %v3241 = vadd.f32 %v3225, %v3233
  %v3242 = vadd.f32 %v3226, %v3234
  %v3243 = vadd.f32 %v3227, %v3235
  %v3244 = vadd.f32 %v3228, %v3236
  %v3245 = vtanh.pop %v3237
  %v3246 = vtanh.pop %v3238
  %v3247 = vtanh.pop %v3239
  %v3248 = vtanh.pop %v3240
  %v3249 = vtanh.pop %v3241
  %v3250 = vtanh.pop %v3242
  %v3251 = vtanh.pop %v3243
  %v3252 = vtanh.pop %v3244
  %v3253 = vmul.f32 %v3182, %v3245
  %v3254 = vmul.f32 %v3184, %v3246
  %v3255 = vmul.f32 %v3186, %v3247
  %v3256 = vmul.f32 %v3188, %v3248
  %v3257 = vmul.f32 %v3190, %v3249
  %v3258 = vmul.f32 %v3192, %v3250
  %v3259 = vmul.f32 %v3194, %v3251
  %v3260 = vmul.f32 %v3196, %v3252
  %v3261 = vpack.c.bf16 %v3253, %v3253
  %v3262 = vpack.c.bf16 %v3254, %v3254
  %v3263 = vpack.c.bf16 %v3255, %v3255
  %v3264 = vpack.c.bf16 %v3256, %v3256
  %v3265 = vpack.c.bf16 %v3257, %v3257
  %v3266 = vpack.c.bf16 %v3258, %v3258
  %v3267 = vpack.c.bf16 %v3259, %v3259
  %v3268 = vpack.c.bf16 %v3260, %v3260
  %v3277 = vunpack.c.l.b16 %v3261
  %v3278 = vunpack.c.l.b16 %v3262
  %v3279 = vunpack.c.l.b16 %v3263
  %v3280 = vunpack.c.l.b16 %v3264
  %v3281 = vunpack.c.l.b16 %v3265
  %v3282 = vunpack.c.l.b16 %v3266
  %v3283 = vunpack.c.l.b16 %v3267
  %v3284 = vunpack.c.l.b16 %v3268
  %v3285 = vrot.slane %v3277, 6
  %v3286 = vrot.slane %v3278, 5
  %v3287 = vsel %vm675, %v3286, %v3285
  %v3288 = vrot.slane %v3279, 4
  %v3289 = vsel %vm678, %v3288, %v3287
  %v3290 = vrot.slane %v3280, 3
  %v3291 = vsel %vm681, %v3290, %v3289
  %v3292 = vrot.slane %v3281, 2
  %v3293 = vsel %vm684, %v3292, %v3291
  %v3294 = vrot.slane %v3282, 1
  %v3295 = vsel %vm687, %v3294, %v3293
  %v3296 = vsel %vm690, %v3283, %v3295
  %v3297 = vrot.slane %v3284, 7
  %v3298 = vsel %vm693, %v3297, %v3296
  %v3299 = vpack.c.b16 %v3298, %v3298
  %3301 = vmatprep.subr.bf16.mxu0 %v201
  %3302 = vmatpush1.bf16.msra.mxu0 %v200
  %3303 = vmatprep.subr.bf16.mxu0 %v205
  %3304 = vmatpush1.bf16.msra.mxu0 %v204
  %3305 = vmatprep.subr.bf16.mxu0 %v209
  %3306 = vmatpush1.bf16.msra.mxu0 %v208
  %3307 = vmatprep.subr.bf16.mxu0 %v213
  %3308 = vmatpush1.bf16.msra.mxu0 %v212
  %3309 = vmatprep.subr.bf16.mxu0 %v217
  %3310 = vmatpush1.bf16.msra.mxu0 %v216
  %3311 = vmatprep.subr.bf16.mxu0 %v221
  %3312 = vmatpush1.bf16.msra.mxu0 %v220
  %3313 = vmatprep.subr.bf16.mxu0 %v225
  %3314 = vmatpush1.bf16.msra.mxu0 %v224
  %3315 = vmatprep.subr.bf16.mxu0 %v229
  %3316 = vmatpush1.bf16.msra.mxu0 %v228
  %3317 = vmatprep.subr.bf16.mxu0 0
  %3318 = vmatpush1.bf16.msra.mxu0 0
  %3319 = vmatprep.subr.bf16.mxu0 0
  %3320 = vmatpush1.bf16.msra.mxu0 0
  %3321 = vmatprep.subr.bf16.mxu0 0
  %3322 = vmatpush1.bf16.msra.mxu0 0
  %3323 = vmatprep.subr.bf16.mxu0 0
  %3324 = vmatpush1.bf16.msra.mxu0 0
  %3325 = vmatprep.subr.bf16.mxu0 0
  %3326 = vmatpush1.bf16.msra.mxu0 0
  %3327 = vmatprep.subr.bf16.mxu0 0
  %3328 = vmatpush1.bf16.msra.mxu0 0
  %3329 = vmatprep.subr.bf16.mxu0 0
  %3330 = vmatpush1.bf16.msra.mxu0 0
  %3331 = vmatprep.subr.bf16.mxu0 0
  %3332 = vmatpush1.bf16.msra.mxu0 0
  %3333 = vmatprep.mubr.bf16.mxu0 0
  %3334 = vmatmul.mubr.bf16.gmra.mrb[0].mxu0 %v3299
  %v3335 = vpop.f32.mrb[0].mxu0
  %v3336 = vadd.f32 0.0, %v3335
  %v3337 = vpop.f32.mrb[0].mxu0
  %v3338 = vadd.f32 0.0, %v3337
  %v3339 = vpop.f32.mrb[0].mxu0
  %v3340 = vpop.f32.mrb[0].mxu0
  %3341 = vdwg.mxu0
  %3342 = vmatprep.subr.bf16.mxu0 %v203
  %3343 = vmatpush1.bf16.msra.mxu0 %v202
  %3344 = vmatprep.subr.bf16.mxu0 %v207
  %3345 = vmatpush1.bf16.msra.mxu0 %v206
  %3346 = vmatprep.subr.bf16.mxu0 %v211
  %3347 = vmatpush1.bf16.msra.mxu0 %v210
  %3348 = vmatprep.subr.bf16.mxu0 %v215
  %3349 = vmatpush1.bf16.msra.mxu0 %v214
  %3350 = vmatprep.subr.bf16.mxu0 %v219
  %3351 = vmatpush1.bf16.msra.mxu0 %v218
  %3352 = vmatprep.subr.bf16.mxu0 %v223
  %3353 = vmatpush1.bf16.msra.mxu0 %v222
  %3354 = vmatprep.subr.bf16.mxu0 %v227
  %3355 = vmatpush1.bf16.msra.mxu0 %v226
  %3356 = vmatprep.subr.bf16.mxu0 %v231
  %3357 = vmatpush1.bf16.msra.mxu0 %v230
  %3358 = vmatprep.subr.bf16.mxu0 0
  %3359 = vmatpush1.bf16.msra.mxu0 0
  %3360 = vmatprep.subr.bf16.mxu0 0
  %3361 = vmatpush1.bf16.msra.mxu0 0
  %3362 = vmatprep.subr.bf16.mxu0 0
  %3363 = vmatpush1.bf16.msra.mxu0 0
  %3364 = vmatprep.subr.bf16.mxu0 0
  %3365 = vmatpush1.bf16.msra.mxu0 0
  %3366 = vmatprep.subr.bf16.mxu0 0
  %3367 = vmatpush1.bf16.msra.mxu0 0
  %3368 = vmatprep.subr.bf16.mxu0 0
  %3369 = vmatpush1.bf16.msra.mxu0 0
  %3370 = vmatprep.subr.bf16.mxu0 0
  %3371 = vmatpush1.bf16.msra.mxu0 0
  %3372 = vmatprep.subr.bf16.mxu0 0
  %3373 = vmatpush1.bf16.msra.mxu0 0
  %3374 = vmatprep.mubr.bf16.mxu0 0
  %3375 = vmatmul.mubr.bf16.gmra.mrb[0].mxu0 %v3299
  %v3376 = vpop.f32.mrb[0].mxu0
  %v3377 = vadd.f32 0.0, %v3376
  %v3378 = vpop.f32.mrb[0].mxu0
  %v3379 = vadd.f32 0.0, %v3378
  %v3380 = vpop.f32.mrb[0].mxu0
  %v3381 = vpop.f32.mrb[0].mxu0
  %3382 = vdwg.mxu0
  %v3387 = vrot.slane %v3336, 1
  %v3388 = vrot.slane %v3338, 1
  %v3389 = vrot.slane %v3377, 1
  %v3390 = vrot.slane %v3379, 1
  %v3391 = vrot.slane %v3336, 2
  %v3392 = vrot.slane %v3338, 2
  %v3393 = vrot.slane %v3377, 2
  %v3394 = vrot.slane %v3379, 2
  %v3395 = vrot.slane %v3336, 3
  %v3396 = vrot.slane %v3338, 3
  %v3397 = vrot.slane %v3377, 3
  %v3398 = vrot.slane %v3379, 3
  %v3399 = vrot.slane %v3336, 4
  %v3400 = vrot.slane %v3338, 4
  %v3401 = vrot.slane %v3377, 4
  %v3402 = vrot.slane %v3379, 4
  %v3403 = vrot.slane %v3336, 5
  %v3404 = vrot.slane %v3338, 5
  %v3405 = vrot.slane %v3377, 5
  %v3406 = vrot.slane %v3379, 5
  %v3407 = vrot.slane %v3336, 6
  %v3408 = vrot.slane %v3338, 6
  %v3409 = vrot.slane %v3377, 6
  %v3410 = vrot.slane %v3379, 6
  %v3411 = vrot.slane %v3336, 7
  %v3412 = vrot.slane %v3338, 7
  %v3413 = vrot.slane %v3377, 7
  %v3414 = vrot.slane %v3379, 7
  %v3447 = vadd.f32 %v71, %v3387
  %v3448 = vadd.f32 %v72, %v3388
  %v3449 = vadd.f32 %v73, %v3389
  %v3450 = vadd.f32 %v74, %v3390
  %v3451 = vadd.f32 %v75, %v3391
  %v3452 = vadd.f32 %v76, %v3392
  %v3453 = vadd.f32 %v77, %v3393
  %v3454 = vadd.f32 %v78, %v3394
  %v3455 = vadd.f32 %v79, %v3395
  %v3456 = vadd.f32 %v80, %v3396
  %v3457 = vadd.f32 %v81, %v3397
  %v3458 = vadd.f32 %v82, %v3398
  %v3459 = vadd.f32 %v83, %v3399
  %v3460 = vadd.f32 %v84, %v3400
  %v3461 = vadd.f32 %v85, %v3401
  %v3462 = vadd.f32 %v86, %v3402
  %v3463 = vadd.f32 %v87, %v3403
  %v3464 = vadd.f32 %v88, %v3404
  %v3465 = vadd.f32 %v89, %v3405
  %v3466 = vadd.f32 %v90, %v3406
  %v3467 = vadd.f32 %v91, %v3407
  %v3468 = vadd.f32 %v92, %v3408
  %v3469 = vadd.f32 %v93, %v3409
  %v3470 = vadd.f32 %v94, %v3410
  %v3471 = vadd.f32 %v95, %v3411
  %v3472 = vadd.f32 %v96, %v3412
  %v3473 = vadd.f32 %v97, %v3413
  %v3474 = vadd.f32 %v98, %v3414
  %v3475 = vadd.f32 %v99, %v3336
  %v3476 = vadd.f32 %v100, %v3338
  %v3477 = vadd.f32 %v101, %v3377
  %v3478 = vadd.f32 %v102, %v3379
  %v3479 = vxor.u32 %v3447, 2147483648
  %v3480 = vxor.u32 %v3451, 2147483648
  %v3481 = vxor.u32 %v3455, 2147483648
  %v3482 = vxor.u32 %v3459, 2147483648
  %v3483 = vxor.u32 %v3463, 2147483648
  %v3484 = vxor.u32 %v3467, 2147483648
  %v3485 = vxor.u32 %v3471, 2147483648
  %v3486 = vxor.u32 %v3475, 2147483648
  %v3487 = vmul.f32 %v3479, 1.442695
  %v3488 = vpow.pop %v3487
  %v3489 = vmul.f32 %v3480, 1.442695
  %v3490 = vpow.pop %v3489
  %v3491 = vmul.f32 %v3481, 1.442695
  %v3492 = vpow.pop %v3491
  %v3493 = vmul.f32 %v3482, 1.442695
  %v3494 = vpow.pop %v3493
  %v3495 = vmul.f32 %v3483, 1.442695
  %v3496 = vpow.pop %v3495
  %v3497 = vmul.f32 %v3484, 1.442695
  %v3498 = vpow.pop %v3497
  %v3499 = vmul.f32 %v3485, 1.442695
  %v3500 = vpow.pop %v3499
  %v3501 = vmul.f32 %v3486, 1.442695
  %v3502 = vpow.pop %v3501
  %v3503 = vadd.f32 %v3488, 1.0
  %v3504 = vadd.f32 %v3490, 1.0
  %v3505 = vadd.f32 %v3492, 1.0
  %v3506 = vadd.f32 %v3494, 1.0
  %v3507 = vadd.f32 %v3496, 1.0
  %v3508 = vadd.f32 %v3498, 1.0
  %v3509 = vadd.f32 %v3500, 1.0
  %v3510 = vadd.f32 %v3502, 1.0
  %v3511 = vrcp.pop %v3503
  %v3512 = vmul.f32 1.0, %v3511
  %v3513 = vrcp.pop %v3504
  %v3514 = vmul.f32 1.0, %v3513
  %v3515 = vrcp.pop %v3505
  %v3516 = vmul.f32 1.0, %v3515
  %v3517 = vrcp.pop %v3506
  %v3518 = vmul.f32 1.0, %v3517
  %v3519 = vrcp.pop %v3507
  %v3520 = vmul.f32 1.0, %v3519
  %v3521 = vrcp.pop %v3508
  %v3522 = vmul.f32 1.0, %v3521
  %v3523 = vrcp.pop %v3509
  %v3524 = vmul.f32 1.0, %v3523
  %v3525 = vrcp.pop %v3510
  %v3526 = vmul.f32 1.0, %v3525
  %v3527 = vxor.u32 %v3448, 2147483648
  %v3528 = vxor.u32 %v3452, 2147483648
  %v3529 = vxor.u32 %v3456, 2147483648
  %v3530 = vxor.u32 %v3460, 2147483648
  %v3531 = vxor.u32 %v3464, 2147483648
  %v3532 = vxor.u32 %v3468, 2147483648
  %v3533 = vxor.u32 %v3472, 2147483648
  %v3534 = vxor.u32 %v3476, 2147483648
  %v3535 = vmul.f32 %v3527, 1.442695
  %v3536 = vpow.pop %v3535
  %v3537 = vmul.f32 %v3528, 1.442695
  %v3538 = vpow.pop %v3537
  %v3539 = vmul.f32 %v3529, 1.442695
  %v3540 = vpow.pop %v3539
  %v3541 = vmul.f32 %v3530, 1.442695
  %v3542 = vpow.pop %v3541
  %v3543 = vmul.f32 %v3531, 1.442695
  %v3544 = vpow.pop %v3543
  %v3545 = vmul.f32 %v3532, 1.442695
  %v3546 = vpow.pop %v3545
  %v3547 = vmul.f32 %v3533, 1.442695
  %v3548 = vpow.pop %v3547
  %v3549 = vmul.f32 %v3534, 1.442695
  %v3550 = vpow.pop %v3549
  %v3551 = vadd.f32 %v3536, 1.0
  %v3552 = vadd.f32 %v3538, 1.0
  %v3553 = vadd.f32 %v3540, 1.0
  %v3554 = vadd.f32 %v3542, 1.0
  %v3555 = vadd.f32 %v3544, 1.0
  %v3556 = vadd.f32 %v3546, 1.0
  %v3557 = vadd.f32 %v3548, 1.0
  %v3558 = vadd.f32 %v3550, 1.0
  %v3559 = vrcp.pop %v3551
  %v3560 = vmul.f32 1.0, %v3559
  %v3561 = vrcp.pop %v3552
  %v3562 = vmul.f32 1.0, %v3561
  %v3563 = vrcp.pop %v3553
  %v3564 = vmul.f32 1.0, %v3563
  %v3565 = vrcp.pop %v3554
  %v3566 = vmul.f32 1.0, %v3565
  %v3567 = vrcp.pop %v3555
  %v3568 = vmul.f32 1.0, %v3567
  %v3569 = vrcp.pop %v3556
  %v3570 = vmul.f32 1.0, %v3569
  %v3571 = vrcp.pop %v3557
  %v3572 = vmul.f32 1.0, %v3571
  %v3573 = vrcp.pop %v3558
  %v3574 = vmul.f32 1.0, %v3573
  %v3575 = vtanh.pop %v3449
  %v3576 = vtanh.pop %v3453
  %v3577 = vtanh.pop %v3457
  %v3578 = vtanh.pop %v3461
  %v3579 = vtanh.pop %v3465
  %v3580 = vtanh.pop %v3469
  %v3581 = vtanh.pop %v3473
  %v3582 = vtanh.pop %v3477
  %v3583 = vxor.u32 %v3450, 2147483648
  %v3584 = vxor.u32 %v3454, 2147483648
  %v3585 = vxor.u32 %v3458, 2147483648
  %v3586 = vxor.u32 %v3462, 2147483648
  %v3587 = vxor.u32 %v3466, 2147483648
  %v3588 = vxor.u32 %v3470, 2147483648
  %v3589 = vxor.u32 %v3474, 2147483648
  %v3590 = vxor.u32 %v3478, 2147483648
  %v3591 = vmul.f32 %v3583, 1.442695
  %v3592 = vpow.pop %v3591
  %v3593 = vmul.f32 %v3584, 1.442695
  %v3594 = vpow.pop %v3593
  %v3595 = vmul.f32 %v3585, 1.442695
  %v3596 = vpow.pop %v3595
  %v3597 = vmul.f32 %v3586, 1.442695
  %v3598 = vpow.pop %v3597
  %v3599 = vmul.f32 %v3587, 1.442695
  %v3600 = vpow.pop %v3599
  %v3601 = vmul.f32 %v3588, 1.442695
  %v3602 = vpow.pop %v3601
  %v3603 = vmul.f32 %v3589, 1.442695
  %v3604 = vpow.pop %v3603
  %v3605 = vmul.f32 %v3590, 1.442695
  %v3606 = vpow.pop %v3605
  %v3607 = vadd.f32 %v3592, 1.0
  %v3608 = vadd.f32 %v3594, 1.0
  %v3609 = vadd.f32 %v3596, 1.0
  %v3610 = vadd.f32 %v3598, 1.0
  %v3611 = vadd.f32 %v3600, 1.0
  %v3612 = vadd.f32 %v3602, 1.0
  %v3613 = vadd.f32 %v3604, 1.0
  %v3614 = vadd.f32 %v3606, 1.0
  %v3615 = vrcp.pop %v3607
  %v3616 = vmul.f32 1.0, %v3615
  %v3617 = vrcp.pop %v3608
  %v3618 = vmul.f32 1.0, %v3617
  %v3619 = vrcp.pop %v3609
  %v3620 = vmul.f32 1.0, %v3619
  %v3621 = vrcp.pop %v3610
  %v3622 = vmul.f32 1.0, %v3621
  %v3623 = vrcp.pop %v3611
  %v3624 = vmul.f32 1.0, %v3623
  %v3625 = vrcp.pop %v3612
  %v3626 = vmul.f32 1.0, %v3625
  %v3627 = vrcp.pop %v3613
  %v3628 = vmul.f32 1.0, %v3627
  %v3629 = vrcp.pop %v3614
  %v3630 = vmul.f32 1.0, %v3629
  %v3639 = vrot.slane %v3237, 7
  %v3640 = vrot.slane %v3238, 7
  %v3641 = vrot.slane %v3239, 7
  %v3642 = vrot.slane %v3240, 7
  %v3643 = vrot.slane %v3241, 7
  %v3644 = vrot.slane %v3242, 7
  %v3645 = vrot.slane %v3243, 7
  %v3646 = vrot.slane %v3244, 7
  %v3655 = vmul.f32 %v3560, %v3639
  %v3656 = vmul.f32 %v3562, %v3640
  %v3657 = vmul.f32 %v3564, %v3641
  %v3658 = vmul.f32 %v3566, %v3642
  %v3659 = vmul.f32 %v3568, %v3643
  %v3660 = vmul.f32 %v3570, %v3644
  %v3661 = vmul.f32 %v3572, %v3645
  %v3662 = vmul.f32 %v3574, %v3646
  %v3663 = vmul.f32 %v3512, %v3575
  %v3664 = vmul.f32 %v3514, %v3576
  %v3665 = vmul.f32 %v3516, %v3577
  %v3666 = vmul.f32 %v3518, %v3578
  %v3667 = vmul.f32 %v3520, %v3579
  %v3668 = vmul.f32 %v3522, %v3580
  %v3669 = vmul.f32 %v3524, %v3581
  %v3670 = vmul.f32 %v3526, %v3582
  %v3671 = vadd.f32 %v3655, %v3663
  %v3672 = vadd.f32 %v3656, %v3664
  %v3673 = vadd.f32 %v3657, %v3665
  %v3674 = vadd.f32 %v3658, %v3666
  %v3675 = vadd.f32 %v3659, %v3667
  %v3676 = vadd.f32 %v3660, %v3668
  %v3677 = vadd.f32 %v3661, %v3669
  %v3678 = vadd.f32 %v3662, %v3670
  %v3679 = vtanh.pop %v3671
  %v3680 = vtanh.pop %v3672
  %v3681 = vtanh.pop %v3673
  %v3682 = vtanh.pop %v3674
  %v3683 = vtanh.pop %v3675
  %v3684 = vtanh.pop %v3676
  %v3685 = vtanh.pop %v3677
  %v3686 = vtanh.pop %v3678
  %v3687 = vmul.f32 %v3616, %v3679
  %v3688 = vmul.f32 %v3618, %v3680
  %v3689 = vmul.f32 %v3620, %v3681
  %v3690 = vmul.f32 %v3622, %v3682
  %v3691 = vmul.f32 %v3624, %v3683
  %v3692 = vmul.f32 %v3626, %v3684
  %v3693 = vmul.f32 %v3628, %v3685
  %v3694 = vmul.f32 %v3630, %v3686
  %v3695 = vpack.c.bf16 %v3687, %v3687
  %v3696 = vpack.c.bf16 %v3688, %v3688
  %v3697 = vpack.c.bf16 %v3689, %v3689
  %v3698 = vpack.c.bf16 %v3690, %v3690
  %v3699 = vpack.c.bf16 %v3691, %v3691
  %v3700 = vpack.c.bf16 %v3692, %v3692
  %v3701 = vpack.c.bf16 %v3693, %v3693
  %v3702 = vpack.c.bf16 %v3694, %v3694
  %vm3703 = vcmask 1040384
  %vm3704 = vsmask.f32 256
  %vm3705 = vmand %vm3703, %vm3704
  %v3706 = vsel %vm3705, %v650, %v1091
  %v3707 = vsel %vm3705, %v651, %v1092
  %v3708 = vsel %vm3705, %v652, %v1093
  %v3709 = vsel %vm3705, %v653, %v1094
  %v3710 = vsel %vm3705, %v654, %v1095
  %v3711 = vsel %vm3705, %v655, %v1096
  %v3712 = vsel %vm3705, %v656, %v1097
  %v3713 = vsel %vm3705, %v657, %v1098
  %vm3714 = vcmask 1040384
  %v3717 = vsel %vm3714, %v3706, %v1525
  %v3721 = vsel %vm3714, %v3707, %v1526
  %v3725 = vsel %vm3714, %v3708, %v1527
  %v3729 = vsel %vm3714, %v3709, %v1528
  %v3733 = vsel %vm3714, %v3710, %v1529
  %v3737 = vsel %vm3714, %v3711, %v1530
  %v3741 = vsel %vm3714, %v3712, %v1531
  %v3745 = vsel %vm3714, %v3713, %v1532
  %vm3747 = vcmask 1041408
  %vm3748 = vsmask.f32 1280
  %vm3749 = vmand %vm3747, %vm3748
  %v3750 = vsel %vm3749, %v3717, %v1959
  %v3751 = vsel %vm3749, %v3721, %v1960
  %v3752 = vsel %vm3749, %v3725, %v1961
  %v3753 = vsel %vm3749, %v3729, %v1962
  %v3754 = vsel %vm3749, %v3733, %v1963
  %v3755 = vsel %vm3749, %v3737, %v1964
  %v3756 = vsel %vm3749, %v3741, %v1965
  %v3757 = vsel %vm3749, %v3745, %v1966
  %vm3758 = vcmask 1041408
  %v3761 = vsel %vm3758, %v3750, %v2393
  %v3765 = vsel %vm3758, %v3751, %v2394
  %v3769 = vsel %vm3758, %v3752, %v2395
  %v3773 = vsel %vm3758, %v3753, %v2396
  %v3777 = vsel %vm3758, %v3754, %v2397
  %v3781 = vsel %vm3758, %v3755, %v2398
  %v3785 = vsel %vm3758, %v3756, %v2399
  %v3789 = vsel %vm3758, %v3757, %v2400
  %vm3791 = vcmask 1042432
  %vm3792 = vsmask.f32 2304
  %vm3793 = vmand %vm3791, %vm3792
  %v3794 = vsel %vm3793, %v3761, %v2827
  %v3795 = vsel %vm3793, %v3765, %v2828
  %v3796 = vsel %vm3793, %v3769, %v2829
  %v3797 = vsel %vm3793, %v3773, %v2830
  %v3798 = vsel %vm3793, %v3777, %v2831
  %v3799 = vsel %vm3793, %v3781, %v2832
  %v3800 = vsel %vm3793, %v3785, %v2833
  %v3801 = vsel %vm3793, %v3789, %v2834
  %vm3802 = vcmask 1042432
  %v3805 = vsel %vm3802, %v3794, %v3261
  %v3809 = vsel %vm3802, %v3795, %v3262
  %v3813 = vsel %vm3802, %v3796, %v3263
  %v3817 = vsel %vm3802, %v3797, %v3264
  %v3821 = vsel %vm3802, %v3798, %v3265
  %v3825 = vsel %vm3802, %v3799, %v3266
  %v3829 = vsel %vm3802, %v3800, %v3267
  %v3833 = vsel %vm3802, %v3801, %v3268
  %vm3835 = vcmask 1043456
  %vm3836 = vsmask.f32 3328
  %vm3837 = vmand %vm3835, %vm3836
  %v3838 = vsel %vm3837, %v3805, %v3695
  %v3839 = vsel %vm3837, %v3809, %v3696
  %v3840 = vsel %vm3837, %v3813, %v3697
  %v3841 = vsel %vm3837, %v3817, %v3698
  %v3842 = vsel %vm3837, %v3821, %v3699
  %v3843 = vsel %vm3837, %v3825, %v3700
  %v3844 = vsel %vm3837, %v3829, %v3701
  %v3845 = vsel %vm3837, %v3833, %v3702
  %3846 = vst [vmem:[%s2] sm:$0xf] %v3838
  %3847 = vst [vmem:[%s2 + $0x4] sm:$0xf] %v3839
  %3848 = vst [vmem:[%s2 + $0x8] sm:$0xf] %v3840
  %3849 = vst [vmem:[%s2 + $0xc] sm:$0xf] %v3841
  %3850 = vst [vmem:[%s2 + $0x10] sm:$0xf] %v3842
  %3851 = vst [vmem:[%s2 + $0x14] sm:$0xf] %v3843
  %3852 = vst [vmem:[%s2 + $0x18] sm:$0xf] %v3844
  %3853 = vst [vmem:[%s2 + $0x1c] sm:$0xf] %v3845
  %v3862 = vrot.slane %v3688, 7
  %v3863 = vrot.slane %v3689, 6
  %v3864 = vsel %vm675, %v3863, %v3862
  %v3865 = vrot.slane %v3690, 5
  %v3866 = vsel %vm678, %v3865, %v3864
  %v3867 = vrot.slane %v3691, 4
  %v3868 = vsel %vm681, %v3867, %v3866
  %v3869 = vrot.slane %v3692, 3
  %v3870 = vsel %vm684, %v3869, %v3868
  %v3871 = vrot.slane %v3693, 2
  %v3872 = vsel %vm687, %v3871, %v3870
  %v3873 = vrot.slane %v3694, 1
  %v3874 = vsel %vm690, %v3873, %v3872
  %3877 = vst [vmem:[%s3 - $0x7] sm:$0x80] %v3687
  %3878 = vst [vmem:[%s3 + $0x1] sm:$0x7f] %v3874
  %v3887 = vrot.slane %v3672, 7
  %v3888 = vrot.slane %v3673, 6
  %v3889 = vsel %vm675, %v3888, %v3887
  %v3890 = vrot.slane %v3674, 5
  %v3891 = vsel %vm678, %v3890, %v3889
  %v3892 = vrot.slane %v3675, 4
  %v3893 = vsel %vm681, %v3892, %v3891
  %v3894 = vrot.slane %v3676, 3
  %v3895 = vsel %vm684, %v3894, %v3893
  %v3896 = vrot.slane %v3677, 2
  %v3897 = vsel %vm687, %v3896, %v3895
  %v3898 = vrot.slane %v3678, 1
  %v3899 = vsel %vm690, %v3898, %v3897
  %3902 = vst [vmem:[%s4 - $0x7] sm:$0x80] %v3671
  %3903 = vst [vmem:[%s4 + $0x1] sm:$0x7f] %v3899
  // Predicated region
  $region14: #{lstm_langmodel_forward.4} parent=0 // pred_check
    _
  $region15: #{lstm_langmodel_forward.4} parent=0 // pred_check_branch
    %3905 = sbr.rel (0) target = $region17
  $region16: #{lstm_langmodel_forward.4} parent=0 // pred_region
    _
  $region17: #{lstm_langmodel_forward.4} parent=0 // pred_fallthru
    _
  // Predicated region
  $region18: #{lstm_langmodel_forward.4} parent=0 // pred_check
    _
  $region19: #{lstm_langmodel_forward.4} parent=0 // pred_check_branch
    %3907 = sbr.rel (0) target = $region21
  $region20: #{lstm_langmodel_forward.4} parent=0 // pred_region
    _
  $region21: #{lstm_langmodel_forward.4} parent=0 // pred_fallthru
    _
  // Predicated region
  $region22: #{lstm_langmodel_forward.4} parent=0 // pred_check
    _
  $region23: #{lstm_langmodel_forward.4} parent=0 // pred_check_branch
    %3909 = sbr.rel (0) target = $region25
  $region24: #{lstm_langmodel_forward.4} parent=0 // pred_region
    _
  $region25: #{lstm_langmodel_forward.4} parent=0 // pred_fallthru
    _
  // Predicated region
  $region26: #{lstm_langmodel_forward.4} parent=0 // pred_check
    _
  $region27: #{lstm_langmodel_forward.4} parent=0 // pred_check_branch
    %3911 = sbr.rel (0) target = $region29
  $region28: #{lstm_langmodel_forward.4} parent=0 // pred_region
    _
  $region29: #{lstm_langmodel_forward.4} parent=0 // pred_fallthru
    _
  // Predicated region
  $region30: #{lstm_langmodel_forward.4} parent=0 // pred_check
    _
  $region31: #{lstm_langmodel_forward.4} parent=0 // pred_check_branch
    %3913 = sbr.rel (0) target = $region33
  $region32: #{lstm_langmodel_forward.4} parent=0 // pred_region
    _
  $region33: #{lstm_langmodel_forward.4} parent=0 // pred_fallthru
    _
  // Predicated region
  $region34: #{lstm_langmodel_forward.4} parent=0 // pred_check
    _
  $region35: #{lstm_langmodel_forward.4} parent=0 // pred_check_branch
    %3915 = sbr.rel (0) target = $region37
  $region36: #{lstm_langmodel_forward.4} parent=0 // pred_region
    _
  $region37: #{lstm_langmodel_forward.4} parent=0 // pred_fallthru
    _

</llo_original>
